<compile_context>
chip_gen: v6e
topology: v6e:2x2x1
jax: 0.10.0
libtpu: 0.0.40
codegen_flags: <defaults>
</compile_context>

<pallas_src>
import jax
import jax.numpy as jnp
from jax.experimental import pallas as pl
from jax.experimental.pallas import tpu as pltpu


# ---------------------------------------------------------------------------
# Fused backbone (conv3x3 + bias + ReLU + GAP) + head (Linear) kernel
# ---------------------------------------------------------------------------
def _fused_kernel(x_ref, s_ref, b_ref, cb_ref, a_ref, g_ref, hb_ref, o_ref):
    # x_ref : (1, Nb*Hp, Wp*C)  bf16  zero-padded image rows for this crop block
    # s_ref : (3, Nb*H, Nb*Hp)  bf16  0/1 row-shift + de-pad selection, one per ky
    # b_ref : (3, Wp*C, W*F)    bf16  banded conv weights, one per ky
    # cb_ref: (1, W*F)          f32   conv bias tiled over w
    # a_ref : (Nb, Nb*H)        f32   per-image mean-over-h (carries 1/(H*W))
    # g_ref : (W*F, K)          f32   head weight tiled over w (folds mean-over-w)
    # hb_ref: (1, K)            f32   head bias
    # o_ref : (1, Nb, K)        f32   logits
    x = x_ref[0]
    nbh = s_ref.shape[1]
    wf = b_ref.shape[2]

    # 3x3 conv as three banded matmuls (bf16 inputs, f32 accumulation).
    y = jnp.zeros((nbh, wf), jnp.float32)
    for ky in range(3):                                    # unrolled at trace time
        # row shift + de-pad via a 0/1 selection matmul (exact in bf16)
        xs = jnp.dot(s_ref[ky], x, preferred_element_type=jnp.float32)
        y = y + jnp.dot(xs.astype(jnp.bfloat16), b_ref[ky],
                        preferred_element_type=jnp.float32)

    # conv bias + ReLU in f32 on the lane-dense (Nb*H, W*F) slab.
    y = jnp.maximum(y + cb_ref[...], 0.0)

    # Global average pool: mean over h via a tiny matmul (a_ref carries the
    # 1/(H*W) scale); mean over w is folded into g_ref (head weight tiled over
    # w).  These matmuls are tiny, so they stay f32 for accuracy.
    pooled = jnp.dot(a_ref[...], y, preferred_element_type=jnp.float32)    # (Nb, W*F)
    logits = jnp.dot(pooled, g_ref[...],
                     preferred_element_type=jnp.float32) + hb_ref[...]     # (Nb, K)
    o_ref[0] = logits.astype(o_ref.dtype)


# ---------------------------------------------------------------------------
# Wrapper: one fused pallas_call per crop-resolution group
# ---------------------------------------------------------------------------
@jax.jit
def _fused_backbone_head(x_nchw, params):
    """Conv3x3(pad=1) + ReLU + GAP + Flatten + Linear, fused in one pallas_call."""
    w_conv = params["w_conv"].astype(jnp.float32)        # (F, C, 3, 3)  OIHW
    b_conv = params["b_conv"].astype(jnp.float32)        # (F,)
    w_head = params["w_head"].astype(jnp.float32)        # (F, K)
    b_head = params["b_head"].astype(jnp.float32)        # (K,)
    N, C, H, W = x_nchw.shape
    F = w_conv.shape[0]
    K = w_head.shape[1]
    Hp, Wp = H + 2, W + 2

    # Split the crop batch into 2 independent blocks when possible so the
    # "parallel" grid axis can be sharded across v7x's two TensorCores.
    n_blocks = 2 if (N % 2 == 0 and N > 1) else 1
    Nb = N // n_blocks

    # --- input: zero-padded NHWC rows, flattened to (block, Nb*Hp, Wp*C) ------
    x = jnp.transpose(x_nchw, (0, 2, 3, 1)).astype(jnp.float32)
    xp = jnp.pad(x, ((0, 0), (1, 1), (1, 1), (0, 0)))              # (N, Hp, Wp, C)
    x_in = xp.reshape(n_blocks, Nb * Hp, Wp * C).astype(jnp.bfloat16)

    # --- banded conv weights: B_ky[(w+kx)*C + c, w*F + f] = Wc[f, c, ky, kx] ---
    b_list = []
    for ky in range(3):
        k_tap = jnp.transpose(w_conv[:, :, ky, :], (2, 1, 0)).reshape(3 * C, F)
        b_mat = jnp.zeros((Wp * C, W * F), jnp.float32)
        for w in range(W):                                          # trace-time loop
            b_mat = b_mat.at[w * C:(w + 3) * C, w * F:(w + 1) * F].set(k_tap)
        b_list.append(b_mat)
    b_stack = jnp.stack(b_list).astype(jnp.bfloat16)                # (3, Wp*C, W*F)

    # --- 0/1 selection: output row (img, h) <- padded input row (img, h + ky) --
    rows = jnp.arange(Nb * H)
    img, h = rows // H, rows % H
    s_list = []
    for ky in range(3):
        s = jnp.zeros((Nb * H, Nb * Hp), jnp.float32)
        s = s.at[rows, img * Hp + h + ky].set(1.0)
        s_list.append(s)
    s_stack = jnp.stack(s_list).astype(jnp.bfloat16)                # (3, Nb*H, Nb*Hp)

    # --- pooling / bias / head constants (f32) --------------------------------
    a_mat = jnp.zeros((Nb, Nb * H), jnp.float32).at[img, rows].set(1.0 / (H * W))
    cbias = jnp.tile(b_conv, (W,))[None, :]                         # (1, W*F)
    g_head = jnp.tile(w_head, (W, 1))                               # (W*F, K)
    hbias = b_head[None, :]                                         # (1, K)

    out = pl.pallas_call(
        _fused_kernel,
        out_shape=jax.ShapeDtypeStruct((n_blocks, Nb, K), jnp.float32),
        grid=(n_blocks,),
        in_specs=[
            pl.BlockSpec((1, Nb * Hp, Wp * C), lambda i: (i, 0, 0)),
            pl.BlockSpec((3, Nb * H, Nb * Hp), lambda i: (0, 0, 0)),
            pl.BlockSpec((3, Wp * C, W * F), lambda i: (0, 0, 0)),
            pl.BlockSpec((1, W * F), lambda i: (0, 0)),
            pl.BlockSpec((Nb, Nb * H), lambda i: (0, 0)),
            pl.BlockSpec((W * F, K), lambda i: (0, 0)),
            pl.BlockSpec((1, K), lambda i: (0, 0)),
        ],
        out_specs=pl.BlockSpec((1, Nb, K), lambda i: (i, 0, 0)),
        compiler_params=pltpu.CompilerParams(
            dimension_semantics=("parallel",)),
        # TODO(synk): for large crops (e.g. 224px) tile the Nb*H row axis with a
        # VMEM accumulator + pl.when finalize so blocks stay inside v7x's 64 MiB
        # VMEM; unnecessary at these sizes (<2 MiB of VMEM in flight).
    )(x_in, s_stack, b_stack, cbias, a_mat, g_head, hbias)
    return out.reshape(N, K)


# ---------------------------------------------------------------------------
# MultiCropWrapper.forward
# ---------------------------------------------------------------------------
def multicrop_forward(x, params, *, return_features=False):
    """JAX/Pallas port of MultiCropWrapper.forward.

    `x` is a single NCHW array or a list/tuple of NCHW arrays, one per crop
    resolution.  `return_features` is accepted for interface parity; as in the
    PyTorch source it does not change the returned value (logits).
    """
    del return_features
    if isinstance(x, (list, tuple)):
        # One fused backbone+head pass per resolution group.  The head is
        # row-wise, so regrouping logits == regrouping features then head.
        # TODO(synk): a single compiled call covering both resolutions (padded
        # P + per-crop row counts via scalar prefetch) would save one launch.
        logits = jnp.concatenate(
            [_fused_backbone_head(x_i, params) for x_i in x], axis=0)
        n_global = x[0].shape[0]
        n_local = logits.shape[0] - n_global
        if n_local % n_global != 0:
            raise ValueError("total number of local crops must be a multiple "
                             "of the number of global crops (len(x[0]))")
        logits_global = logits[:n_global][:, None, :]
        logits_local = logits[n_global:].reshape(n_global, -1, logits.shape[-1])
        return jnp.concatenate([logits_global, logits_local], axis=1)
    return _fused_backbone_head(x, params)


# ---------------------------------------------------------------------------
# Pure-JAX reference (f32, HIGHEST precision) for validation
# ---------------------------------------------------------------------------
def _reference_multicrop(x, params):
    hp = jax.lax.Precision.HIGHEST
    w_conv = params["w_conv"].astype(jnp.float32)
    b_conv = params["b_conv"].astype(jnp.float32)
    w_head = params["w_head"].astype(jnp.float32)
    b_head = params["b_head"].astype(jnp.float32)

    def backbone(xi):
        y = jax.lax.conv_general_dilated(
            xi.astype(jnp.float32), w_conv, window_strides=(1, 1),
            padding=((1, 1), (1, 1)),
            dimension_numbers=("NCHW", "OIHW", "NCHW"), precision=hp)
        y = jnp.maximum(y + b_conv[None, :, None, None], 0.0)
        return jnp.mean(y, axis=(2, 3))                     # GAP + Flatten

    if isinstance(x, (list, tuple)):
        feats = jnp.concatenate([backbone(xi) for xi in x], axis=0)
        n_g = x[0].shape[0]
        fg = feats[:n_g][:, None, :]
        fl = feats[n_g:].reshape(n_g, -1, feats.shape[-1])
        f = jnp.concatenate([fg, fl], axis=1)
        logits = jnp.dot(f.reshape(-1, f.shape[-1]), w_head, precision=hp) + b_head
        return logits.reshape(f.shape[0], f.shape[1], -1)
    feats = backbone(x)
    return jnp.dot(feats, w_head, precision=hp) + b_head


if __name__ == "__main__":
    key = jax.random.PRNGKey(0)
    C, F, K = 4, 128, 128            # F, K chosen lane-dense (128) per perf review
    kx1, kx2, kw, kwh = jax.random.split(key, 4)

    # Multi-resolution input (NCHW): 4 global crops @16x16, 8 local crops @8x8.
    x_global = jax.random.normal(kx1, (4, C, 16, 16), dtype=jnp.float32)
    x_local = jax.random.normal(kx2, (8, C, 8, 8), dtype=jnp.float32)

    params = {
        "w_conv": 0.1 * jax.random.normal(kw, (F, C, 3, 3), dtype=jnp.float32),
        "b_conv": 0.01 * jnp.arange(F, dtype=jnp.float32),
        "w_head": 0.1 * jax.random.normal(kwh, (F, K), dtype=jnp.float32),
        "b_head": 0.01 * jnp.arange(K, dtype=jnp.float32),
    }

    # Multicrop path: (n_global, 1 + n_local_per_global, K) = (4, 3, K)
    logits_mc = multicrop_forward([x_global, x_local], params)
    # Single-tensor path: (N, K)
    logits_single = multicrop_forward(x_global, params)
    jax.block_until_ready((logits_mc, logits_single))

    assert logits_mc.shape == (4, 3, K), logits_mc.shape
    assert logits_single.shape == (4, K), logits_single.shape

    # Validate against the pure-JAX reference (loose tol: bf16 MXU inputs).
    ref_mc = _reference_multicrop([x_global, x_local], params)
    ref_single = _reference_multicrop(x_global, params)
    assert bool(jnp.allclose(logits_mc, ref_mc, rtol=5e-2, atol=5e-2)), (
        float(jnp.max(jnp.abs(logits_mc - ref_mc))))
    assert bool(jnp.allclose(logits_single, ref_single, rtol=5e-2, atol=5e-2)), (
        float(jnp.max(jnp.abs(logits_single - ref_single))))
    print("KERNEL_OK")
</pallas_src>

<mosaic_0001>
module attributes {stable_mosaic.version = 11 : i64} {
  func.func @_fused_kernel(%arg0: i32, %arg1: memref<1x36x72xbf16, #tpu.memory_space<vmem>>, %arg2: memref<3x32x36xbf16, #tpu.memory_space<vmem>>, %arg3: memref<3x72x2048xbf16, #tpu.memory_space<vmem>>, %arg4: memref<1x2048xf32, #tpu.memory_space<vmem>>, %arg5: memref<2x32xf32, #tpu.memory_space<vmem>>, %arg6: memref<2048x128xf32, #tpu.memory_space<vmem>>, %arg7: memref<1x128xf32, #tpu.memory_space<vmem>>, %arg8: memref<1x2x128xf32, #tpu.memory_space<vmem>>) attributes {dimension_semantics = [#tpu.dimension_semantics<parallel>], iteration_bounds = array<i64: 2>, scalar_prefetch = 0 : i64, scratch_operands = 0 : i64, tpu.core_type = #tpu.core_type<tc>, window_params = [{transform_indices = @transform_0, window_bounds = array<i64: 1, 36, 72>}, {pipeline_mode = #tpu.pipeline_mode<synchronous>, transform_indices = @transform_1, window_bounds = array<i64: 3, 32, 36>}, {pipeline_mode = #tpu.pipeline_mode<synchronous>, transform_indices = @transform_2, window_bounds = array<i64: 3, 72, 2048>}, {pipeline_mode = #tpu.pipeline_mode<synchronous>, transform_indices = @transform_3, window_bounds = array<i64: 1, 2048>}, {pipeline_mode = #tpu.pipeline_mode<synchronous>, transform_indices = @transform_4, window_bounds = array<i64: 2, 32>}, {pipeline_mode = #tpu.pipeline_mode<synchronous>, transform_indices = @transform_5, window_bounds = array<i64: 2048, 128>}, {pipeline_mode = #tpu.pipeline_mode<synchronous>, transform_indices = @transform_6, window_bounds = array<i64: 1, 128>}, {transform_indices = @transform_7, window_bounds = array<i64: 1, 2, 128>}]} {
    %c0 = arith.constant 0 : index
    %c0_0 = arith.constant 0 : index
    %c0_1 = arith.constant 0 : index
    %0 = vector.load %arg1[%c0, %c0_0, %c0_1] : memref<1x36x72xbf16, #tpu.memory_space<vmem>>, vector<1x36x72xbf16>
    %1 = vector.shape_cast %0 : vector<1x36x72xbf16> to vector<36x72xbf16>
    %cst = arith.constant 0.000000e+00 : f32
    %2 = vector.broadcast %cst : f32 to vector<32x2048xf32>
    %c0_2 = arith.constant 0 : index
    %c0_3 = arith.constant 0 : index
    %c0_4 = arith.constant 0 : index
    %3 = vector.load %arg2[%c0_2, %c0_3, %c0_4] : memref<3x32x36xbf16, #tpu.memory_space<vmem>>, vector<1x32x36xbf16>
    %4 = vector.shape_cast %3 : vector<1x32x36xbf16> to vector<32x36xbf16>
    %cst_5 = arith.constant dense<0.000000e+00> : vector<32x72xf32>
    %5 = tpu.matmul %4, %1, %cst_5 {dimension_numbers = #tpu.dot_dimension_numbers<[1], [0], [0], [1], [0, 0, 1, 1], [], []>} : vector<32x36xbf16>, vector<36x72xbf16>, vector<32x72xf32> -> vector<32x72xf32>
    %6 = arith.truncf %5 : vector<32x72xf32> to vector<32x72xbf16>
    %c0_6 = arith.constant 0 : index
    %c0_7 = arith.constant 0 : index
    %c0_8 = arith.constant 0 : index
    %7 = vector.load %arg3[%c0_6, %c0_7, %c0_8] : memref<3x72x2048xbf16, #tpu.memory_space<vmem>>, vector<1x72x2048xbf16>
    %8 = vector.shape_cast %7 : vector<1x72x2048xbf16> to vector<72x2048xbf16>
    %cst_9 = arith.constant dense<0.000000e+00> : vector<32x2048xf32>
    %9 = tpu.matmul %6, %8, %cst_9 {dimension_numbers = #tpu.dot_dimension_numbers<[1], [0], [0], [1], [0, 0, 1, 1], [], []>} : vector<32x72xbf16>, vector<72x2048xbf16>, vector<32x2048xf32> -> vector<32x2048xf32>
    %10 = arith.addf %2, %9 : vector<32x2048xf32>
    %c1 = arith.constant 1 : index
    %c0_10 = arith.constant 0 : index
    %c0_11 = arith.constant 0 : index
    %11 = vector.load %arg2[%c1, %c0_10, %c0_11] : memref<3x32x36xbf16, #tpu.memory_space<vmem>>, vector<1x32x36xbf16>
    %12 = vector.shape_cast %11 : vector<1x32x36xbf16> to vector<32x36xbf16>
    %cst_12 = arith.constant dense<0.000000e+00> : vector<32x72xf32>
    %13 = tpu.matmul %12, %1, %cst_12 {dimension_numbers = #tpu.dot_dimension_numbers<[1], [0], [0], [1], [0, 0, 1, 1], [], []>} : vector<32x36xbf16>, vector<36x72xbf16>, vector<32x72xf32> -> vector<32x72xf32>
    %14 = arith.truncf %13 : vector<32x72xf32> to vector<32x72xbf16>
    %c1_13 = arith.constant 1 : index
    %c0_14 = arith.constant 0 : index
    %c0_15 = arith.constant 0 : index
    %15 = vector.load %arg3[%c1_13, %c0_14, %c0_15] : memref<3x72x2048xbf16, #tpu.memory_space<vmem>>, vector<1x72x2048xbf16>
    %16 = vector.shape_cast %15 : vector<1x72x2048xbf16> to vector<72x2048xbf16>
    %cst_16 = arith.constant dense<0.000000e+00> : vector<32x2048xf32>
    %17 = tpu.matmul %14, %16, %cst_16 {dimension_numbers = #tpu.dot_dimension_numbers<[1], [0], [0], [1], [0, 0, 1, 1], [], []>} : vector<32x72xbf16>, vector<72x2048xbf16>, vector<32x2048xf32> -> vector<32x2048xf32>
    %18 = arith.addf %10, %17 : vector<32x2048xf32>
    %c2 = arith.constant 2 : index
    %c0_17 = arith.constant 0 : index
    %c0_18 = arith.constant 0 : index
    %19 = vector.load %arg2[%c2, %c0_17, %c0_18] : memref<3x32x36xbf16, #tpu.memory_space<vmem>>, vector<1x32x36xbf16>
    %20 = vector.shape_cast %19 : vector<1x32x36xbf16> to vector<32x36xbf16>
    %cst_19 = arith.constant dense<0.000000e+00> : vector<32x72xf32>
    %21 = tpu.matmul %20, %1, %cst_19 {dimension_numbers = #tpu.dot_dimension_numbers<[1], [0], [0], [1], [0, 0, 1, 1], [], []>} : vector<32x36xbf16>, vector<36x72xbf16>, vector<32x72xf32> -> vector<32x72xf32>
    %22 = arith.truncf %21 : vector<32x72xf32> to vector<32x72xbf16>
    %c2_20 = arith.constant 2 : index
    %c0_21 = arith.constant 0 : index
    %c0_22 = arith.constant 0 : index
    %23 = vector.load %arg3[%c2_20, %c0_21, %c0_22] : memref<3x72x2048xbf16, #tpu.memory_space<vmem>>, vector<1x72x2048xbf16>
    %24 = vector.shape_cast %23 : vector<1x72x2048xbf16> to vector<72x2048xbf16>
    %cst_23 = arith.constant dense<0.000000e+00> : vector<32x2048xf32>
    %25 = tpu.matmul %22, %24, %cst_23 {dimension_numbers = #tpu.dot_dimension_numbers<[1], [0], [0], [1], [0, 0, 1, 1], [], []>} : vector<32x72xbf16>, vector<72x2048xbf16>, vector<32x2048xf32> -> vector<32x2048xf32>
    %26 = arith.addf %18, %25 : vector<32x2048xf32>
    %c0_24 = arith.constant 0 : index
    %c0_25 = arith.constant 0 : index
    %27 = vector.load %arg4[%c0_24, %c0_25] : memref<1x2048xf32, #tpu.memory_space<vmem>>, vector<1x2048xf32>
    %28 = vector.broadcast %27 : vector<1x2048xf32> to vector<32x2048xf32>
    %29 = arith.addf %26, %28 : vector<32x2048xf32>
    %cst_26 = arith.constant 0.000000e+00 : f32
    %30 = vector.broadcast %cst_26 : f32 to vector<32x2048xf32>
    %31 = arith.maximumf %29, %30 : vector<32x2048xf32>
    %c0_27 = arith.constant 0 : index
    %c0_28 = arith.constant 0 : index
    %32 = vector.load %arg5[%c0_27, %c0_28] : memref<2x32xf32, #tpu.memory_space<vmem>>, vector<2x32xf32>
    %cst_29 = arith.constant dense<0.000000e+00> : vector<2x2048xf32>
    %33 = tpu.matmul %32, %31, %cst_29 {dimension_numbers = #tpu.dot_dimension_numbers<[1], [0], [0], [1], [0, 0, 1, 1], [], []>} : vector<2x32xf32>, vector<32x2048xf32>, vector<2x2048xf32> -> vector<2x2048xf32>
    %c0_30 = arith.constant 0 : index
    %c0_31 = arith.constant 0 : index
    %34 = vector.load %arg6[%c0_30, %c0_31] : memref<2048x128xf32, #tpu.memory_space<vmem>>, vector<2048x128xf32>
    %cst_32 = arith.constant dense<0.000000e+00> : vector<2x128xf32>
    %35 = tpu.matmul %33, %34, %cst_32 {dimension_numbers = #tpu.dot_dimension_numbers<[1], [0], [0], [1], [0, 0, 1, 1], [], []>} : vector<2x2048xf32>, vector<2048x128xf32>, vector<2x128xf32> -> vector<2x128xf32>
    %c0_33 = arith.constant 0 : index
    %c0_34 = arith.constant 0 : index
    %36 = vector.load %arg7[%c0_33, %c0_34] : memref<1x128xf32, #tpu.memory_space<vmem>>, vector<1x128xf32>
    %37 = vector.broadcast %36 : vector<1x128xf32> to vector<2x128xf32>
    %38 = arith.addf %35, %37 : vector<2x128xf32>
    %c0_35 = arith.constant 0 : index
    %c0_36 = arith.constant 0 : index
    %c0_37 = arith.constant 0 : index
    %39 = vector.load %arg8[%c0_35, %c0_36, %c0_37] : memref<1x2x128xf32, #tpu.memory_space<vmem>>, vector<1x2x128xf32>
    %40 = vector.shape_cast %39 : vector<1x2x128xf32> to vector<2x128xf32>
    %41 = vector.shape_cast %38 : vector<2x128xf32> to vector<1x2x128xf32>
    tpu.vector_store %arg8[%c0_35, %c0_36, %c0_37], %41 {strides = array<i32>} : memref<1x2x128xf32, #tpu.memory_space<vmem>>, vector<1x2x128xf32>,
    return
  }
  func.func @transform_0(%arg0: i32) -> (i32, i32, i32) {
    %c0_i32 = arith.constant 0 : i32
    %c0_i32_0 = arith.constant 0 : i32
    %c0_i32_1 = arith.constant 0 : i32
    return %arg0, %c0_i32, %c0_i32_0 : i32, i32, i32
  }
  func.func @transform_1(%arg0: i32) -> (i32, i32, i32) {
    %c0_i32 = arith.constant 0 : i32
    %c0_i32_0 = arith.constant 0 : i32
    %c0_i32_1 = arith.constant 0 : i32
    %c0_i32_2 = arith.constant 0 : i32
    return %c0_i32, %c0_i32_0, %c0_i32_1 : i32, i32, i32
  }
  func.func @transform_2(%arg0: i32) -> (i32, i32, i32) {
    %c0_i32 = arith.constant 0 : i32
    %c0_i32_0 = arith.constant 0 : i32
    %c0_i32_1 = arith.constant 0 : i32
    %c0_i32_2 = arith.constant 0 : i32
    return %c0_i32, %c0_i32_0, %c0_i32_1 : i32, i32, i32
  }
  func.func @transform_3(%arg0: i32) -> (i32, i32) {
    %c0_i32 = arith.constant 0 : i32
    %c0_i32_0 = arith.constant 0 : i32
    %c0_i32_1 = arith.constant 0 : i32
    return %c0_i32, %c0_i32_0 : i32, i32
  }
  func.func @transform_4(%arg0: i32) -> (i32, i32) {
    %c0_i32 = arith.constant 0 : i32
    %c0_i32_0 = arith.constant 0 : i32
    %c0_i32_1 = arith.constant 0 : i32
    return %c0_i32, %c0_i32_0 : i32, i32
  }
  func.func @transform_5(%arg0: i32) -> (i32, i32) {
    %c0_i32 = arith.constant 0 : i32
    %c0_i32_0 = arith.constant 0 : i32
    %c0_i32_1 = arith.constant 0 : i32
    return %c0_i32, %c0_i32_0 : i32, i32
  }
  func.func @transform_6(%arg0: i32) -> (i32, i32) {
    %c0_i32 = arith.constant 0 : i32
    %c0_i32_0 = arith.constant 0 : i32
    %c0_i32_1 = arith.constant 0 : i32
    return %c0_i32, %c0_i32_0 : i32, i32
  }
  func.func @transform_7(%arg0: i32) -> (i32, i32, i32) {
    %c0_i32 = arith.constant 0 : i32
    %c0_i32_0 = arith.constant 0 : i32
    %c0_i32_1 = arith.constant 0 : i32
    return %arg0, %c0_i32, %c0_i32_0 : i32, i32, i32
  }
}

</mosaic_0001>

<llo_original>
// kernel: tile.13
$region0: #{tile.13}
  #allocation0 [shape = 's32[1]{0}', space=sflag, size = 0x4, scoped, tag = 'scoped memory for tile.13']
  %s0 = inlined_call_operand.vmem [shape: f32[128], index: 0, kind: input, shape index: {}]
  %s1 = inlined_call_operand.vmem [shape: f32[16,128], index: 1, kind: output, shape index: {}]
  // Predicated region
  $region2: #{tile.13} parent=0 // pred_check
    _
  $region3: #{tile.13} parent=0 // pred_check_branch
    %3 = sbr.rel (0) target = $region5
  $region4: #{tile.13} parent=0 // pred_region
    _
  $region5: #{tile.13} parent=0 // pred_fallthru
    _
  %v4 = vld [vmem:[%s0] ss:$0 sm:$0xff]
  %5 = vst [vmem:[%s1] sm:$0xff] %v4
  %s6 = scalar_lea.vmem %s1, 8
  %7 = vst [vmem:[%s6] sm:$0xff] %v4

// kernel: _fused_backbone_head.1
$region0: #{_fused_backbone_head.1}
  #allocation0 [shape = 'u32[]', space=smem, size = 0x4, offset = 0x4, fixed_abs, tag = 'smem constant byte address 0x4 - core index']
  #allocation1 [shape = 'u32[144,128]{1,0:T(1,128)}', space=vmem, size = 0x12000, scoped, tag = 'internal scratch']
  %s0 = inlined_call_operand.vmem [shape: bf16[2,36,72], index: 0, kind: input, shape index: {}]
  %s1 = inlined_call_operand.vmem [shape: bf16[3,32,36], index: 1, kind: input, shape index: {}]
  %s2 = inlined_call_operand.vmem [shape: bf16[3,72,2048], index: 2, kind: input, shape index: {}]
  %s3 = inlined_call_operand.vmem [shape: f32[1,2048], index: 3, kind: input, shape index: {}]
  %s4 = inlined_call_operand.vmem [shape: f32[2,32], index: 4, kind: input, shape index: {}]
  %s5 = inlined_call_operand.vmem [shape: f32[2048,128], index: 5, kind: input, shape index: {}]
  %s6 = inlined_call_operand.vmem [shape: f32[1,128], index: 6, kind: input, shape index: {}]
  %s7 = inlined_call_operand.hbm [shape: f32[2,2,128], index: 7, kind: output, shape index: {}]
  %s8 = sld [smem:[#allocation0]]
  $region61: #{_fused_backbone_head.1} parent=0
    _
  %s10 = ssub.s32 1, %s8
  %s11 = scalar_select 0, %s10, %s8
  $region1: #{_fused_backbone_head.1} parent=0
    #allocation2 [shape = 'u8[2048]{0}', space=vmem, size = 0x800, scoped, tag = 'output window, operand 0']
    #allocation3 [shape = 's32[2]{0}', space=sflag, size = 0x8, scoped, tag = 'scoped memory for _fused_backbone_head.1']
    %12 = vsyncpa [#allocation3], 0
    %s13 = scalar_lea.sflag [#allocation3], 1
    %14 = vsyncpa %s13, 0
    loop: start=0, step=1, limit=4
    $region2: #{_fused_backbone_head.1} parent=1 // loop_pre_header
      _
    $region3: #{_fused_backbone_head.1} parent=1 // loop_header
      %s16 = sphi 0, %s20
      %p17 = scmp.ge.s32.totalorder %s16, 4
      %s26 = sphi 0, %s28
      %s29 = sphi 0, %s26
      %s30 = sphi 0, %s29
      %s46 = sphi 0, %s30
      %s50 = sphi 0, %s50
      %s52 = sphi 0, %s50
      %s53 = sphi 0, %s52
      %s67 = sphi 0, %s53
      %s71 = sphi 0, %s71
      %s73 = sphi 0, %s71
      %s74 = sphi 0, %s73
      %s88 = sphi 0, %s74
      %s92 = sphi 0, %s92
      %s94 = sphi 0, %s92
      %s95 = sphi 0, %s94
      %s109 = sphi 0, %s95
      %s113 = sphi 0, %s113
      %s115 = sphi 0, %s113
      %s116 = sphi 0, %s115
      %s130 = sphi 0, %s116
      %s134 = sphi 0, %s134
      %s136 = sphi 0, %s134
      %s137 = sphi 0, %s136
      %s151 = sphi 0, %s137
      %s155 = sphi 0, %s155
      %s157 = sphi 0, %s155
      %s158 = sphi 0, %s157
      %s172 = sphi 0, %s158
      %s178 = sphi 0, %s180
      %s181 = sphi 0, %s178
      %s182 = sphi 0, %s181
      %s198 = sphi 0, %s182
    $region4: #{_fused_backbone_head.1} parent=1 // loop_header_branch
      %19 = sbr.rel (%p17) target = $region8
    $region5: #{_fused_backbone_head.1} parent=1 // loop_body
      %s21 = ssub.s32 %s16, 1
      %s22 = ssub.s32 %s16, 2
      %s23 = sadd.s32 %s16, 1
      %s24 = ssub.s32 %s16, %s23
      %p25 = scmp.eq.s32.totalorder %s24, 0
      %s27 = sadd.s32 %s26, 1
      %s28 = scalar_select %p25, %s26, %s27
      %p31 = pneg %p25
      %p32 = scmp.eq.s32.totalorder %s16, 1
      %p33 = por %p31, %p32
      %p34 = scmp.ne.s32.totalorder %s26, %s29
      %p35 = scmp.eq.s32.totalorder %s16, 0
      %p36 = por %p34, %p35
      %p37 = scmp.ne.s32.totalorder %s26, %s29
      %p38 = scmp.eq.s32.totalorder %s21, 1
      %p39 = por %p37, %p38
      %p40 = scmp.ne.s32.totalorder %s29, %s30
      %p41 = scmp.eq.s32.totalorder %s21, 0
      %p42 = por %p40, %p41
      %p43 = scmp.ne.s32.totalorder %s29, %s30
      %p44 = scmp.eq.s32.totalorder %s22, 1
      %p45 = por %p43, %p44
      %p47 = scmp.ne.s32.totalorder %s30, %s46
      %p48 = scmp.eq.s32.totalorder %s22, 0
      %p49 = por %p47, %p48
      %s51 = sadd.s32 %s50, 1
      %p54 = scmp.eq.s32.totalorder %s16, 1
      %p55 = scmp.ne.s32.totalorder %s50, %s52
      %p56 = scmp.eq.s32.totalorder %s16, 0
      %p57 = por %p55, %p56
      %p58 = scmp.ne.s32.totalorder %s50, %s52
      %p59 = scmp.eq.s32.totalorder %s21, 1
      %p60 = por %p58, %p59
      %p61 = scmp.ne.s32.totalorder %s52, %s53
      %p62 = scmp.eq.s32.totalorder %s21, 0
      %p63 = por %p61, %p62
      %p64 = scmp.ne.s32.totalorder %s52, %s53
      %p65 = scmp.eq.s32.totalorder %s22, 1
      %p66 = por %p64, %p65
      %p68 = scmp.ne.s32.totalorder %s53, %s67
      %p69 = scmp.eq.s32.totalorder %s22, 0
      %p70 = por %p68, %p69
      %s72 = sadd.s32 %s71, 1
      %p75 = scmp.eq.s32.totalorder %s16, 1
      %p76 = scmp.ne.s32.totalorder %s71, %s73
      %p77 = scmp.eq.s32.totalorder %s16, 0
      %p78 = por %p76, %p77
      %p79 = scmp.ne.s32.totalorder %s71, %s73
      %p80 = scmp.eq.s32.totalorder %s21, 1
      %p81 = por %p79, %p80
      %p82 = scmp.ne.s32.totalorder %s73, %s74
      %p83 = scmp.eq.s32.totalorder %s21, 0
      %p84 = por %p82, %p83
      %p85 = scmp.ne.s32.totalorder %s73, %s74
      %p86 = scmp.eq.s32.totalorder %s22, 1
      %p87 = por %p85, %p86
      %p89 = scmp.ne.s32.totalorder %s74, %s88
      %p90 = scmp.eq.s32.totalorder %s22, 0
      %p91 = por %p89, %p90
      %s93 = sadd.s32 %s92, 1
      %p96 = scmp.eq.s32.totalorder %s16, 1
      %p97 = scmp.ne.s32.totalorder %s92, %s94
      %p98 = scmp.eq.s32.totalorder %s16, 0
      %p99 = por %p97, %p98
      %p100 = scmp.ne.s32.totalorder %s92, %s94
      %p101 = scmp.eq.s32.totalorder %s21, 1
      %p102 = por %p100, %p101
      %p103 = scmp.ne.s32.totalorder %s94, %s95
      %p104 = scmp.eq.s32.totalorder %s21, 0
      %p105 = por %p103, %p104
      %p106 = scmp.ne.s32.totalorder %s94, %s95
      %p107 = scmp.eq.s32.totalorder %s22, 1
      %p108 = por %p106, %p107
      %p110 = scmp.ne.s32.totalorder %s95, %s109
      %p111 = scmp.eq.s32.totalorder %s22, 0
      %p112 = por %p110, %p111
      %s114 = sadd.s32 %s113, 1
      %p117 = scmp.eq.s32.totalorder %s16, 1
      %p118 = scmp.ne.s32.totalorder %s113, %s115
      %p119 = scmp.eq.s32.totalorder %s16, 0
      %p120 = por %p118, %p119
      %p121 = scmp.ne.s32.totalorder %s113, %s115
      %p122 = scmp.eq.s32.totalorder %s21, 1
      %p123 = por %p121, %p122
      %p124 = scmp.ne.s32.totalorder %s115, %s116
      %p125 = scmp.eq.s32.totalorder %s21, 0
      %p126 = por %p124, %p125
      %p127 = scmp.ne.s32.totalorder %s115, %s116
      %p128 = scmp.eq.s32.totalorder %s22, 1
      %p129 = por %p127, %p128
      %p131 = scmp.ne.s32.totalorder %s116, %s130
      %p132 = scmp.eq.s32.totalorder %s22, 0
      %p133 = por %p131, %p132
      %s135 = sadd.s32 %s134, 1
      %p138 = scmp.eq.s32.totalorder %s16, 1
      %p139 = scmp.ne.s32.totalorder %s134, %s136
      %p140 = scmp.eq.s32.totalorder %s16, 0
      %p141 = por %p139, %p140
      %p142 = scmp.ne.s32.totalorder %s134, %s136
      %p143 = scmp.eq.s32.totalorder %s21, 1
      %p144 = por %p142, %p143
      %p145 = scmp.ne.s32.totalorder %s136, %s137
      %p146 = scmp.eq.s32.totalorder %s21, 0
      %p147 = por %p145, %p146
      %p148 = scmp.ne.s32.totalorder %s136, %s137
      %p149 = scmp.eq.s32.totalorder %s22, 1
      %p150 = por %p148, %p149
      %p152 = scmp.ne.s32.totalorder %s137, %s151
      %p153 = scmp.eq.s32.totalorder %s22, 0
      %p154 = por %p152, %p153
      %s156 = sadd.s32 %s155, 1
      %p159 = scmp.eq.s32.totalorder %s16, 1
      %p160 = scmp.ne.s32.totalorder %s155, %s157
      %p161 = scmp.eq.s32.totalorder %s16, 0
      %p162 = por %p160, %p161
      %p163 = scmp.ne.s32.totalorder %s155, %s157
      %p164 = scmp.eq.s32.totalorder %s21, 1
      %p165 = por %p163, %p164
      %p166 = scmp.ne.s32.totalorder %s157, %s158
      %p167 = scmp.eq.s32.totalorder %s21, 0
      %p168 = por %p166, %p167
      %p169 = scmp.ne.s32.totalorder %s157, %s158
      %p170 = scmp.eq.s32.totalorder %s22, 1
      %p171 = por %p169, %p170
      %p173 = scmp.ne.s32.totalorder %s158, %s172
      %p174 = scmp.eq.s32.totalorder %s22, 0
      %p175 = por %p173, %p174
      %s176 = ssub.s32 %s16, %s23
      %p177 = scmp.eq.s32.totalorder %s176, 0
      %s179 = sadd.s32 %s178, 1
      %s180 = scalar_select %p177, %s178, %s179
      %p183 = pneg %p177
      %p184 = scmp.eq.s32.totalorder %s16, 1
      %p185 = por %p183, %p184
      %p186 = scmp.ne.s32.totalorder %s178, %s181
      %p187 = scmp.eq.s32.totalorder %s16, 0
      %p188 = por %p186, %p187
      %p189 = scmp.ne.s32.totalorder %s178, %s181
      %p190 = scmp.eq.s32.totalorder %s21, 1
      %p191 = por %p189, %p190
      %p192 = scmp.ne.s32.totalorder %s181, %s182
      %p193 = scmp.eq.s32.totalorder %s21, 0
      %p194 = por %p192, %p193
      %p195 = scmp.ne.s32.totalorder %s181, %s182
      %p196 = scmp.eq.s32.totalorder %s22, 1
      %p197 = por %p195, %p196
      %p199 = scmp.ne.s32.totalorder %s182, %s198
      %p200 = scmp.eq.s32.totalorder %s22, 0
      %p201 = por %p199, %p200
      %p202 = scmp.le.s32.totalorder 1, %s16
      %p203 = scmp.lt.s32.totalorder %s16, 3
      %p204 = pnand %p202, %p203
      %p205 = pneg %p204
      // Predicated region
      $region9: #{_fused_backbone_head.1} parent=5 // pred_check
        _
      $region10: #{_fused_backbone_head.1} parent=5 // pred_check_branch
        %207 = sbr.rel (%p204) target = $region12
      $region11: #{_fused_backbone_head.1} parent=5 // pred_region
        %s208 = ssub.s32 %s16, 1
        // Predicated region
        $region13: #{_fused_backbone_head.1} parent=11 // pred_check
          %p209 = pneg %p63
        $region14: #{_fused_backbone_head.1} parent=11 // pred_check_branch
          %211 = sbr.rel (%p209) target = $region16
        $region15: #{_fused_backbone_head.1} parent=11 // pred_region
          _
        $region16: #{_fused_backbone_head.1} parent=11 // pred_fallthru
          _
        // Predicated region
        $region17: #{_fused_backbone_head.1} parent=11 // pred_check
          %p212 = pneg %p84
        $region18: #{_fused_backbone_head.1} parent=11 // pred_check_branch
          %214 = sbr.rel (%p212) target = $region20
        $region19: #{_fused_backbone_head.1} parent=11 // pred_region
          _
        $region20: #{_fused_backbone_head.1} parent=11 // pred_fallthru
          _
        // Predicated region
        $region21: #{_fused_backbone_head.1} parent=11 // pred_check
          %p215 = pneg %p105
        $region22: #{_fused_backbone_head.1} parent=11 // pred_check_branch
          %217 = sbr.rel (%p215) target = $region24
        $region23: #{_fused_backbone_head.1} parent=11 // pred_region
          _
        $region24: #{_fused_backbone_head.1} parent=11 // pred_fallthru
          _
        // Predicated region
        $region25: #{_fused_backbone_head.1} parent=11 // pred_check
          %p218 = pneg %p126
        $region26: #{_fused_backbone_head.1} parent=11 // pred_check_branch
          %220 = sbr.rel (%p218) target = $region28
        $region27: #{_fused_backbone_head.1} parent=11 // pred_region
          _
        $region28: #{_fused_backbone_head.1} parent=11 // pred_fallthru
          _
        // Predicated region
        $region29: #{_fused_backbone_head.1} parent=11 // pred_check
          %p221 = pneg %p147
        $region30: #{_fused_backbone_head.1} parent=11 // pred_check_branch
          %223 = sbr.rel (%p221) target = $region32
        $region31: #{_fused_backbone_head.1} parent=11 // pred_region
          _
        $region32: #{_fused_backbone_head.1} parent=11 // pred_fallthru
          _
        // Predicated region
        $region33: #{_fused_backbone_head.1} parent=11 // pred_check
          %p224 = pneg %p168
        $region34: #{_fused_backbone_head.1} parent=11 // pred_check_branch
          %226 = sbr.rel (%p224) target = $region36
        $region35: #{_fused_backbone_head.1} parent=11 // pred_region
          _
        $region36: #{_fused_backbone_head.1} parent=11 // pred_fallthru
          _
      $region12: #{_fused_backbone_head.1} parent=5 // pred_fallthru
        _
      %p227 = scmp.lt.s32.totalorder %s16, 2
      // Predicated region
      $region37: #{_fused_backbone_head.1} parent=5 // pred_check
        %p228 = pneg %p227
      $region38: #{_fused_backbone_head.1} parent=5 // pred_check_branch
        %230 = sbr.rel (%p228) target = $region40
      $region39: #{_fused_backbone_head.1} parent=5 // pred_region
        // Predicated region
        $region41: #{_fused_backbone_head.1} parent=39 // pred_check
          %p231 = pneg %p36
        $region42: #{_fused_backbone_head.1} parent=39 // pred_check_branch
          %233 = sbr.rel (%p231) target = $region44
        $region43: #{_fused_backbone_head.1} parent=39 // pred_region
          %p234 = scmp.lt.s32.totalorder %s16, 1
          %s235 = scalar_select %p234, %s16, 1
          %s236 = smul.addr %s235, 5
          %s237 = smul.addr %s236, 4
          %s238 = scalar_lea.vmem %s0, %s237
        $region44: #{_fused_backbone_head.1} parent=39 // pred_fallthru
          _
      $region40: #{_fused_backbone_head.1} parent=5 // pred_fallthru
        _
      %p239 = scmp.le.s32.totalorder 1, %s16
      %p240 = scmp.lt.s32.totalorder %s16, 3
      %p241 = pnand %p239, %p240
      %p242 = pneg %p241
      // Predicated region
      $region45: #{_fused_backbone_head.1} parent=5 // pred_check
        _
      $region46: #{_fused_backbone_head.1} parent=5 // pred_check_branch
        %244 = sbr.rel (%p241) target = $region48
      $region47: #{_fused_backbone_head.1} parent=5 // pred_region
        %s245 = ssub.s32 %s16, 1
        %p246 = scmp.lt.s32.totalorder %s21, 1
        %s247 = scalar_select %p246, %s21, 1
        %s248 = smul.addr %s247, 5
        %s249 = smul.addr %s248, 4
        %s250 = scalar_lea.vmem %s0, %s249
        %p251 = pneg %p42
        %p252 = pneg %p39
        %p253 = pneg %p63
        %p254 = pneg %p60
        %p255 = pneg %p84
        %p256 = pneg %p81
        %p257 = pneg %p105
        %p258 = pneg %p102
        %p259 = pneg %p126
        %p260 = pneg %p123
        %p261 = pneg %p147
        %p262 = pneg %p144
        %p263 = pneg %p168
        %p264 = pneg %p165
        %p265 = pneg %p194
        %p266 = pneg %p191
        %s267 = sand.u32 %s181, 1
        %s268 = scalar_lea.sflag [#allocation3], %s267
        %s269 = sand.u32 %s181, 1
        %s270 = smul.addr %s269, 2
        %s271 = scalar_lea.vmem [#allocation2], %s270
        %p272 = scmp.lt.s32.totalorder %s21, 1
        %s273 = scalar_select %p272, %s21, 1
        %s274 = smul.addr %s273, 5
        %s275 = smul.addr %s274, 4
        %s276 = scalar_lea.vmem %s0, %s275
        %v278 = vld [vmem:[%s276] sm:$0xf]
        %v279 = vld [vmem:[%s276 + $0x4] sm:$0xf]
        %v280 = vld [vmem:[%s276 + $0x8] sm:$0xf]
        %v281 = vld [vmem:[%s276 + $0xc] sm:$0xf]
        %v282 = vld [vmem:[%s276 + $0x10] sm:$0x3]
        %v283 = vld [vmem:[%s1] sm:$0xf]
        %v284 = vld [vmem:[%s1 + $0x4] sm:$0xf]
        %v285 = vld [vmem:[%s1 + $0x8] sm:$0xf]
        %v286 = vld [vmem:[%s1 + $0xc] sm:$0xf]
        %v291 = vunpack.c.l.b16 %v283
        %v292 = vunpack.c.l.b16 %v284
        %v293 = vunpack.c.l.b16 %v285
        %v294 = vunpack.c.l.b16 %v286
        %v295 = vpack.c.b16 %v292, %v291
        %v296 = vpack.c.b16 %v294, %v293
        %v302 = vunpack.c.l.b16 %v278
        %v303 = vunpack.c.l.b16 %v279
        %v304 = vunpack.c.l.b16 %v280
        %v305 = vunpack.c.l.b16 %v281
        %v306 = vunpack.c.l.b16 %v282
        %v307 = vpack.c.b16 %v303, %v302
        %v308 = vpack.c.b16 %v305, %v304
        %v309 = vpack.c.b16 %v306, %v306
        %vm312 = vcmask 293888
        %v314 = vsel %vm312, %v295, 0
        %v317 = vsel %vm312, %v296, 0
        %vm319 = vcmask 1041408
        %v321 = vsel %vm319, %v309, 0
        %323 = vmatprep.subr.bf16.mxu0 0
        %324 = vmatpush1.bf16.msra.mxu0 0
        %325 = vmatprep.subr.bf16.mxu0 0
        %326 = vmatpush1.bf16.msra.mxu0 0
        %327 = vmatprep.subr.bf16.mxu0 0
        %328 = vmatpush1.bf16.msra.mxu0 0
        %329 = vmatprep.subr.bf16.mxu0 0
        %330 = vmatpush1.bf16.msra.mxu0 0
        %331 = vmatprep.subr.bf16.mxu0 0
        %332 = vmatpush1.bf16.msra.mxu0 0
        %333 = vmatprep.subr.bf16.mxu0 0
        %334 = vmatpush1.bf16.msra.mxu0 %v321
        %335 = vmatprep.subr.bf16.mxu0 0
        %336 = vmatpush1.bf16.msra.mxu0 %v308
        %337 = vmatprep.subr.bf16.mxu0 0
        %338 = vmatpush1.bf16.msra.mxu0 %v307
        %339 = vmatprep.subr.bf16.mxu0 0
        %340 = vmatpush2.bf16.msra.mxu0 0
        %341 = vmatprep.subr.bf16.mxu0 0
        %342 = vmatpush2.bf16.msra.mxu0 0
        %343 = vmatprep.subr.bf16.mxu0 0
        %344 = vmatpush2.bf16.msra.mxu0 0
        %345 = vmatprep.subr.bf16.mxu0 0
        %346 = vmatpush2.bf16.msra.mxu0 0
        %347 = vmatprep.subr.bf16.mxu0 0
        %348 = vmatpush2.bf16.msra.mxu0 0
        %349 = vmatprep.subr.bf16.mxu0 0
        %350 = vmatpush2.bf16.msra.mxu0 0
        %351 = vmatprep.subr.bf16.mxu0 0
        %352 = vmatpush2.bf16.msra.mxu0 0
        %353 = vmatprep.subr.bf16.mxu0 0
        %354 = vmatpush2.bf16.msra.mxu0 0
        %355 = vmatprep.mubr.bf16.mxu0 0
        %356 = vmatmul.mubr.bf16.gmra.mxu0 %v314
        %v357 = vpop.f32.mrf.mxu0
        %v358 = vadd.f32 0.0, %v357
        %v359 = vpop.f32.mrf.mxu0
        %v360 = vpop.f32.mrf.mxu0
        %v361 = vadd.f32 0.0, %v360
        %v362 = vpop.f32.mrf.mxu0
        %363 = vmatprep.mubr.bf16.mxu0 0
        %364 = vmatmul.mubr.bf16.gmra.mxu0 %v317
        %v365 = vpop.f32.mrf.mxu0
        %v366 = vadd.f32 0.0, %v365
        %v367 = vpop.f32.mrf.mxu0
        %v368 = vpop.f32.mrf.mxu0
        %v369 = vadd.f32 0.0, %v368
        %v370 = vpop.f32.mrf.mxu0
        %371 = vdwg.mxu0
        %v372 = vpack.c.bf16 %v361, %v358
        %v373 = vpack.c.bf16 %v369, %v366
        %v374 = vld [vmem:[%s2] sm:$0xff]
        %v375 = vld [vmem:[%s2 + $0x8] sm:$0xff]
        %v376 = vld [vmem:[%s2 + $0x10] sm:$0xff]
        %v377 = vld [vmem:[%s2 + $0x18] sm:$0xff]
        %v378 = vld [vmem:[%s2 + $0x20] sm:$0xff]
        %v379 = vld [vmem:[%s2 + $0x28] sm:$0xff]
        %v380 = vld [vmem:[%s2 + $0x30] sm:$0xff]
        %v381 = vld [vmem:[%s2 + $0x38] sm:$0xff]
        %v382 = vld [vmem:[%s2 + $0x40] sm:$0xff]
        %v383 = vld [vmem:[%s2 + $0x48] sm:$0xff]
        %v384 = vld [vmem:[%s2 + $0x50] sm:$0xff]
        %v385 = vld [vmem:[%s2 + $0x58] sm:$0xff]
        %v386 = vld [vmem:[%s2 + $0x60] sm:$0xff]
        %v387 = vld [vmem:[%s2 + $0x68] sm:$0xff]
        %v388 = vld [vmem:[%s2 + $0x70] sm:$0xff]
        %v389 = vld [vmem:[%s2 + $0x78] sm:$0xff]
        %v390 = vld [vmem:[%s2 + $0x80] sm:$0xff]
        %v391 = vld [vmem:[%s2 + $0x88] sm:$0xff]
        %v392 = vld [vmem:[%s2 + $0x90] sm:$0xff]
        %v393 = vld [vmem:[%s2 + $0x98] sm:$0xff]
        %v394 = vld [vmem:[%s2 + $0xa0] sm:$0xff]
        %v395 = vld [vmem:[%s2 + $0xa8] sm:$0xff]
        %v396 = vld [vmem:[%s2 + $0xb0] sm:$0xff]
        %v397 = vld [vmem:[%s2 + $0xb8] sm:$0xff]
        %v398 = vld [vmem:[%s2 + $0xc0] sm:$0xff]
        %v399 = vld [vmem:[%s2 + $0xc8] sm:$0xff]
        %v400 = vld [vmem:[%s2 + $0xd0] sm:$0xff]
        %v401 = vld [vmem:[%s2 + $0xd8] sm:$0xff]
        %v402 = vld [vmem:[%s2 + $0xe0] sm:$0xff]
        %v403 = vld [vmem:[%s2 + $0xe8] sm:$0xff]
        %v404 = vld [vmem:[%s2 + $0xf0] sm:$0xff]
        %v405 = vld [vmem:[%s2 + $0xf8] sm:$0xff]
        %v406 = vld [vmem:[%s2 + $0x100] sm:$0xff]
        %v407 = vld [vmem:[%s2 + $0x108] sm:$0xff]
        %v408 = vld [vmem:[%s2 + $0x110] sm:$0xff]
        %v409 = vld [vmem:[%s2 + $0x118] sm:$0xff]
        %v410 = vld [vmem:[%s2 + $0x120] sm:$0xff]
        %v411 = vld [vmem:[%s2 + $0x128] sm:$0xff]
        %v412 = vld [vmem:[%s2 + $0x130] sm:$0xff]
        %v413 = vld [vmem:[%s2 + $0x138] sm:$0xff]
        %v414 = vld [vmem:[%s2 + $0x140] sm:$0xff]
        %v415 = vld [vmem:[%s2 + $0x148] sm:$0xff]
        %v416 = vld [vmem:[%s2 + $0x150] sm:$0xff]
        %v417 = vld [vmem:[%s2 + $0x158] sm:$0xff]
        %v418 = vld [vmem:[%s2 + $0x160] sm:$0xff]
        %v419 = vld [vmem:[%s2 + $0x168] sm:$0xff]
        %v420 = vld [vmem:[%s2 + $0x170] sm:$0xff]
        %v421 = vld [vmem:[%s2 + $0x178] sm:$0xff]
        %v422 = vld [vmem:[%s2 + $0x180] sm:$0xff]
        %v423 = vld [vmem:[%s2 + $0x188] sm:$0xff]
        %v424 = vld [vmem:[%s2 + $0x190] sm:$0xff]
        %v425 = vld [vmem:[%s2 + $0x198] sm:$0xff]
        %v426 = vld [vmem:[%s2 + $0x1a0] sm:$0xff]
        %v427 = vld [vmem:[%s2 + $0x1a8] sm:$0xff]
        %v428 = vld [vmem:[%s2 + $0x1b0] sm:$0xff]
        %v429 = vld [vmem:[%s2 + $0x1b8] sm:$0xff]
        %v430 = vld [vmem:[%s2 + $0x1c0] sm:$0xff]
        %v431 = vld [vmem:[%s2 + $0x1c8] sm:$0xff]
        %v432 = vld [vmem:[%s2 + $0x1d0] sm:$0xff]
        %v433 = vld [vmem:[%s2 + $0x1d8] sm:$0xff]
        %v434 = vld [vmem:[%s2 + $0x1e0] sm:$0xff]
        %v435 = vld [vmem:[%s2 + $0x1e8] sm:$0xff]
        %v436 = vld [vmem:[%s2 + $0x1f0] sm:$0xff]
        %v437 = vld [vmem:[%s2 + $0x1f8] sm:$0xff]
        %v438 = vld [vmem:[%s2 + $0x200] sm:$0xff]
        %v439 = vld [vmem:[%s2 + $0x208] sm:$0xff]
        %v440 = vld [vmem:[%s2 + $0x210] sm:$0xff]
        %v441 = vld [vmem:[%s2 + $0x218] sm:$0xff]
        %v442 = vld [vmem:[%s2 + $0x220] sm:$0xff]
        %v443 = vld [vmem:[%s2 + $0x228] sm:$0xff]
        %v444 = vld [vmem:[%s2 + $0x230] sm:$0xff]
        %v445 = vld [vmem:[%s2 + $0x238] sm:$0xff]
        %s446 = scalar_lea.vmem %s1, 16
        %v447 = vld [vmem:[%s446] sm:$0xf]
        %v448 = vld [vmem:[%s446 + $0x4] sm:$0xf]
        %v449 = vld [vmem:[%s446 + $0x8] sm:$0xf]
        %v450 = vld [vmem:[%s446 + $0xc] sm:$0xf]
        %v455 = vunpack.c.l.b16 %v447
        %v456 = vunpack.c.l.b16 %v448
        %v457 = vunpack.c.l.b16 %v449
        %v458 = vunpack.c.l.b16 %v450
        %v459 = vpack.c.b16 %v456, %v455
        %v460 = vpack.c.b16 %v458, %v457
        %v462 = vsel %vm312, %v459, 0
        %v465 = vsel %vm312, %v460, 0
        %467 = vmatprep.subr.bf16.mxu0 0
        %468 = vmatpush1.bf16.msra.mxu0 0
        %469 = vmatprep.subr.bf16.mxu0 0
        %470 = vmatpush1.bf16.msra.mxu0 0
        %471 = vmatprep.subr.bf16.mxu0 0
        %472 = vmatpush1.bf16.msra.mxu0 0
        %473 = vmatprep.subr.bf16.mxu0 0
        %474 = vmatpush1.bf16.msra.mxu0 0
        %475 = vmatprep.subr.bf16.mxu0 0
        %476 = vmatpush1.bf16.msra.mxu0 0
        %477 = vmatprep.subr.bf16.mxu0 0
        %478 = vmatpush1.bf16.msra.mxu0 %v321
        %479 = vmatprep.subr.bf16.mxu0 0
        %480 = vmatpush1.bf16.msra.mxu0 %v308
        %481 = vmatprep.subr.bf16.mxu0 0
        %482 = vmatpush1.bf16.msra.mxu0 %v307
        %483 = vmatprep.subr.bf16.mxu0 0
        %484 = vmatpush2.bf16.msra.mxu0 0
        %485 = vmatprep.subr.bf16.mxu0 0
        %486 = vmatpush2.bf16.msra.mxu0 0
        %487 = vmatprep.subr.bf16.mxu0 0
        %488 = vmatpush2.bf16.msra.mxu0 0
        %489 = vmatprep.subr.bf16.mxu0 0
        %490 = vmatpush2.bf16.msra.mxu0 0
        %491 = vmatprep.subr.bf16.mxu0 0
        %492 = vmatpush2.bf16.msra.mxu0 0
        %493 = vmatprep.subr.bf16.mxu0 0
        %494 = vmatpush2.bf16.msra.mxu0 0
        %495 = vmatprep.subr.bf16.mxu0 0
        %496 = vmatpush2.bf16.msra.mxu0 0
        %497 = vmatprep.subr.bf16.mxu0 0
        %498 = vmatpush2.bf16.msra.mxu0 0
        %499 = vmatprep.mubr.bf16.mxu0 0
        %500 = vmatmul.mubr.bf16.gmra.mxu0 %v462
        %v501 = vpop.f32.mrf.mxu0
        %v502 = vadd.f32 0.0, %v501
        %v503 = vpop.f32.mrf.mxu0
        %v504 = vpop.f32.mrf.mxu0
        %v505 = vadd.f32 0.0, %v504
        %v506 = vpop.f32.mrf.mxu0
        %507 = vmatprep.mubr.bf16.mxu0 0
        %508 = vmatmul.mubr.bf16.gmra.mxu0 %v465
        %v509 = vpop.f32.mrf.mxu0
        %v510 = vadd.f32 0.0, %v509
        %v511 = vpop.f32.mrf.mxu0
        %v512 = vpop.f32.mrf.mxu0
        %v513 = vadd.f32 0.0, %v512
        %v514 = vpop.f32.mrf.mxu0
        %515 = vdwg.mxu0
        %v516 = vpack.c.bf16 %v505, %v502
        %v517 = vpack.c.bf16 %v513, %v510
        %s518 = scalar_lea.vmem %s2, 576
        %v519 = vld [vmem:[%s518] sm:$0xff]
        %v520 = vld [vmem:[%s518 + $0x8] sm:$0xff]
        %v521 = vld [vmem:[%s518 + $0x10] sm:$0xff]
        %v522 = vld [vmem:[%s518 + $0x18] sm:$0xff]
        %v523 = vld [vmem:[%s518 + $0x20] sm:$0xff]
        %v524 = vld [vmem:[%s518 + $0x28] sm:$0xff]
        %v525 = vld [vmem:[%s518 + $0x30] sm:$0xff]
        %v526 = vld [vmem:[%s518 + $0x38] sm:$0xff]
        %v527 = vld [vmem:[%s518 + $0x40] sm:$0xff]
        %v528 = vld [vmem:[%s518 + $0x48] sm:$0xff]
        %v529 = vld [vmem:[%s518 + $0x50] sm:$0xff]
        %v530 = vld [vmem:[%s518 + $0x58] sm:$0xff]
        %v531 = vld [vmem:[%s518 + $0x60] sm:$0xff]
        %v532 = vld [vmem:[%s518 + $0x68] sm:$0xff]
        %v533 = vld [vmem:[%s518 + $0x70] sm:$0xff]
        %v534 = vld [vmem:[%s518 + $0x78] sm:$0xff]
        %v535 = vld [vmem:[%s518 + $0x80] sm:$0xff]
        %v536 = vld [vmem:[%s518 + $0x88] sm:$0xff]
        %v537 = vld [vmem:[%s518 + $0x90] sm:$0xff]
        %v538 = vld [vmem:[%s518 + $0x98] sm:$0xff]
        %v539 = vld [vmem:[%s518 + $0xa0] sm:$0xff]
        %v540 = vld [vmem:[%s518 + $0xa8] sm:$0xff]
        %v541 = vld [vmem:[%s518 + $0xb0] sm:$0xff]
        %v542 = vld [vmem:[%s518 + $0xb8] sm:$0xff]
        %v543 = vld [vmem:[%s518 + $0xc0] sm:$0xff]
        %v544 = vld [vmem:[%s518 + $0xc8] sm:$0xff]
        %v545 = vld [vmem:[%s518 + $0xd0] sm:$0xff]
        %v546 = vld [vmem:[%s518 + $0xd8] sm:$0xff]
        %v547 = vld [vmem:[%s518 + $0xe0] sm:$0xff]
        %v548 = vld [vmem:[%s518 + $0xe8] sm:$0xff]
        %v549 = vld [vmem:[%s518 + $0xf0] sm:$0xff]
        %v550 = vld [vmem:[%s518 + $0xf8] sm:$0xff]
        %v551 = vld [vmem:[%s518 + $0x100] sm:$0xff]
        %v552 = vld [vmem:[%s518 + $0x108] sm:$0xff]
        %v553 = vld [vmem:[%s518 + $0x110] sm:$0xff]
        %v554 = vld [vmem:[%s518 + $0x118] sm:$0xff]
        %v555 = vld [vmem:[%s518 + $0x120] sm:$0xff]
        %v556 = vld [vmem:[%s518 + $0x128] sm:$0xff]
        %v557 = vld [vmem:[%s518 + $0x130] sm:$0xff]
        %v558 = vld [vmem:[%s518 + $0x138] sm:$0xff]
        %v559 = vld [vmem:[%s518 + $0x140] sm:$0xff]
        %v560 = vld [vmem:[%s518 + $0x148] sm:$0xff]
        %v561 = vld [vmem:[%s518 + $0x150] sm:$0xff]
        %v562 = vld [vmem:[%s518 + $0x158] sm:$0xff]
        %v563 = vld [vmem:[%s518 + $0x160] sm:$0xff]
        %v564 = vld [vmem:[%s518 + $0x168] sm:$0xff]
        %v565 = vld [vmem:[%s518 + $0x170] sm:$0xff]
        %v566 = vld [vmem:[%s518 + $0x178] sm:$0xff]
        %v567 = vld [vmem:[%s518 + $0x180] sm:$0xff]
        %v568 = vld [vmem:[%s518 + $0x188] sm:$0xff]
        %v569 = vld [vmem:[%s518 + $0x190] sm:$0xff]
        %v570 = vld [vmem:[%s518 + $0x198] sm:$0xff]
        %v571 = vld [vmem:[%s518 + $0x1a0] sm:$0xff]
        %v572 = vld [vmem:[%s518 + $0x1a8] sm:$0xff]
        %v573 = vld [vmem:[%s518 + $0x1b0] sm:$0xff]
        %v574 = vld [vmem:[%s518 + $0x1b8] sm:$0xff]
        %v575 = vld [vmem:[%s518 + $0x1c0] sm:$0xff]
        %v576 = vld [vmem:[%s518 + $0x1c8] sm:$0xff]
        %v577 = vld [vmem:[%s518 + $0x1d0] sm:$0xff]
        %v578 = vld [vmem:[%s518 + $0x1d8] sm:$0xff]
        %v579 = vld [vmem:[%s518 + $0x1e0] sm:$0xff]
        %v580 = vld [vmem:[%s518 + $0x1e8] sm:$0xff]
        %v581 = vld [vmem:[%s518 + $0x1f0] sm:$0xff]
        %v582 = vld [vmem:[%s518 + $0x1f8] sm:$0xff]
        %v583 = vld [vmem:[%s518 + $0x200] sm:$0xff]
        %v584 = vld [vmem:[%s518 + $0x208] sm:$0xff]
        %v585 = vld [vmem:[%s518 + $0x210] sm:$0xff]
        %v586 = vld [vmem:[%s518 + $0x218] sm:$0xff]
        %v587 = vld [vmem:[%s518 + $0x220] sm:$0xff]
        %v588 = vld [vmem:[%s518 + $0x228] sm:$0xff]
        %v589 = vld [vmem:[%s518 + $0x230] sm:$0xff]
        %v590 = vld [vmem:[%s518 + $0x238] sm:$0xff]
        %v663 = vunpack.c.l.b16 %v519
        %v664 = vunpack.c.h.b16 %v519
        %v665 = vunpack.c.l.b16 %v520
        %v666 = vunpack.c.h.b16 %v520
        %v667 = vunpack.c.l.b16 %v521
        %v668 = vunpack.c.h.b16 %v521
        %v669 = vunpack.c.l.b16 %v522
        %v670 = vunpack.c.h.b16 %v522
        %v671 = vunpack.c.l.b16 %v523
        %v672 = vunpack.c.h.b16 %v523
        %v673 = vunpack.c.l.b16 %v524
        %v674 = vunpack.c.h.b16 %v524
        %v675 = vunpack.c.l.b16 %v525
        %v676 = vunpack.c.h.b16 %v525
        %v677 = vunpack.c.l.b16 %v526
        %v678 = vunpack.c.h.b16 %v526
        %v679 = vunpack.c.l.b16 %v527
        %v680 = vunpack.c.h.b16 %v527
        %v681 = vunpack.c.l.b16 %v528
        %v682 = vunpack.c.h.b16 %v528
        %v683 = vunpack.c.l.b16 %v529
        %v684 = vunpack.c.h.b16 %v529
        %v685 = vunpack.c.l.b16 %v530
        %v686 = vunpack.c.h.b16 %v530
        %v687 = vunpack.c.l.b16 %v531
        %v688 = vunpack.c.h.b16 %v531
        %v689 = vunpack.c.l.b16 %v532
        %v690 = vunpack.c.h.b16 %v532
        %v691 = vunpack.c.l.b16 %v533
        %v692 = vunpack.c.h.b16 %v533
        %v693 = vunpack.c.l.b16 %v534
        %v694 = vunpack.c.h.b16 %v534
        %v695 = vunpack.c.l.b16 %v535
        %v696 = vunpack.c.h.b16 %v535
        %v697 = vunpack.c.l.b16 %v536
        %v698 = vunpack.c.h.b16 %v536
        %v699 = vunpack.c.l.b16 %v537
        %v700 = vunpack.c.h.b16 %v537
        %v701 = vunpack.c.l.b16 %v538
        %v702 = vunpack.c.h.b16 %v538
        %v703 = vunpack.c.l.b16 %v539
        %v704 = vunpack.c.h.b16 %v539
        %v705 = vunpack.c.l.b16 %v540
        %v706 = vunpack.c.h.b16 %v540
        %v707 = vunpack.c.l.b16 %v541
        %v708 = vunpack.c.h.b16 %v541
        %v709 = vunpack.c.l.b16 %v542
        %v710 = vunpack.c.h.b16 %v542
        %v711 = vunpack.c.l.b16 %v543
        %v712 = vunpack.c.h.b16 %v543
        %v713 = vunpack.c.l.b16 %v544
        %v714 = vunpack.c.h.b16 %v544
        %v715 = vunpack.c.l.b16 %v545
        %v716 = vunpack.c.h.b16 %v545
        %v717 = vunpack.c.l.b16 %v546
        %v718 = vunpack.c.h.b16 %v546
        %v719 = vunpack.c.l.b16 %v547
        %v720 = vunpack.c.h.b16 %v547
        %v721 = vunpack.c.l.b16 %v548
        %v722 = vunpack.c.h.b16 %v548
        %v723 = vunpack.c.l.b16 %v549
        %v724 = vunpack.c.h.b16 %v549
        %v725 = vunpack.c.l.b16 %v550
        %v726 = vunpack.c.h.b16 %v550
        %v727 = vunpack.c.l.b16 %v551
        %v728 = vunpack.c.h.b16 %v551
        %v729 = vunpack.c.l.b16 %v552
        %v730 = vunpack.c.h.b16 %v552
        %v731 = vunpack.c.l.b16 %v553
        %v732 = vunpack.c.h.b16 %v553
        %v733 = vunpack.c.l.b16 %v554
        %v734 = vunpack.c.h.b16 %v554
        %v735 = vunpack.c.l.b16 %v555
        %v736 = vunpack.c.h.b16 %v555
        %v737 = vunpack.c.l.b16 %v556
        %v738 = vunpack.c.h.b16 %v556
        %v739 = vunpack.c.l.b16 %v557
        %v740 = vunpack.c.h.b16 %v557
        %v741 = vunpack.c.l.b16 %v558
        %v742 = vunpack.c.h.b16 %v558
        %v743 = vunpack.c.l.b16 %v559
        %v744 = vunpack.c.h.b16 %v559
        %v745 = vunpack.c.l.b16 %v560
        %v746 = vunpack.c.h.b16 %v560
        %v747 = vunpack.c.l.b16 %v561
        %v748 = vunpack.c.h.b16 %v561
        %v749 = vunpack.c.l.b16 %v562
        %v750 = vunpack.c.h.b16 %v562
        %v751 = vunpack.c.l.b16 %v563
        %v752 = vunpack.c.h.b16 %v563
        %v753 = vunpack.c.l.b16 %v564
        %v754 = vunpack.c.h.b16 %v564
        %v755 = vunpack.c.l.b16 %v565
        %v756 = vunpack.c.h.b16 %v565
        %v757 = vunpack.c.l.b16 %v566
        %v758 = vunpack.c.h.b16 %v566
        %v759 = vunpack.c.l.b16 %v567
        %v760 = vunpack.c.h.b16 %v567
        %v761 = vunpack.c.l.b16 %v568
        %v762 = vunpack.c.h.b16 %v568
        %v763 = vunpack.c.l.b16 %v569
        %v764 = vunpack.c.h.b16 %v569
        %v765 = vunpack.c.l.b16 %v570
        %v766 = vunpack.c.h.b16 %v570
        %v767 = vunpack.c.l.b16 %v571
        %v768 = vunpack.c.h.b16 %v571
        %v769 = vunpack.c.l.b16 %v572
        %v770 = vunpack.c.h.b16 %v572
        %v771 = vunpack.c.l.b16 %v573
        %v772 = vunpack.c.h.b16 %v573
        %v773 = vunpack.c.l.b16 %v574
        %v774 = vunpack.c.h.b16 %v574
        %v775 = vunpack.c.l.b16 %v575
        %v776 = vunpack.c.h.b16 %v575
        %v777 = vunpack.c.l.b16 %v576
        %v778 = vunpack.c.h.b16 %v576
        %v779 = vunpack.c.l.b16 %v577
        %v780 = vunpack.c.h.b16 %v577
        %v781 = vunpack.c.l.b16 %v578
        %v782 = vunpack.c.h.b16 %v578
        %v783 = vunpack.c.l.b16 %v579
        %v784 = vunpack.c.h.b16 %v579
        %v785 = vunpack.c.l.b16 %v580
        %v786 = vunpack.c.h.b16 %v580
        %v787 = vunpack.c.l.b16 %v581
        %v788 = vunpack.c.h.b16 %v581
        %v789 = vunpack.c.l.b16 %v582
        %v790 = vunpack.c.h.b16 %v582
        %v791 = vunpack.c.l.b16 %v583
        %v792 = vunpack.c.h.b16 %v583
        %v793 = vunpack.c.l.b16 %v584
        %v794 = vunpack.c.h.b16 %v584
        %v795 = vunpack.c.l.b16 %v585
        %v796 = vunpack.c.h.b16 %v585
        %v797 = vunpack.c.l.b16 %v586
        %v798 = vunpack.c.h.b16 %v586
        %v799 = vunpack.c.l.b16 %v587
        %v800 = vunpack.c.h.b16 %v587
        %v801 = vunpack.c.l.b16 %v588
        %v802 = vunpack.c.h.b16 %v588
        %v803 = vunpack.c.l.b16 %v589
        %v804 = vunpack.c.h.b16 %v589
        %v805 = vunpack.c.l.b16 %v590
        %v806 = vunpack.c.h.b16 %v590
        %v807 = vpack.c.b16 %v679, %v663
        %v808 = vpack.c.b16 %v680, %v664
        %v809 = vpack.c.b16 %v681, %v665
        %v810 = vpack.c.b16 %v682, %v666
        %v811 = vpack.c.b16 %v683, %v667
        %v812 = vpack.c.b16 %v684, %v668
        %v813 = vpack.c.b16 %v685, %v669
        %v814 = vpack.c.b16 %v686, %v670
        %v815 = vpack.c.b16 %v687, %v671
        %v816 = vpack.c.b16 %v688, %v672
        %v817 = vpack.c.b16 %v689, %v673
        %v818 = vpack.c.b16 %v690, %v674
        %v819 = vpack.c.b16 %v691, %v675
        %v820 = vpack.c.b16 %v692, %v676
        %v821 = vpack.c.b16 %v693, %v677
        %v822 = vpack.c.b16 %v694, %v678
        %v823 = vpack.c.b16 %v711, %v695
        %v824 = vpack.c.b16 %v712, %v696
        %v825 = vpack.c.b16 %v713, %v697
        %v826 = vpack.c.b16 %v714, %v698
        %v827 = vpack.c.b16 %v715, %v699
        %v828 = vpack.c.b16 %v716, %v700
        %v829 = vpack.c.b16 %v717, %v701
        %v830 = vpack.c.b16 %v718, %v702
        %v831 = vpack.c.b16 %v719, %v703
        %v832 = vpack.c.b16 %v720, %v704
        %v833 = vpack.c.b16 %v721, %v705
        %v834 = vpack.c.b16 %v722, %v706
        %v835 = vpack.c.b16 %v723, %v707
        %v836 = vpack.c.b16 %v724, %v708
        %v837 = vpack.c.b16 %v725, %v709
        %v838 = vpack.c.b16 %v726, %v710
        %v839 = vpack.c.b16 %v743, %v727
        %v840 = vpack.c.b16 %v744, %v728
        %v841 = vpack.c.b16 %v745, %v729
        %v842 = vpack.c.b16 %v746, %v730
        %v843 = vpack.c.b16 %v747, %v731
        %v844 = vpack.c.b16 %v748, %v732
        %v845 = vpack.c.b16 %v749, %v733
        %v846 = vpack.c.b16 %v750, %v734
        %v847 = vpack.c.b16 %v751, %v735
        %v848 = vpack.c.b16 %v752, %v736
        %v849 = vpack.c.b16 %v753, %v737
        %v850 = vpack.c.b16 %v754, %v738
        %v851 = vpack.c.b16 %v755, %v739
        %v852 = vpack.c.b16 %v756, %v740
        %v853 = vpack.c.b16 %v757, %v741
        %v854 = vpack.c.b16 %v758, %v742
        %v855 = vpack.c.b16 %v775, %v759
        %v856 = vpack.c.b16 %v776, %v760
        %v857 = vpack.c.b16 %v777, %v761
        %v858 = vpack.c.b16 %v778, %v762
        %v859 = vpack.c.b16 %v779, %v763
        %v860 = vpack.c.b16 %v780, %v764
        %v861 = vpack.c.b16 %v781, %v765
        %v862 = vpack.c.b16 %v782, %v766
        %v863 = vpack.c.b16 %v783, %v767
        %v864 = vpack.c.b16 %v784, %v768
        %v865 = vpack.c.b16 %v785, %v769
        %v866 = vpack.c.b16 %v786, %v770
        %v867 = vpack.c.b16 %v787, %v771
        %v868 = vpack.c.b16 %v788, %v772
        %v869 = vpack.c.b16 %v789, %v773
        %v870 = vpack.c.b16 %v790, %v774
        %v871 = vpack.c.b16 %v791, %v791
        %v872 = vpack.c.b16 %v792, %v792
        %v873 = vpack.c.b16 %v793, %v793
        %v874 = vpack.c.b16 %v794, %v794
        %v875 = vpack.c.b16 %v795, %v795
        %v876 = vpack.c.b16 %v796, %v796
        %v877 = vpack.c.b16 %v797, %v797
        %v878 = vpack.c.b16 %v798, %v798
        %v879 = vpack.c.b16 %v799, %v799
        %v880 = vpack.c.b16 %v800, %v800
        %v881 = vpack.c.b16 %v801, %v801
        %v882 = vpack.c.b16 %v802, %v802
        %v883 = vpack.c.b16 %v803, %v803
        %v884 = vpack.c.b16 %v804, %v804
        %v885 = vpack.c.b16 %v805, %v805
        %v886 = vpack.c.b16 %v806, %v806
        %vm951 = vcmask 588800
        %v953 = vsel %vm951, %v516, 0
        %v956 = vsel %vm951, %v517, 0
        %vm958 = vcmask 1043456
        %v960 = vsel %vm958, %v871, 0
        %v963 = vsel %vm958, %v872, 0
        %v966 = vsel %vm958, %v873, 0
        %v969 = vsel %vm958, %v874, 0
        %v972 = vsel %vm958, %v875, 0
        %v975 = vsel %vm958, %v876, 0
        %v978 = vsel %vm958, %v877, 0
        %v981 = vsel %vm958, %v878, 0
        %v984 = vsel %vm958, %v879, 0
        %v987 = vsel %vm958, %v880, 0
        %v990 = vsel %vm958, %v881, 0
        %v993 = vsel %vm958, %v882, 0
        %v996 = vsel %vm958, %v883, 0
        %v999 = vsel %vm958, %v884, 0
        %v1002 = vsel %vm958, %v885, 0
        %v1005 = vsel %vm958, %v886, 0
        %1007 = vmatprep.subr.bf16.mxu0 0
        %1008 = vmatpush1.bf16.msra.mxu0 0
        %1009 = vmatprep.subr.bf16.mxu0 0
        %1010 = vmatpush1.bf16.msra.mxu0 0
        %1011 = vmatprep.subr.bf16.mxu0 0
        %1012 = vmatpush1.bf16.msra.mxu0 0
        %1013 = vmatprep.subr.bf16.mxu0 %v963
        %1014 = vmatpush1.bf16.msra.mxu0 %v960
        %1015 = vmatprep.subr.bf16.mxu0 %v856
        %1016 = vmatpush1.bf16.msra.mxu0 %v855
        %1017 = vmatprep.subr.bf16.mxu0 %v840
        %1018 = vmatpush1.bf16.msra.mxu0 %v839
        %1019 = vmatprep.subr.bf16.mxu0 %v824
        %1020 = vmatpush1.bf16.msra.mxu0 %v823
        %1021 = vmatprep.subr.bf16.mxu0 %v808
        %1022 = vmatpush1.bf16.msra.mxu0 %v807
        %1023 = vmatprep.subr.bf16.mxu0 0
        %1024 = vmatpush2.bf16.msra.mxu0 0
        %1025 = vmatprep.subr.bf16.mxu0 0
        %1026 = vmatpush2.bf16.msra.mxu0 0
        %1027 = vmatprep.subr.bf16.mxu0 0
        %1028 = vmatpush2.bf16.msra.mxu0 0
        %1029 = vmatprep.subr.bf16.mxu0 0
        %1030 = vmatpush2.bf16.msra.mxu0 0
        %1031 = vmatprep.subr.bf16.mxu0 0
        %1032 = vmatpush2.bf16.msra.mxu0 0
        %1033 = vmatprep.subr.bf16.mxu0 0
        %1034 = vmatpush2.bf16.msra.mxu0 0
        %1035 = vmatprep.subr.bf16.mxu0 0
        %1036 = vmatpush2.bf16.msra.mxu0 0
        %1037 = vmatprep.subr.bf16.mxu0 0
        %1038 = vmatpush2.bf16.msra.mxu0 0
        %1039 = vmatprep.mubr.bf16.mxu0 0
        %1040 = vmatmul.mubr.bf16.gmra.mxu0 %v953
        %v1041 = vpop.f32.mrf.mxu0
        %v1042 = vadd.f32 0.0, %v1041
        %v1043 = vpop.f32.mrf.mxu0
        %v1044 = vadd.f32 0.0, %v1043
        %v1045 = vpop.f32.mrf.mxu0
        %v1046 = vadd.f32 0.0, %v1045
        %v1047 = vpop.f32.mrf.mxu0
        %v1048 = vadd.f32 0.0, %v1047
        %1049 = vmatprep.mubr.bf16.mxu0 0
        %1050 = vmatmul.mubr.bf16.gmra.mxu0 %v956
        %v1051 = vpop.f32.mrf.mxu0
        %v1052 = vadd.f32 0.0, %v1051
        %v1053 = vpop.f32.mrf.mxu0
        %v1054 = vadd.f32 0.0, %v1053
        %v1055 = vpop.f32.mrf.mxu0
        %v1056 = vadd.f32 0.0, %v1055
        %v1057 = vpop.f32.mrf.mxu0
        %v1058 = vadd.f32 0.0, %v1057
        %1059 = vdwg.mxu0
        %1060 = vmatprep.subr.bf16.mxu0 0
        %1061 = vmatpush1.bf16.msra.mxu0 0
        %1062 = vmatprep.subr.bf16.mxu0 0
        %1063 = vmatpush1.bf16.msra.mxu0 0
        %1064 = vmatprep.subr.bf16.mxu0 0
        %1065 = vmatpush1.bf16.msra.mxu0 0
        %1066 = vmatprep.subr.bf16.mxu0 %v969
        %1067 = vmatpush1.bf16.msra.mxu0 %v966
        %1068 = vmatprep.subr.bf16.mxu0 %v858
        %1069 = vmatpush1.bf16.msra.mxu0 %v857
        %1070 = vmatprep.subr.bf16.mxu0 %v842
        %1071 = vmatpush1.bf16.msra.mxu0 %v841
        %1072 = vmatprep.subr.bf16.mxu0 %v826
        %1073 = vmatpush1.bf16.msra.mxu0 %v825
        %1074 = vmatprep.subr.bf16.mxu0 %v810
        %1075 = vmatpush1.bf16.msra.mxu0 %v809
        %1076 = vmatprep.subr.bf16.mxu0 0
        %1077 = vmatpush2.bf16.msra.mxu0 0
        %1078 = vmatprep.subr.bf16.mxu0 0
        %1079 = vmatpush2.bf16.msra.mxu0 0
        %1080 = vmatprep.subr.bf16.mxu0 0
        %1081 = vmatpush2.bf16.msra.mxu0 0
        %1082 = vmatprep.subr.bf16.mxu0 0
        %1083 = vmatpush2.bf16.msra.mxu0 0
        %1084 = vmatprep.subr.bf16.mxu0 0
        %1085 = vmatpush2.bf16.msra.mxu0 0
        %1086 = vmatprep.subr.bf16.mxu0 0
        %1087 = vmatpush2.bf16.msra.mxu0 0
        %1088 = vmatprep.subr.bf16.mxu0 0
        %1089 = vmatpush2.bf16.msra.mxu0 0
        %1090 = vmatprep.subr.bf16.mxu0 0
        %1091 = vmatpush2.bf16.msra.mxu0 0
        %1092 = vmatprep.mubr.bf16.mxu0 0
        %1093 = vmatmul.mubr.bf16.gmra.mxu0 %v953
        %v1094 = vpop.f32.mrf.mxu0
        %v1095 = vadd.f32 0.0, %v1094
        %v1096 = vpop.f32.mrf.mxu0
        %v1097 = vadd.f32 0.0, %v1096
        %v1098 = vpop.f32.mrf.mxu0
        %v1099 = vadd.f32 0.0, %v1098
        %v1100 = vpop.f32.mrf.mxu0
        %v1101 = vadd.f32 0.0, %v1100
        %1102 = vmatprep.mubr.bf16.mxu0 0
        %1103 = vmatmul.mubr.bf16.gmra.mxu0 %v956
        %v1104 = vpop.f32.mrf.mxu0
        %v1105 = vadd.f32 0.0, %v1104
        %v1106 = vpop.f32.mrf.mxu0
        %v1107 = vadd.f32 0.0, %v1106
        %v1108 = vpop.f32.mrf.mxu0
        %v1109 = vadd.f32 0.0, %v1108
        %v1110 = vpop.f32.mrf.mxu0
        %v1111 = vadd.f32 0.0, %v1110
        %1112 = vdwg.mxu0
        %1113 = vmatprep.subr.bf16.mxu0 0
        %1114 = vmatpush1.bf16.msra.mxu0 0
        %1115 = vmatprep.subr.bf16.mxu0 0
        %1116 = vmatpush1.bf16.msra.mxu0 0
        %1117 = vmatprep.subr.bf16.mxu0 0
        %1118 = vmatpush1.bf16.msra.mxu0 0
        %1119 = vmatprep.subr.bf16.mxu0 %v975
        %1120 = vmatpush1.bf16.msra.mxu0 %v972
        %1121 = vmatprep.subr.bf16.mxu0 %v860
        %1122 = vmatpush1.bf16.msra.mxu0 %v859
        %1123 = vmatprep.subr.bf16.mxu0 %v844
        %1124 = vmatpush1.bf16.msra.mxu0 %v843
        %1125 = vmatprep.subr.bf16.mxu0 %v828
        %1126 = vmatpush1.bf16.msra.mxu0 %v827
        %1127 = vmatprep.subr.bf16.mxu0 %v812
        %1128 = vmatpush1.bf16.msra.mxu0 %v811
        %1129 = vmatprep.subr.bf16.mxu0 0
        %1130 = vmatpush2.bf16.msra.mxu0 0
        %1131 = vmatprep.subr.bf16.mxu0 0
        %1132 = vmatpush2.bf16.msra.mxu0 0
        %1133 = vmatprep.subr.bf16.mxu0 0
        %1134 = vmatpush2.bf16.msra.mxu0 0
        %1135 = vmatprep.subr.bf16.mxu0 0
        %1136 = vmatpush2.bf16.msra.mxu0 0
        %1137 = vmatprep.subr.bf16.mxu0 0
        %1138 = vmatpush2.bf16.msra.mxu0 0
        %1139 = vmatprep.subr.bf16.mxu0 0
        %1140 = vmatpush2.bf16.msra.mxu0 0
        %1141 = vmatprep.subr.bf16.mxu0 0
        %1142 = vmatpush2.bf16.msra.mxu0 0
        %1143 = vmatprep.subr.bf16.mxu0 0
        %1144 = vmatpush2.bf16.msra.mxu0 0
        %1145 = vmatprep.mubr.bf16.mxu0 0
        %1146 = vmatmul.mubr.bf16.gmra.mxu0 %v953
        %v1147 = vpop.f32.mrf.mxu0
        %v1148 = vadd.f32 0.0, %v1147
        %v1149 = vpop.f32.mrf.mxu0
        %v1150 = vadd.f32 0.0, %v1149
        %v1151 = vpop.f32.mrf.mxu0
        %v1152 = vadd.f32 0.0, %v1151
        %v1153 = vpop.f32.mrf.mxu0
        %v1154 = vadd.f32 0.0, %v1153
        %1155 = vmatprep.mubr.bf16.mxu0 0
        %1156 = vmatmul.mubr.bf16.gmra.mxu0 %v956
        %v1157 = vpop.f32.mrf.mxu0
        %v1158 = vadd.f32 0.0, %v1157
        %v1159 = vpop.f32.mrf.mxu0
        %v1160 = vadd.f32 0.0, %v1159
        %v1161 = vpop.f32.mrf.mxu0
        %v1162 = vadd.f32 0.0, %v1161
        %v1163 = vpop.f32.mrf.mxu0
        %v1164 = vadd.f32 0.0, %v1163
        %1165 = vdwg.mxu0
        %1166 = vmatprep.subr.bf16.mxu0 0
        %1167 = vmatpush1.bf16.msra.mxu0 0
        %1168 = vmatprep.subr.bf16.mxu0 0
        %1169 = vmatpush1.bf16.msra.mxu0 0
        %1170 = vmatprep.subr.bf16.mxu0 0
        %1171 = vmatpush1.bf16.msra.mxu0 0
        %1172 = vmatprep.subr.bf16.mxu0 %v981
        %1173 = vmatpush1.bf16.msra.mxu0 %v978
        %1174 = vmatprep.subr.bf16.mxu0 %v862
        %1175 = vmatpush1.bf16.msra.mxu0 %v861
        %1176 = vmatprep.subr.bf16.mxu0 %v846
        %1177 = vmatpush1.bf16.msra.mxu0 %v845
        %1178 = vmatprep.subr.bf16.mxu0 %v830
        %1179 = vmatpush1.bf16.msra.mxu0 %v829
        %1180 = vmatprep.subr.bf16.mxu0 %v814
        %1181 = vmatpush1.bf16.msra.mxu0 %v813
        %1182 = vmatprep.subr.bf16.mxu0 0
        %1183 = vmatpush2.bf16.msra.mxu0 0
        %1184 = vmatprep.subr.bf16.mxu0 0
        %1185 = vmatpush2.bf16.msra.mxu0 0
        %1186 = vmatprep.subr.bf16.mxu0 0
        %1187 = vmatpush2.bf16.msra.mxu0 0
        %1188 = vmatprep.subr.bf16.mxu0 0
        %1189 = vmatpush2.bf16.msra.mxu0 0
        %1190 = vmatprep.subr.bf16.mxu0 0
        %1191 = vmatpush2.bf16.msra.mxu0 0
        %1192 = vmatprep.subr.bf16.mxu0 0
        %1193 = vmatpush2.bf16.msra.mxu0 0
        %1194 = vmatprep.subr.bf16.mxu0 0
        %1195 = vmatpush2.bf16.msra.mxu0 0
        %1196 = vmatprep.subr.bf16.mxu0 0
        %1197 = vmatpush2.bf16.msra.mxu0 0
        %1198 = vmatprep.mubr.bf16.mxu0 0
        %1199 = vmatmul.mubr.bf16.gmra.mxu0 %v953
        %v1200 = vpop.f32.mrf.mxu0
        %v1201 = vadd.f32 0.0, %v1200
        %v1202 = vpop.f32.mrf.mxu0
        %v1203 = vadd.f32 0.0, %v1202
        %v1204 = vpop.f32.mrf.mxu0
        %v1205 = vadd.f32 0.0, %v1204
        %v1206 = vpop.f32.mrf.mxu0
        %v1207 = vadd.f32 0.0, %v1206
        %1208 = vmatprep.mubr.bf16.mxu0 0
        %1209 = vmatmul.mubr.bf16.gmra.mxu0 %v956
        %v1210 = vpop.f32.mrf.mxu0
        %v1211 = vadd.f32 0.0, %v1210
        %v1212 = vpop.f32.mrf.mxu0
        %v1213 = vadd.f32 0.0, %v1212
        %v1214 = vpop.f32.mrf.mxu0
        %v1215 = vadd.f32 0.0, %v1214
        %v1216 = vpop.f32.mrf.mxu0
        %v1217 = vadd.f32 0.0, %v1216
        %1218 = vdwg.mxu0
        %1219 = vmatprep.subr.bf16.mxu0 0
        %1220 = vmatpush1.bf16.msra.mxu0 0
        %1221 = vmatprep.subr.bf16.mxu0 0
        %1222 = vmatpush1.bf16.msra.mxu0 0
        %1223 = vmatprep.subr.bf16.mxu0 0
        %1224 = vmatpush1.bf16.msra.mxu0 0
        %1225 = vmatprep.subr.bf16.mxu0 %v987
        %1226 = vmatpush1.bf16.msra.mxu0 %v984
        %1227 = vmatprep.subr.bf16.mxu0 %v864
        %1228 = vmatpush1.bf16.msra.mxu0 %v863
        %1229 = vmatprep.subr.bf16.mxu0 %v848
        %1230 = vmatpush1.bf16.msra.mxu0 %v847
        %1231 = vmatprep.subr.bf16.mxu0 %v832
        %1232 = vmatpush1.bf16.msra.mxu0 %v831
        %1233 = vmatprep.subr.bf16.mxu0 %v816
        %1234 = vmatpush1.bf16.msra.mxu0 %v815
        %1235 = vmatprep.subr.bf16.mxu0 0
        %1236 = vmatpush2.bf16.msra.mxu0 0
        %1237 = vmatprep.subr.bf16.mxu0 0
        %1238 = vmatpush2.bf16.msra.mxu0 0
        %1239 = vmatprep.subr.bf16.mxu0 0
        %1240 = vmatpush2.bf16.msra.mxu0 0
        %1241 = vmatprep.subr.bf16.mxu0 0
        %1242 = vmatpush2.bf16.msra.mxu0 0
        %1243 = vmatprep.subr.bf16.mxu0 0
        %1244 = vmatpush2.bf16.msra.mxu0 0
        %1245 = vmatprep.subr.bf16.mxu0 0
        %1246 = vmatpush2.bf16.msra.mxu0 0
        %1247 = vmatprep.subr.bf16.mxu0 0
        %1248 = vmatpush2.bf16.msra.mxu0 0
        %1249 = vmatprep.subr.bf16.mxu0 0
        %1250 = vmatpush2.bf16.msra.mxu0 0
        %1251 = vmatprep.mubr.bf16.mxu0 0
        %1252 = vmatmul.mubr.bf16.gmra.mxu0 %v953
        %v1253 = vpop.f32.mrf.mxu0
        %v1254 = vadd.f32 0.0, %v1253
        %v1255 = vpop.f32.mrf.mxu0
        %v1256 = vadd.f32 0.0, %v1255
        %v1257 = vpop.f32.mrf.mxu0
        %v1258 = vadd.f32 0.0, %v1257
        %v1259 = vpop.f32.mrf.mxu0
        %v1260 = vadd.f32 0.0, %v1259
        %1261 = vmatprep.mubr.bf16.mxu0 0
        %1262 = vmatmul.mubr.bf16.gmra.mxu0 %v956
        %v1263 = vpop.f32.mrf.mxu0
        %v1264 = vadd.f32 0.0, %v1263
        %v1265 = vpop.f32.mrf.mxu0
        %v1266 = vadd.f32 0.0, %v1265
        %v1267 = vpop.f32.mrf.mxu0
        %v1268 = vadd.f32 0.0, %v1267
        %v1269 = vpop.f32.mrf.mxu0
        %v1270 = vadd.f32 0.0, %v1269
        %1271 = vdwg.mxu0
        %1272 = vmatprep.subr.bf16.mxu0 0
        %1273 = vmatpush1.bf16.msra.mxu0 0
        %1274 = vmatprep.subr.bf16.mxu0 0
        %1275 = vmatpush1.bf16.msra.mxu0 0
        %1276 = vmatprep.subr.bf16.mxu0 0
        %1277 = vmatpush1.bf16.msra.mxu0 0
        %1278 = vmatprep.subr.bf16.mxu0 %v993
        %1279 = vmatpush1.bf16.msra.mxu0 %v990
        %1280 = vmatprep.subr.bf16.mxu0 %v866
        %1281 = vmatpush1.bf16.msra.mxu0 %v865
        %1282 = vmatprep.subr.bf16.mxu0 %v850
        %1283 = vmatpush1.bf16.msra.mxu0 %v849
        %1284 = vmatprep.subr.bf16.mxu0 %v834
        %1285 = vmatpush1.bf16.msra.mxu0 %v833
        %1286 = vmatprep.subr.bf16.mxu0 %v818
        %1287 = vmatpush1.bf16.msra.mxu0 %v817
        %1288 = vmatprep.subr.bf16.mxu0 0
        %1289 = vmatpush2.bf16.msra.mxu0 0
        %1290 = vmatprep.subr.bf16.mxu0 0
        %1291 = vmatpush2.bf16.msra.mxu0 0
        %1292 = vmatprep.subr.bf16.mxu0 0
        %1293 = vmatpush2.bf16.msra.mxu0 0
        %1294 = vmatprep.subr.bf16.mxu0 0
        %1295 = vmatpush2.bf16.msra.mxu0 0
        %1296 = vmatprep.subr.bf16.mxu0 0
        %1297 = vmatpush2.bf16.msra.mxu0 0
        %1298 = vmatprep.subr.bf16.mxu0 0
        %1299 = vmatpush2.bf16.msra.mxu0 0
        %1300 = vmatprep.subr.bf16.mxu0 0
        %1301 = vmatpush2.bf16.msra.mxu0 0
        %1302 = vmatprep.subr.bf16.mxu0 0
        %1303 = vmatpush2.bf16.msra.mxu0 0
        %1304 = vmatprep.mubr.bf16.mxu0 0
        %1305 = vmatmul.mubr.bf16.gmra.mxu0 %v953
        %v1306 = vpop.f32.mrf.mxu0
        %v1307 = vadd.f32 0.0, %v1306
        %v1308 = vpop.f32.mrf.mxu0
        %v1309 = vadd.f32 0.0, %v1308
        %v1310 = vpop.f32.mrf.mxu0
        %v1311 = vadd.f32 0.0, %v1310
        %v1312 = vpop.f32.mrf.mxu0
        %v1313 = vadd.f32 0.0, %v1312
        %1314 = vmatprep.mubr.bf16.mxu0 0
        %1315 = vmatmul.mubr.bf16.gmra.mxu0 %v956
        %v1316 = vpop.f32.mrf.mxu0
        %v1317 = vadd.f32 0.0, %v1316
        %v1318 = vpop.f32.mrf.mxu0
        %v1319 = vadd.f32 0.0, %v1318
        %v1320 = vpop.f32.mrf.mxu0
        %v1321 = vadd.f32 0.0, %v1320
        %v1322 = vpop.f32.mrf.mxu0
        %v1323 = vadd.f32 0.0, %v1322
        %1324 = vdwg.mxu0
        %1325 = vmatprep.subr.bf16.mxu0 0
        %1326 = vmatpush1.bf16.msra.mxu0 0
        %1327 = vmatprep.subr.bf16.mxu0 0
        %1328 = vmatpush1.bf16.msra.mxu0 0
        %1329 = vmatprep.subr.bf16.mxu0 0
        %1330 = vmatpush1.bf16.msra.mxu0 0
        %1331 = vmatprep.subr.bf16.mxu0 %v999
        %1332 = vmatpush1.bf16.msra.mxu0 %v996
        %1333 = vmatprep.subr.bf16.mxu0 %v868
        %1334 = vmatpush1.bf16.msra.mxu0 %v867
        %1335 = vmatprep.subr.bf16.mxu0 %v852
        %1336 = vmatpush1.bf16.msra.mxu0 %v851
        %1337 = vmatprep.subr.bf16.mxu0 %v836
        %1338 = vmatpush1.bf16.msra.mxu0 %v835
        %1339 = vmatprep.subr.bf16.mxu0 %v820
        %1340 = vmatpush1.bf16.msra.mxu0 %v819
        %1341 = vmatprep.subr.bf16.mxu0 0
        %1342 = vmatpush2.bf16.msra.mxu0 0
        %1343 = vmatprep.subr.bf16.mxu0 0
        %1344 = vmatpush2.bf16.msra.mxu0 0
        %1345 = vmatprep.subr.bf16.mxu0 0
        %1346 = vmatpush2.bf16.msra.mxu0 0
        %1347 = vmatprep.subr.bf16.mxu0 0
        %1348 = vmatpush2.bf16.msra.mxu0 0
        %1349 = vmatprep.subr.bf16.mxu0 0
        %1350 = vmatpush2.bf16.msra.mxu0 0
        %1351 = vmatprep.subr.bf16.mxu0 0
        %1352 = vmatpush2.bf16.msra.mxu0 0
        %1353 = vmatprep.subr.bf16.mxu0 0
        %1354 = vmatpush2.bf16.msra.mxu0 0
        %1355 = vmatprep.subr.bf16.mxu0 0
        %1356 = vmatpush2.bf16.msra.mxu0 0
        %1357 = vmatprep.mubr.bf16.mxu0 0
        %1358 = vmatmul.mubr.bf16.gmra.mxu0 %v953
        %v1359 = vpop.f32.mrf.mxu0
        %v1360 = vadd.f32 0.0, %v1359
        %v1361 = vpop.f32.mrf.mxu0
        %v1362 = vadd.f32 0.0, %v1361
        %v1363 = vpop.f32.mrf.mxu0
        %v1364 = vadd.f32 0.0, %v1363
        %v1365 = vpop.f32.mrf.mxu0
        %v1366 = vadd.f32 0.0, %v1365
        %1367 = vmatprep.mubr.bf16.mxu0 0
        %1368 = vmatmul.mubr.bf16.gmra.mxu0 %v956
        %v1369 = vpop.f32.mrf.mxu0
        %v1370 = vadd.f32 0.0, %v1369
        %v1371 = vpop.f32.mrf.mxu0
        %v1372 = vadd.f32 0.0, %v1371
        %v1373 = vpop.f32.mrf.mxu0
        %v1374 = vadd.f32 0.0, %v1373
        %v1375 = vpop.f32.mrf.mxu0
        %v1376 = vadd.f32 0.0, %v1375
        %1377 = vdwg.mxu0
        %1378 = vmatprep.subr.bf16.mxu0 0
        %1379 = vmatpush1.bf16.msra.mxu0 0
        %1380 = vmatprep.subr.bf16.mxu0 0
        %1381 = vmatpush1.bf16.msra.mxu0 0
        %1382 = vmatprep.subr.bf16.mxu0 0
        %1383 = vmatpush1.bf16.msra.mxu0 0
        %1384 = vmatprep.subr.bf16.mxu0 %v1005
        %1385 = vmatpush1.bf16.msra.mxu0 %v1002
        %1386 = vmatprep.subr.bf16.mxu0 %v870
        %1387 = vmatpush1.bf16.msra.mxu0 %v869
        %1388 = vmatprep.subr.bf16.mxu0 %v854
        %1389 = vmatpush1.bf16.msra.mxu0 %v853
        %1390 = vmatprep.subr.bf16.mxu0 %v838
        %1391 = vmatpush1.bf16.msra.mxu0 %v837
        %1392 = vmatprep.subr.bf16.mxu0 %v822
        %1393 = vmatpush1.bf16.msra.mxu0 %v821
        %1394 = vmatprep.subr.bf16.mxu0 0
        %1395 = vmatpush2.bf16.msra.mxu0 0
        %1396 = vmatprep.subr.bf16.mxu0 0
        %1397 = vmatpush2.bf16.msra.mxu0 0
        %1398 = vmatprep.subr.bf16.mxu0 0
        %1399 = vmatpush2.bf16.msra.mxu0 0
        %1400 = vmatprep.subr.bf16.mxu0 0
        %1401 = vmatpush2.bf16.msra.mxu0 0
        %1402 = vmatprep.subr.bf16.mxu0 0
        %1403 = vmatpush2.bf16.msra.mxu0 0
        %1404 = vmatprep.subr.bf16.mxu0 0
        %1405 = vmatpush2.bf16.msra.mxu0 0
        %1406 = vmatprep.subr.bf16.mxu0 0
        %1407 = vmatpush2.bf16.msra.mxu0 0
        %1408 = vmatprep.subr.bf16.mxu0 0
        %1409 = vmatpush2.bf16.msra.mxu0 0
        %1410 = vmatprep.mubr.bf16.mxu0 0
        %1411 = vmatmul.mubr.bf16.gmra.mxu0 %v953
        %v1412 = vpop.f32.mrf.mxu0
        %v1413 = vadd.f32 0.0, %v1412
        %v1414 = vpop.f32.mrf.mxu0
        %v1415 = vadd.f32 0.0, %v1414
        %v1416 = vpop.f32.mrf.mxu0
        %v1417 = vadd.f32 0.0, %v1416
        %v1418 = vpop.f32.mrf.mxu0
        %v1419 = vadd.f32 0.0, %v1418
        %1420 = vmatprep.mubr.bf16.mxu0 0
        %1421 = vmatmul.mubr.bf16.gmra.mxu0 %v956
        %v1422 = vpop.f32.mrf.mxu0
        %v1423 = vadd.f32 0.0, %v1422
        %v1424 = vpop.f32.mrf.mxu0
        %v1425 = vadd.f32 0.0, %v1424
        %v1426 = vpop.f32.mrf.mxu0
        %v1427 = vadd.f32 0.0, %v1426
        %v1428 = vpop.f32.mrf.mxu0
        %v1429 = vadd.f32 0.0, %v1428
        %1430 = vdwg.mxu0
        %v1503 = vunpack.c.l.b16 %v374
        %v1504 = vunpack.c.h.b16 %v374
        %v1505 = vunpack.c.l.b16 %v375
        %v1506 = vunpack.c.h.b16 %v375
        %v1507 = vunpack.c.l.b16 %v376
        %v1508 = vunpack.c.h.b16 %v376
        %v1509 = vunpack.c.l.b16 %v377
        %v1510 = vunpack.c.h.b16 %v377
        %v1511 = vunpack.c.l.b16 %v378
        %v1512 = vunpack.c.h.b16 %v378
        %v1513 = vunpack.c.l.b16 %v379
        %v1514 = vunpack.c.h.b16 %v379
        %v1515 = vunpack.c.l.b16 %v380
        %v1516 = vunpack.c.h.b16 %v380
        %v1517 = vunpack.c.l.b16 %v381
        %v1518 = vunpack.c.h.b16 %v381
        %v1519 = vunpack.c.l.b16 %v382
        %v1520 = vunpack.c.h.b16 %v382
        %v1521 = vunpack.c.l.b16 %v383
        %v1522 = vunpack.c.h.b16 %v383
        %v1523 = vunpack.c.l.b16 %v384
        %v1524 = vunpack.c.h.b16 %v384
        %v1525 = vunpack.c.l.b16 %v385
        %v1526 = vunpack.c.h.b16 %v385
        %v1527 = vunpack.c.l.b16 %v386
        %v1528 = vunpack.c.h.b16 %v386
        %v1529 = vunpack.c.l.b16 %v387
        %v1530 = vunpack.c.h.b16 %v387
        %v1531 = vunpack.c.l.b16 %v388
        %v1532 = vunpack.c.h.b16 %v388
        %v1533 = vunpack.c.l.b16 %v389
        %v1534 = vunpack.c.h.b16 %v389
        %v1535 = vunpack.c.l.b16 %v390
        %v1536 = vunpack.c.h.b16 %v390
        %v1537 = vunpack.c.l.b16 %v391
        %v1538 = vunpack.c.h.b16 %v391
        %v1539 = vunpack.c.l.b16 %v392
        %v1540 = vunpack.c.h.b16 %v392
        %v1541 = vunpack.c.l.b16 %v393
        %v1542 = vunpack.c.h.b16 %v393
        %v1543 = vunpack.c.l.b16 %v394
        %v1544 = vunpack.c.h.b16 %v394
        %v1545 = vunpack.c.l.b16 %v395
        %v1546 = vunpack.c.h.b16 %v395
        %v1547 = vunpack.c.l.b16 %v396
        %v1548 = vunpack.c.h.b16 %v396
        %v1549 = vunpack.c.l.b16 %v397
        %v1550 = vunpack.c.h.b16 %v397
        %v1551 = vunpack.c.l.b16 %v398
        %v1552 = vunpack.c.h.b16 %v398
        %v1553 = vunpack.c.l.b16 %v399
        %v1554 = vunpack.c.h.b16 %v399
        %v1555 = vunpack.c.l.b16 %v400
        %v1556 = vunpack.c.h.b16 %v400
        %v1557 = vunpack.c.l.b16 %v401
        %v1558 = vunpack.c.h.b16 %v401
        %v1559 = vunpack.c.l.b16 %v402
        %v1560 = vunpack.c.h.b16 %v402
        %v1561 = vunpack.c.l.b16 %v403
        %v1562 = vunpack.c.h.b16 %v403
        %v1563 = vunpack.c.l.b16 %v404
        %v1564 = vunpack.c.h.b16 %v404
        %v1565 = vunpack.c.l.b16 %v405
        %v1566 = vunpack.c.h.b16 %v405
        %v1567 = vunpack.c.l.b16 %v406
        %v1568 = vunpack.c.h.b16 %v406
        %v1569 = vunpack.c.l.b16 %v407
        %v1570 = vunpack.c.h.b16 %v407
        %v1571 = vunpack.c.l.b16 %v408
        %v1572 = vunpack.c.h.b16 %v408
        %v1573 = vunpack.c.l.b16 %v409
        %v1574 = vunpack.c.h.b16 %v409
        %v1575 = vunpack.c.l.b16 %v410
        %v1576 = vunpack.c.h.b16 %v410
        %v1577 = vunpack.c.l.b16 %v411
        %v1578 = vunpack.c.h.b16 %v411
        %v1579 = vunpack.c.l.b16 %v412
        %v1580 = vunpack.c.h.b16 %v412
        %v1581 = vunpack.c.l.b16 %v413
        %v1582 = vunpack.c.h.b16 %v413
        %v1583 = vunpack.c.l.b16 %v414
        %v1584 = vunpack.c.h.b16 %v414
        %v1585 = vunpack.c.l.b16 %v415
        %v1586 = vunpack.c.h.b16 %v415
        %v1587 = vunpack.c.l.b16 %v416
        %v1588 = vunpack.c.h.b16 %v416
        %v1589 = vunpack.c.l.b16 %v417
        %v1590 = vunpack.c.h.b16 %v417
        %v1591 = vunpack.c.l.b16 %v418
        %v1592 = vunpack.c.h.b16 %v418
        %v1593 = vunpack.c.l.b16 %v419
        %v1594 = vunpack.c.h.b16 %v419
        %v1595 = vunpack.c.l.b16 %v420
        %v1596 = vunpack.c.h.b16 %v420
        %v1597 = vunpack.c.l.b16 %v421
        %v1598 = vunpack.c.h.b16 %v421
        %v1599 = vunpack.c.l.b16 %v422
        %v1600 = vunpack.c.h.b16 %v422
        %v1601 = vunpack.c.l.b16 %v423
        %v1602 = vunpack.c.h.b16 %v423
        %v1603 = vunpack.c.l.b16 %v424
        %v1604 = vunpack.c.h.b16 %v424
        %v1605 = vunpack.c.l.b16 %v425
        %v1606 = vunpack.c.h.b16 %v425
        %v1607 = vunpack.c.l.b16 %v426
        %v1608 = vunpack.c.h.b16 %v426
        %v1609 = vunpack.c.l.b16 %v427
        %v1610 = vunpack.c.h.b16 %v427
        %v1611 = vunpack.c.l.b16 %v428
        %v1612 = vunpack.c.h.b16 %v428
        %v1613 = vunpack.c.l.b16 %v429
        %v1614 = vunpack.c.h.b16 %v429
        %v1615 = vunpack.c.l.b16 %v430
        %v1616 = vunpack.c.h.b16 %v430
        %v1617 = vunpack.c.l.b16 %v431
        %v1618 = vunpack.c.h.b16 %v431
        %v1619 = vunpack.c.l.b16 %v432
        %v1620 = vunpack.c.h.b16 %v432
        %v1621 = vunpack.c.l.b16 %v433
        %v1622 = vunpack.c.h.b16 %v433
        %v1623 = vunpack.c.l.b16 %v434
        %v1624 = vunpack.c.h.b16 %v434
        %v1625 = vunpack.c.l.b16 %v435
        %v1626 = vunpack.c.h.b16 %v435
        %v1627 = vunpack.c.l.b16 %v436
        %v1628 = vunpack.c.h.b16 %v436
        %v1629 = vunpack.c.l.b16 %v437
        %v1630 = vunpack.c.h.b16 %v437
        %v1631 = vunpack.c.l.b16 %v438
        %v1632 = vunpack.c.h.b16 %v438
        %v1633 = vunpack.c.l.b16 %v439
        %v1634 = vunpack.c.h.b16 %v439
        %v1635 = vunpack.c.l.b16 %v440
        %v1636 = vunpack.c.h.b16 %v440
        %v1637 = vunpack.c.l.b16 %v441
        %v1638 = vunpack.c.h.b16 %v441
        %v1639 = vunpack.c.l.b16 %v442
        %v1640 = vunpack.c.h.b16 %v442
        %v1641 = vunpack.c.l.b16 %v443
        %v1642 = vunpack.c.h.b16 %v443
        %v1643 = vunpack.c.l.b16 %v444
        %v1644 = vunpack.c.h.b16 %v444
        %v1645 = vunpack.c.l.b16 %v445
        %v1646 = vunpack.c.h.b16 %v445
        %v1647 = vpack.c.b16 %v1519, %v1503
        %v1648 = vpack.c.b16 %v1520, %v1504
        %v1649 = vpack.c.b16 %v1521, %v1505
        %v1650 = vpack.c.b16 %v1522, %v1506
        %v1651 = vpack.c.b16 %v1523, %v1507
        %v1652 = vpack.c.b16 %v1524, %v1508
        %v1653 = vpack.c.b16 %v1525, %v1509
        %v1654 = vpack.c.b16 %v1526, %v1510
        %v1655 = vpack.c.b16 %v1527, %v1511
        %v1656 = vpack.c.b16 %v1528, %v1512
        %v1657 = vpack.c.b16 %v1529, %v1513
        %v1658 = vpack.c.b16 %v1530, %v1514
        %v1659 = vpack.c.b16 %v1531, %v1515
        %v1660 = vpack.c.b16 %v1532, %v1516
        %v1661 = vpack.c.b16 %v1533, %v1517
        %v1662 = vpack.c.b16 %v1534, %v1518
        %v1663 = vpack.c.b16 %v1551, %v1535
        %v1664 = vpack.c.b16 %v1552, %v1536
        %v1665 = vpack.c.b16 %v1553, %v1537
        %v1666 = vpack.c.b16 %v1554, %v1538
        %v1667 = vpack.c.b16 %v1555, %v1539
        %v1668 = vpack.c.b16 %v1556, %v1540
        %v1669 = vpack.c.b16 %v1557, %v1541
        %v1670 = vpack.c.b16 %v1558, %v1542
        %v1671 = vpack.c.b16 %v1559, %v1543
        %v1672 = vpack.c.b16 %v1560, %v1544
        %v1673 = vpack.c.b16 %v1561, %v1545
        %v1674 = vpack.c.b16 %v1562, %v1546
        %v1675 = vpack.c.b16 %v1563, %v1547
        %v1676 = vpack.c.b16 %v1564, %v1548
        %v1677 = vpack.c.b16 %v1565, %v1549
        %v1678 = vpack.c.b16 %v1566, %v1550
        %v1679 = vpack.c.b16 %v1583, %v1567
        %v1680 = vpack.c.b16 %v1584, %v1568
        %v1681 = vpack.c.b16 %v1585, %v1569
        %v1682 = vpack.c.b16 %v1586, %v1570
        %v1683 = vpack.c.b16 %v1587, %v1571
        %v1684 = vpack.c.b16 %v1588, %v1572
        %v1685 = vpack.c.b16 %v1589, %v1573
        %v1686 = vpack.c.b16 %v1590, %v1574
        %v1687 = vpack.c.b16 %v1591, %v1575
        %v1688 = vpack.c.b16 %v1592, %v1576
        %v1689 = vpack.c.b16 %v1593, %v1577
        %v1690 = vpack.c.b16 %v1594, %v1578
        %v1691 = vpack.c.b16 %v1595, %v1579
        %v1692 = vpack.c.b16 %v1596, %v1580
        %v1693 = vpack.c.b16 %v1597, %v1581
        %v1694 = vpack.c.b16 %v1598, %v1582
        %v1695 = vpack.c.b16 %v1615, %v1599
        %v1696 = vpack.c.b16 %v1616, %v1600
        %v1697 = vpack.c.b16 %v1617, %v1601
        %v1698 = vpack.c.b16 %v1618, %v1602
        %v1699 = vpack.c.b16 %v1619, %v1603
        %v1700 = vpack.c.b16 %v1620, %v1604
        %v1701 = vpack.c.b16 %v1621, %v1605
        %v1702 = vpack.c.b16 %v1622, %v1606
        %v1703 = vpack.c.b16 %v1623, %v1607
        %v1704 = vpack.c.b16 %v1624, %v1608
        %v1705 = vpack.c.b16 %v1625, %v1609
        %v1706 = vpack.c.b16 %v1626, %v1610
        %v1707 = vpack.c.b16 %v1627, %v1611
        %v1708 = vpack.c.b16 %v1628, %v1612
        %v1709 = vpack.c.b16 %v1629, %v1613
        %v1710 = vpack.c.b16 %v1630, %v1614
        %v1711 = vpack.c.b16 %v1631, %v1631
        %v1712 = vpack.c.b16 %v1632, %v1632
        %v1713 = vpack.c.b16 %v1633, %v1633
        %v1714 = vpack.c.b16 %v1634, %v1634
        %v1715 = vpack.c.b16 %v1635, %v1635
        %v1716 = vpack.c.b16 %v1636, %v1636
        %v1717 = vpack.c.b16 %v1637, %v1637
        %v1718 = vpack.c.b16 %v1638, %v1638
        %v1719 = vpack.c.b16 %v1639, %v1639
        %v1720 = vpack.c.b16 %v1640, %v1640
        %v1721 = vpack.c.b16 %v1641, %v1641
        %v1722 = vpack.c.b16 %v1642, %v1642
        %v1723 = vpack.c.b16 %v1643, %v1643
        %v1724 = vpack.c.b16 %v1644, %v1644
        %v1725 = vpack.c.b16 %v1645, %v1645
        %v1726 = vpack.c.b16 %v1646, %v1646
        %v1792 = vsel %vm951, %v372, 0
        %v1795 = vsel %vm951, %v373, 0
        %v1798 = vsel %vm958, %v1711, 0
        %v1801 = vsel %vm958, %v1712, 0
        %v1804 = vsel %vm958, %v1713, 0
        %v1807 = vsel %vm958, %v1714, 0
        %v1810 = vsel %vm958, %v1715, 0
        %v1813 = vsel %vm958, %v1716, 0
        %v1816 = vsel %vm958, %v1717, 0
        %v1819 = vsel %vm958, %v1718, 0
        %v1822 = vsel %vm958, %v1719, 0
        %v1825 = vsel %vm958, %v1720, 0
        %v1828 = vsel %vm958, %v1721, 0
        %v1831 = vsel %vm958, %v1722, 0
        %v1834 = vsel %vm958, %v1723, 0
        %v1837 = vsel %vm958, %v1724, 0
        %v1840 = vsel %vm958, %v1725, 0
        %v1843 = vsel %vm958, %v1726, 0
        %1845 = vmatprep.subr.bf16.mxu0 0
        %1846 = vmatpush1.bf16.msra.mxu0 0
        %1847 = vmatprep.subr.bf16.mxu0 0
        %1848 = vmatpush1.bf16.msra.mxu0 0
        %1849 = vmatprep.subr.bf16.mxu0 0
        %1850 = vmatpush1.bf16.msra.mxu0 0
        %1851 = vmatprep.subr.bf16.mxu0 %v1801
        %1852 = vmatpush1.bf16.msra.mxu0 %v1798
        %1853 = vmatprep.subr.bf16.mxu0 %v1696
        %1854 = vmatpush1.bf16.msra.mxu0 %v1695
        %1855 = vmatprep.subr.bf16.mxu0 %v1680
        %1856 = vmatpush1.bf16.msra.mxu0 %v1679
        %1857 = vmatprep.subr.bf16.mxu0 %v1664
        %1858 = vmatpush1.bf16.msra.mxu0 %v1663
        %1859 = vmatprep.subr.bf16.mxu0 %v1648
        %1860 = vmatpush1.bf16.msra.mxu0 %v1647
        %1861 = vmatprep.subr.bf16.mxu0 0
        %1862 = vmatpush2.bf16.msra.mxu0 0
        %1863 = vmatprep.subr.bf16.mxu0 0
        %1864 = vmatpush2.bf16.msra.mxu0 0
        %1865 = vmatprep.subr.bf16.mxu0 0
        %1866 = vmatpush2.bf16.msra.mxu0 0
        %1867 = vmatprep.subr.bf16.mxu0 0
        %1868 = vmatpush2.bf16.msra.mxu0 0
        %1869 = vmatprep.subr.bf16.mxu0 0
        %1870 = vmatpush2.bf16.msra.mxu0 0
        %1871 = vmatprep.subr.bf16.mxu0 0
        %1872 = vmatpush2.bf16.msra.mxu0 0
        %1873 = vmatprep.subr.bf16.mxu0 0
        %1874 = vmatpush2.bf16.msra.mxu0 0
        %1875 = vmatprep.subr.bf16.mxu0 0
        %1876 = vmatpush2.bf16.msra.mxu0 0
        %1877 = vmatprep.mubr.bf16.mxu0 0
        %1878 = vmatmul.mubr.bf16.gmra.mxu0 %v1792
        %v1879 = vpop.f32.mrf.mxu0
        %v1880 = vadd.f32 %v1042, %v1879
        %v1881 = vpop.f32.mrf.mxu0
        %v1882 = vadd.f32 %v1044, %v1881
        %v1883 = vpop.f32.mrf.mxu0
        %v1884 = vadd.f32 %v1046, %v1883
        %v1885 = vpop.f32.mrf.mxu0
        %v1886 = vadd.f32 %v1048, %v1885
        %1887 = vmatprep.mubr.bf16.mxu0 0
        %1888 = vmatmul.mubr.bf16.gmra.mxu0 %v1795
        %v1889 = vpop.f32.mrf.mxu0
        %v1890 = vadd.f32 %v1052, %v1889
        %v1891 = vpop.f32.mrf.mxu0
        %v1892 = vadd.f32 %v1054, %v1891
        %v1893 = vpop.f32.mrf.mxu0
        %v1894 = vadd.f32 %v1056, %v1893
        %v1895 = vpop.f32.mrf.mxu0
        %v1896 = vadd.f32 %v1058, %v1895
        %1897 = vdwg.mxu0
        %1898 = vmatprep.subr.bf16.mxu0 0
        %1899 = vmatpush1.bf16.msra.mxu0 0
        %1900 = vmatprep.subr.bf16.mxu0 0
        %1901 = vmatpush1.bf16.msra.mxu0 0
        %1902 = vmatprep.subr.bf16.mxu0 0
        %1903 = vmatpush1.bf16.msra.mxu0 0
        %1904 = vmatprep.subr.bf16.mxu0 %v1807
        %1905 = vmatpush1.bf16.msra.mxu0 %v1804
        %1906 = vmatprep.subr.bf16.mxu0 %v1698
        %1907 = vmatpush1.bf16.msra.mxu0 %v1697
        %1908 = vmatprep.subr.bf16.mxu0 %v1682
        %1909 = vmatpush1.bf16.msra.mxu0 %v1681
        %1910 = vmatprep.subr.bf16.mxu0 %v1666
        %1911 = vmatpush1.bf16.msra.mxu0 %v1665
        %1912 = vmatprep.subr.bf16.mxu0 %v1650
        %1913 = vmatpush1.bf16.msra.mxu0 %v1649
        %1914 = vmatprep.subr.bf16.mxu0 0
        %1915 = vmatpush2.bf16.msra.mxu0 0
        %1916 = vmatprep.subr.bf16.mxu0 0
        %1917 = vmatpush2.bf16.msra.mxu0 0
        %1918 = vmatprep.subr.bf16.mxu0 0
        %1919 = vmatpush2.bf16.msra.mxu0 0
        %1920 = vmatprep.subr.bf16.mxu0 0
        %1921 = vmatpush2.bf16.msra.mxu0 0
        %1922 = vmatprep.subr.bf16.mxu0 0
        %1923 = vmatpush2.bf16.msra.mxu0 0
        %1924 = vmatprep.subr.bf16.mxu0 0
        %1925 = vmatpush2.bf16.msra.mxu0 0
        %1926 = vmatprep.subr.bf16.mxu0 0
        %1927 = vmatpush2.bf16.msra.mxu0 0
        %1928 = vmatprep.subr.bf16.mxu0 0
        %1929 = vmatpush2.bf16.msra.mxu0 0
        %1930 = vmatprep.mubr.bf16.mxu0 0
        %1931 = vmatmul.mubr.bf16.gmra.mxu0 %v1792
        %v1932 = vpop.f32.mrf.mxu0
        %v1933 = vadd.f32 %v1095, %v1932
        %v1934 = vpop.f32.mrf.mxu0
        %v1935 = vadd.f32 %v1097, %v1934
        %v1936 = vpop.f32.mrf.mxu0
        %v1937 = vadd.f32 %v1099, %v1936
        %v1938 = vpop.f32.mrf.mxu0
        %v1939 = vadd.f32 %v1101, %v1938
        %1940 = vmatprep.mubr.bf16.mxu0 0
        %1941 = vmatmul.mubr.bf16.gmra.mxu0 %v1795
        %v1942 = vpop.f32.mrf.mxu0
        %v1943 = vadd.f32 %v1105, %v1942
        %v1944 = vpop.f32.mrf.mxu0
        %v1945 = vadd.f32 %v1107, %v1944
        %v1946 = vpop.f32.mrf.mxu0
        %v1947 = vadd.f32 %v1109, %v1946
        %v1948 = vpop.f32.mrf.mxu0
        %v1949 = vadd.f32 %v1111, %v1948
        %1950 = vdwg.mxu0
        %1951 = vmatprep.subr.bf16.mxu0 0
        %1952 = vmatpush1.bf16.msra.mxu0 0
        %1953 = vmatprep.subr.bf16.mxu0 0
        %1954 = vmatpush1.bf16.msra.mxu0 0
        %1955 = vmatprep.subr.bf16.mxu0 0
        %1956 = vmatpush1.bf16.msra.mxu0 0
        %1957 = vmatprep.subr.bf16.mxu0 %v1813
        %1958 = vmatpush1.bf16.msra.mxu0 %v1810
        %1959 = vmatprep.subr.bf16.mxu0 %v1700
        %1960 = vmatpush1.bf16.msra.mxu0 %v1699
        %1961 = vmatprep.subr.bf16.mxu0 %v1684
        %1962 = vmatpush1.bf16.msra.mxu0 %v1683
        %1963 = vmatprep.subr.bf16.mxu0 %v1668
        %1964 = vmatpush1.bf16.msra.mxu0 %v1667
        %1965 = vmatprep.subr.bf16.mxu0 %v1652
        %1966 = vmatpush1.bf16.msra.mxu0 %v1651
        %1967 = vmatprep.subr.bf16.mxu0 0
        %1968 = vmatpush2.bf16.msra.mxu0 0
        %1969 = vmatprep.subr.bf16.mxu0 0
        %1970 = vmatpush2.bf16.msra.mxu0 0
        %1971 = vmatprep.subr.bf16.mxu0 0
        %1972 = vmatpush2.bf16.msra.mxu0 0
        %1973 = vmatprep.subr.bf16.mxu0 0
        %1974 = vmatpush2.bf16.msra.mxu0 0
        %1975 = vmatprep.subr.bf16.mxu0 0
        %1976 = vmatpush2.bf16.msra.mxu0 0
        %1977 = vmatprep.subr.bf16.mxu0 0
        %1978 = vmatpush2.bf16.msra.mxu0 0
        %1979 = vmatprep.subr.bf16.mxu0 0
        %1980 = vmatpush2.bf16.msra.mxu0 0
        %1981 = vmatprep.subr.bf16.mxu0 0
        %1982 = vmatpush2.bf16.msra.mxu0 0
        %1983 = vmatprep.mubr.bf16.mxu0 0
        %1984 = vmatmul.mubr.bf16.gmra.mxu0 %v1792
        %v1985 = vpop.f32.mrf.mxu0
        %v1986 = vadd.f32 %v1148, %v1985
        %v1987 = vpop.f32.mrf.mxu0
        %v1988 = vadd.f32 %v1150, %v1987
        %v1989 = vpop.f32.mrf.mxu0
        %v1990 = vadd.f32 %v1152, %v1989
        %v1991 = vpop.f32.mrf.mxu0
        %v1992 = vadd.f32 %v1154, %v1991
        %1993 = vmatprep.mubr.bf16.mxu0 0
        %1994 = vmatmul.mubr.bf16.gmra.mxu0 %v1795
        %v1995 = vpop.f32.mrf.mxu0
        %v1996 = vadd.f32 %v1158, %v1995
        %v1997 = vpop.f32.mrf.mxu0
        %v1998 = vadd.f32 %v1160, %v1997
        %v1999 = vpop.f32.mrf.mxu0
        %v2000 = vadd.f32 %v1162, %v1999
        %v2001 = vpop.f32.mrf.mxu0
        %v2002 = vadd.f32 %v1164, %v2001
        %2003 = vdwg.mxu0
        %2004 = vmatprep.subr.bf16.mxu0 0
        %2005 = vmatpush1.bf16.msra.mxu0 0
        %2006 = vmatprep.subr.bf16.mxu0 0
        %2007 = vmatpush1.bf16.msra.mxu0 0
        %2008 = vmatprep.subr.bf16.mxu0 0
        %2009 = vmatpush1.bf16.msra.mxu0 0
        %2010 = vmatprep.subr.bf16.mxu0 %v1819
        %2011 = vmatpush1.bf16.msra.mxu0 %v1816
        %2012 = vmatprep.subr.bf16.mxu0 %v1702
        %2013 = vmatpush1.bf16.msra.mxu0 %v1701
        %2014 = vmatprep.subr.bf16.mxu0 %v1686
        %2015 = vmatpush1.bf16.msra.mxu0 %v1685
        %2016 = vmatprep.subr.bf16.mxu0 %v1670
        %2017 = vmatpush1.bf16.msra.mxu0 %v1669
        %2018 = vmatprep.subr.bf16.mxu0 %v1654
        %2019 = vmatpush1.bf16.msra.mxu0 %v1653
        %2020 = vmatprep.subr.bf16.mxu0 0
        %2021 = vmatpush2.bf16.msra.mxu0 0
        %2022 = vmatprep.subr.bf16.mxu0 0
        %2023 = vmatpush2.bf16.msra.mxu0 0
        %2024 = vmatprep.subr.bf16.mxu0 0
        %2025 = vmatpush2.bf16.msra.mxu0 0
        %2026 = vmatprep.subr.bf16.mxu0 0
        %2027 = vmatpush2.bf16.msra.mxu0 0
        %2028 = vmatprep.subr.bf16.mxu0 0
        %2029 = vmatpush2.bf16.msra.mxu0 0
        %2030 = vmatprep.subr.bf16.mxu0 0
        %2031 = vmatpush2.bf16.msra.mxu0 0
        %2032 = vmatprep.subr.bf16.mxu0 0
        %2033 = vmatpush2.bf16.msra.mxu0 0
        %2034 = vmatprep.subr.bf16.mxu0 0
        %2035 = vmatpush2.bf16.msra.mxu0 0
        %2036 = vmatprep.mubr.bf16.mxu0 0
        %2037 = vmatmul.mubr.bf16.gmra.mxu0 %v1792
        %v2038 = vpop.f32.mrf.mxu0
        %v2039 = vadd.f32 %v1201, %v2038
        %v2040 = vpop.f32.mrf.mxu0
        %v2041 = vadd.f32 %v1203, %v2040
        %v2042 = vpop.f32.mrf.mxu0
        %v2043 = vadd.f32 %v1205, %v2042
        %v2044 = vpop.f32.mrf.mxu0
        %v2045 = vadd.f32 %v1207, %v2044
        %2046 = vmatprep.mubr.bf16.mxu0 0
        %2047 = vmatmul.mubr.bf16.gmra.mxu0 %v1795
        %v2048 = vpop.f32.mrf.mxu0
        %v2049 = vadd.f32 %v1211, %v2048
        %v2050 = vpop.f32.mrf.mxu0
        %v2051 = vadd.f32 %v1213, %v2050
        %v2052 = vpop.f32.mrf.mxu0
        %v2053 = vadd.f32 %v1215, %v2052
        %v2054 = vpop.f32.mrf.mxu0
        %v2055 = vadd.f32 %v1217, %v2054
        %2056 = vdwg.mxu0
        %2057 = vmatprep.subr.bf16.mxu0 0
        %2058 = vmatpush1.bf16.msra.mxu0 0
        %2059 = vmatprep.subr.bf16.mxu0 0
        %2060 = vmatpush1.bf16.msra.mxu0 0
        %2061 = vmatprep.subr.bf16.mxu0 0
        %2062 = vmatpush1.bf16.msra.mxu0 0
        %2063 = vmatprep.subr.bf16.mxu0 %v1825
        %2064 = vmatpush1.bf16.msra.mxu0 %v1822
        %2065 = vmatprep.subr.bf16.mxu0 %v1704
        %2066 = vmatpush1.bf16.msra.mxu0 %v1703
        %2067 = vmatprep.subr.bf16.mxu0 %v1688
        %2068 = vmatpush1.bf16.msra.mxu0 %v1687
        %2069 = vmatprep.subr.bf16.mxu0 %v1672
        %2070 = vmatpush1.bf16.msra.mxu0 %v1671
        %2071 = vmatprep.subr.bf16.mxu0 %v1656
        %2072 = vmatpush1.bf16.msra.mxu0 %v1655
        %2073 = vmatprep.subr.bf16.mxu0 0
        %2074 = vmatpush2.bf16.msra.mxu0 0
        %2075 = vmatprep.subr.bf16.mxu0 0
        %2076 = vmatpush2.bf16.msra.mxu0 0
        %2077 = vmatprep.subr.bf16.mxu0 0
        %2078 = vmatpush2.bf16.msra.mxu0 0
        %2079 = vmatprep.subr.bf16.mxu0 0
        %2080 = vmatpush2.bf16.msra.mxu0 0
        %2081 = vmatprep.subr.bf16.mxu0 0
        %2082 = vmatpush2.bf16.msra.mxu0 0
        %2083 = vmatprep.subr.bf16.mxu0 0
        %2084 = vmatpush2.bf16.msra.mxu0 0
        %2085 = vmatprep.subr.bf16.mxu0 0
        %2086 = vmatpush2.bf16.msra.mxu0 0
        %2087 = vmatprep.subr.bf16.mxu0 0
        %2088 = vmatpush2.bf16.msra.mxu0 0
        %2089 = vmatprep.mubr.bf16.mxu0 0
        %2090 = vmatmul.mubr.bf16.gmra.mxu0 %v1792
        %v2091 = vpop.f32.mrf.mxu0
        %v2092 = vadd.f32 %v1254, %v2091
        %v2093 = vpop.f32.mrf.mxu0
        %v2094 = vadd.f32 %v1256, %v2093
        %v2095 = vpop.f32.mrf.mxu0
        %v2096 = vadd.f32 %v1258, %v2095
        %v2097 = vpop.f32.mrf.mxu0
        %v2098 = vadd.f32 %v1260, %v2097
        %2099 = vmatprep.mubr.bf16.mxu0 0
        %2100 = vmatmul.mubr.bf16.gmra.mxu0 %v1795
        %v2101 = vpop.f32.mrf.mxu0
        %v2102 = vadd.f32 %v1264, %v2101
        %v2103 = vpop.f32.mrf.mxu0
        %v2104 = vadd.f32 %v1266, %v2103
        %v2105 = vpop.f32.mrf.mxu0
        %v2106 = vadd.f32 %v1268, %v2105
        %v2107 = vpop.f32.mrf.mxu0
        %v2108 = vadd.f32 %v1270, %v2107
        %2109 = vdwg.mxu0
        %2110 = vmatprep.subr.bf16.mxu0 0
        %2111 = vmatpush1.bf16.msra.mxu0 0
        %2112 = vmatprep.subr.bf16.mxu0 0
        %2113 = vmatpush1.bf16.msra.mxu0 0
        %2114 = vmatprep.subr.bf16.mxu0 0
        %2115 = vmatpush1.bf16.msra.mxu0 0
        %2116 = vmatprep.subr.bf16.mxu0 %v1831
        %2117 = vmatpush1.bf16.msra.mxu0 %v1828
        %2118 = vmatprep.subr.bf16.mxu0 %v1706
        %2119 = vmatpush1.bf16.msra.mxu0 %v1705
        %2120 = vmatprep.subr.bf16.mxu0 %v1690
        %2121 = vmatpush1.bf16.msra.mxu0 %v1689
        %2122 = vmatprep.subr.bf16.mxu0 %v1674
        %2123 = vmatpush1.bf16.msra.mxu0 %v1673
        %2124 = vmatprep.subr.bf16.mxu0 %v1658
        %2125 = vmatpush1.bf16.msra.mxu0 %v1657
        %2126 = vmatprep.subr.bf16.mxu0 0
        %2127 = vmatpush2.bf16.msra.mxu0 0
        %2128 = vmatprep.subr.bf16.mxu0 0
        %2129 = vmatpush2.bf16.msra.mxu0 0
        %2130 = vmatprep.subr.bf16.mxu0 0
        %2131 = vmatpush2.bf16.msra.mxu0 0
        %2132 = vmatprep.subr.bf16.mxu0 0
        %2133 = vmatpush2.bf16.msra.mxu0 0
        %2134 = vmatprep.subr.bf16.mxu0 0
        %2135 = vmatpush2.bf16.msra.mxu0 0
        %2136 = vmatprep.subr.bf16.mxu0 0
        %2137 = vmatpush2.bf16.msra.mxu0 0
        %2138 = vmatprep.subr.bf16.mxu0 0
        %2139 = vmatpush2.bf16.msra.mxu0 0
        %2140 = vmatprep.subr.bf16.mxu0 0
        %2141 = vmatpush2.bf16.msra.mxu0 0
        %2142 = vmatprep.mubr.bf16.mxu0 0
        %2143 = vmatmul.mubr.bf16.gmra.mxu0 %v1792
        %v2144 = vpop.f32.mrf.mxu0
        %v2145 = vadd.f32 %v1307, %v2144
        %v2146 = vpop.f32.mrf.mxu0
        %v2147 = vadd.f32 %v1309, %v2146
        %v2148 = vpop.f32.mrf.mxu0
        %v2149 = vadd.f32 %v1311, %v2148
        %v2150 = vpop.f32.mrf.mxu0
        %v2151 = vadd.f32 %v1313, %v2150
        %2152 = vmatprep.mubr.bf16.mxu0 0
        %2153 = vmatmul.mubr.bf16.gmra.mxu0 %v1795
        %v2154 = vpop.f32.mrf.mxu0
        %v2155 = vadd.f32 %v1317, %v2154
        %v2156 = vpop.f32.mrf.mxu0
        %v2157 = vadd.f32 %v1319, %v2156
        %v2158 = vpop.f32.mrf.mxu0
        %v2159 = vadd.f32 %v1321, %v2158
        %v2160 = vpop.f32.mrf.mxu0
        %v2161 = vadd.f32 %v1323, %v2160
        %2162 = vdwg.mxu0
        %2163 = vmatprep.subr.bf16.mxu0 0
        %2164 = vmatpush1.bf16.msra.mxu0 0
        %2165 = vmatprep.subr.bf16.mxu0 0
        %2166 = vmatpush1.bf16.msra.mxu0 0
        %2167 = vmatprep.subr.bf16.mxu0 0
        %2168 = vmatpush1.bf16.msra.mxu0 0
        %2169 = vmatprep.subr.bf16.mxu0 %v1837
        %2170 = vmatpush1.bf16.msra.mxu0 %v1834
        %2171 = vmatprep.subr.bf16.mxu0 %v1708
        %2172 = vmatpush1.bf16.msra.mxu0 %v1707
        %2173 = vmatprep.subr.bf16.mxu0 %v1692
        %2174 = vmatpush1.bf16.msra.mxu0 %v1691
        %2175 = vmatprep.subr.bf16.mxu0 %v1676
        %2176 = vmatpush1.bf16.msra.mxu0 %v1675
        %2177 = vmatprep.subr.bf16.mxu0 %v1660
        %2178 = vmatpush1.bf16.msra.mxu0 %v1659
        %2179 = vmatprep.subr.bf16.mxu0 0
        %2180 = vmatpush2.bf16.msra.mxu0 0
        %2181 = vmatprep.subr.bf16.mxu0 0
        %2182 = vmatpush2.bf16.msra.mxu0 0
        %2183 = vmatprep.subr.bf16.mxu0 0
        %2184 = vmatpush2.bf16.msra.mxu0 0
        %2185 = vmatprep.subr.bf16.mxu0 0
        %2186 = vmatpush2.bf16.msra.mxu0 0
        %2187 = vmatprep.subr.bf16.mxu0 0
        %2188 = vmatpush2.bf16.msra.mxu0 0
        %2189 = vmatprep.subr.bf16.mxu0 0
        %2190 = vmatpush2.bf16.msra.mxu0 0
        %2191 = vmatprep.subr.bf16.mxu0 0
        %2192 = vmatpush2.bf16.msra.mxu0 0
        %2193 = vmatprep.subr.bf16.mxu0 0
        %2194 = vmatpush2.bf16.msra.mxu0 0
        %2195 = vmatprep.mubr.bf16.mxu0 0
        %2196 = vmatmul.mubr.bf16.gmra.mxu0 %v1792
        %v2197 = vpop.f32.mrf.mxu0
        %v2198 = vadd.f32 %v1360, %v2197
        %v2199 = vpop.f32.mrf.mxu0
        %v2200 = vadd.f32 %v1362, %v2199
        %v2201 = vpop.f32.mrf.mxu0
        %v2202 = vadd.f32 %v1364, %v2201
        %v2203 = vpop.f32.mrf.mxu0
        %v2204 = vadd.f32 %v1366, %v2203
        %2205 = vmatprep.mubr.bf16.mxu0 0
        %2206 = vmatmul.mubr.bf16.gmra.mxu0 %v1795
        %v2207 = vpop.f32.mrf.mxu0
        %v2208 = vadd.f32 %v1370, %v2207
        %v2209 = vpop.f32.mrf.mxu0
        %v2210 = vadd.f32 %v1372, %v2209
        %v2211 = vpop.f32.mrf.mxu0
        %v2212 = vadd.f32 %v1374, %v2211
        %v2213 = vpop.f32.mrf.mxu0
        %v2214 = vadd.f32 %v1376, %v2213
        %2215 = vdwg.mxu0
        %2216 = vmatprep.subr.bf16.mxu0 0
        %2217 = vmatpush1.bf16.msra.mxu0 0
        %2218 = vmatprep.subr.bf16.mxu0 0
        %2219 = vmatpush1.bf16.msra.mxu0 0
        %2220 = vmatprep.subr.bf16.mxu0 0
        %2221 = vmatpush1.bf16.msra.mxu0 0
        %2222 = vmatprep.subr.bf16.mxu0 %v1843
        %2223 = vmatpush1.bf16.msra.mxu0 %v1840
        %2224 = vmatprep.subr.bf16.mxu0 %v1710
        %2225 = vmatpush1.bf16.msra.mxu0 %v1709
        %2226 = vmatprep.subr.bf16.mxu0 %v1694
        %2227 = vmatpush1.bf16.msra.mxu0 %v1693
        %2228 = vmatprep.subr.bf16.mxu0 %v1678
        %2229 = vmatpush1.bf16.msra.mxu0 %v1677
        %2230 = vmatprep.subr.bf16.mxu0 %v1662
        %2231 = vmatpush1.bf16.msra.mxu0 %v1661
        %2232 = vmatprep.subr.bf16.mxu0 0
        %2233 = vmatpush2.bf16.msra.mxu0 0
        %2234 = vmatprep.subr.bf16.mxu0 0
        %2235 = vmatpush2.bf16.msra.mxu0 0
        %2236 = vmatprep.subr.bf16.mxu0 0
        %2237 = vmatpush2.bf16.msra.mxu0 0
        %2238 = vmatprep.subr.bf16.mxu0 0
        %2239 = vmatpush2.bf16.msra.mxu0 0
        %2240 = vmatprep.subr.bf16.mxu0 0
        %2241 = vmatpush2.bf16.msra.mxu0 0
        %2242 = vmatprep.subr.bf16.mxu0 0
        %2243 = vmatpush2.bf16.msra.mxu0 0
        %2244 = vmatprep.subr.bf16.mxu0 0
        %2245 = vmatpush2.bf16.msra.mxu0 0
        %2246 = vmatprep.subr.bf16.mxu0 0
        %2247 = vmatpush2.bf16.msra.mxu0 0
        %2248 = vmatprep.mubr.bf16.mxu0 0
        %2249 = vmatmul.mubr.bf16.gmra.mxu0 %v1792
        %v2250 = vpop.f32.mrf.mxu0
        %v2251 = vadd.f32 %v1413, %v2250
        %v2252 = vpop.f32.mrf.mxu0
        %v2253 = vadd.f32 %v1415, %v2252
        %v2254 = vpop.f32.mrf.mxu0
        %v2255 = vadd.f32 %v1417, %v2254
        %v2256 = vpop.f32.mrf.mxu0
        %v2257 = vadd.f32 %v1419, %v2256
        %2258 = vmatprep.mubr.bf16.mxu0 0
        %2259 = vmatmul.mubr.bf16.gmra.mxu0 %v1795
        %v2260 = vpop.f32.mrf.mxu0
        %v2261 = vadd.f32 %v1423, %v2260
        %v2262 = vpop.f32.mrf.mxu0
        %v2263 = vadd.f32 %v1425, %v2262
        %v2264 = vpop.f32.mrf.mxu0
        %v2265 = vadd.f32 %v1427, %v2264
        %v2266 = vpop.f32.mrf.mxu0
        %v2267 = vadd.f32 %v1429, %v2266
        %2268 = vdwg.mxu0
        %s2269 = scalar_lea.vmem %s1, 32
        %v2270 = vld [vmem:[%s2269] sm:$0xf]
        %v2271 = vld [vmem:[%s2269 + $0x4] sm:$0xf]
        %v2272 = vld [vmem:[%s2269 + $0x8] sm:$0xf]
        %v2273 = vld [vmem:[%s2269 + $0xc] sm:$0xf]
        %v2278 = vunpack.c.l.b16 %v2270
        %v2279 = vunpack.c.l.b16 %v2271
        %v2280 = vunpack.c.l.b16 %v2272
        %v2281 = vunpack.c.l.b16 %v2273
        %v2282 = vpack.c.b16 %v2279, %v2278
        %v2283 = vpack.c.b16 %v2281, %v2280
        %v2285 = vsel %vm312, %v2282, 0
        %v2288 = vsel %vm312, %v2283, 0
        %2290 = vmatprep.subr.bf16.mxu0 0
        %2291 = vmatpush1.bf16.msra.mxu0 0
        %2292 = vmatprep.subr.bf16.mxu0 0
        %2293 = vmatpush1.bf16.msra.mxu0 0
        %2294 = vmatprep.subr.bf16.mxu0 0
        %2295 = vmatpush1.bf16.msra.mxu0 0
        %2296 = vmatprep.subr.bf16.mxu0 0
        %2297 = vmatpush1.bf16.msra.mxu0 0
        %2298 = vmatprep.subr.bf16.mxu0 0
        %2299 = vmatpush1.bf16.msra.mxu0 0
        %2300 = vmatprep.subr.bf16.mxu0 0
        %2301 = vmatpush1.bf16.msra.mxu0 %v321
        %2302 = vmatprep.subr.bf16.mxu0 0
        %2303 = vmatpush1.bf16.msra.mxu0 %v308
        %2304 = vmatprep.subr.bf16.mxu0 0
        %2305 = vmatpush1.bf16.msra.mxu0 %v307
        %2306 = vmatprep.subr.bf16.mxu0 0
        %2307 = vmatpush2.bf16.msra.mxu0 0
        %2308 = vmatprep.subr.bf16.mxu0 0
        %2309 = vmatpush2.bf16.msra.mxu0 0
        %2310 = vmatprep.subr.bf16.mxu0 0
        %2311 = vmatpush2.bf16.msra.mxu0 0
        %2312 = vmatprep.subr.bf16.mxu0 0
        %2313 = vmatpush2.bf16.msra.mxu0 0
        %2314 = vmatprep.subr.bf16.mxu0 0
        %2315 = vmatpush2.bf16.msra.mxu0 0
        %2316 = vmatprep.subr.bf16.mxu0 0
        %2317 = vmatpush2.bf16.msra.mxu0 0
        %2318 = vmatprep.subr.bf16.mxu0 0
        %2319 = vmatpush2.bf16.msra.mxu0 0
        %2320 = vmatprep.subr.bf16.mxu0 0
        %2321 = vmatpush2.bf16.msra.mxu0 0
        %2322 = vmatprep.mubr.bf16.mxu0 0
        %2323 = vmatmul.mubr.bf16.gmra.mxu0 %v2285
        %v2324 = vpop.f32.mrf.mxu0
        %v2325 = vadd.f32 0.0, %v2324
        %v2326 = vpop.f32.mrf.mxu0
        %v2327 = vpop.f32.mrf.mxu0
        %v2328 = vadd.f32 0.0, %v2327
        %v2329 = vpop.f32.mrf.mxu0
        %2330 = vmatprep.mubr.bf16.mxu0 0
        %2331 = vmatmul.mubr.bf16.gmra.mxu0 %v2288
        %v2332 = vpop.f32.mrf.mxu0
        %v2333 = vadd.f32 0.0, %v2332
        %v2334 = vpop.f32.mrf.mxu0
        %v2335 = vpop.f32.mrf.mxu0
        %v2336 = vadd.f32 0.0, %v2335
        %v2337 = vpop.f32.mrf.mxu0
        %2338 = vdwg.mxu0
        %v2339 = vpack.c.bf16 %v2328, %v2325
        %v2340 = vpack.c.bf16 %v2336, %v2333
        %s2341 = scalar_lea.vmem %s2, 1152
        %v2342 = vld [vmem:[%s2341] sm:$0xff]
        %v2343 = vld [vmem:[%s2341 + $0x8] sm:$0xff]
        %v2344 = vld [vmem:[%s2341 + $0x10] sm:$0xff]
        %v2345 = vld [vmem:[%s2341 + $0x18] sm:$0xff]
        %v2346 = vld [vmem:[%s2341 + $0x20] sm:$0xff]
        %v2347 = vld [vmem:[%s2341 + $0x28] sm:$0xff]
        %v2348 = vld [vmem:[%s2341 + $0x30] sm:$0xff]
        %v2349 = vld [vmem:[%s2341 + $0x38] sm:$0xff]
        %v2350 = vld [vmem:[%s2341 + $0x40] sm:$0xff]
        %v2351 = vld [vmem:[%s2341 + $0x48] sm:$0xff]
        %v2352 = vld [vmem:[%s2341 + $0x50] sm:$0xff]
        %v2353 = vld [vmem:[%s2341 + $0x58] sm:$0xff]
        %v2354 = vld [vmem:[%s2341 + $0x60] sm:$0xff]
        %v2355 = vld [vmem:[%s2341 + $0x68] sm:$0xff]
        %v2356 = vld [vmem:[%s2341 + $0x70] sm:$0xff]
        %v2357 = vld [vmem:[%s2341 + $0x78] sm:$0xff]
        %v2358 = vld [vmem:[%s2341 + $0x80] sm:$0xff]
        %v2359 = vld [vmem:[%s2341 + $0x88] sm:$0xff]
        %v2360 = vld [vmem:[%s2341 + $0x90] sm:$0xff]
        %v2361 = vld [vmem:[%s2341 + $0x98] sm:$0xff]
        %v2362 = vld [vmem:[%s2341 + $0xa0] sm:$0xff]
        %v2363 = vld [vmem:[%s2341 + $0xa8] sm:$0xff]
        %v2364 = vld [vmem:[%s2341 + $0xb0] sm:$0xff]
        %v2365 = vld [vmem:[%s2341 + $0xb8] sm:$0xff]
        %v2366 = vld [vmem:[%s2341 + $0xc0] sm:$0xff]
        %v2367 = vld [vmem:[%s2341 + $0xc8] sm:$0xff]
        %v2368 = vld [vmem:[%s2341 + $0xd0] sm:$0xff]
        %v2369 = vld [vmem:[%s2341 + $0xd8] sm:$0xff]
        %v2370 = vld [vmem:[%s2341 + $0xe0] sm:$0xff]
        %v2371 = vld [vmem:[%s2341 + $0xe8] sm:$0xff]
        %v2372 = vld [vmem:[%s2341 + $0xf0] sm:$0xff]
        %v2373 = vld [vmem:[%s2341 + $0xf8] sm:$0xff]
        %v2374 = vld [vmem:[%s2341 + $0x100] sm:$0xff]
        %v2375 = vld [vmem:[%s2341 + $0x108] sm:$0xff]
        %v2376 = vld [vmem:[%s2341 + $0x110] sm:$0xff]
        %v2377 = vld [vmem:[%s2341 + $0x118] sm:$0xff]
        %v2378 = vld [vmem:[%s2341 + $0x120] sm:$0xff]
        %v2379 = vld [vmem:[%s2341 + $0x128] sm:$0xff]
        %v2380 = vld [vmem:[%s2341 + $0x130] sm:$0xff]
        %v2381 = vld [vmem:[%s2341 + $0x138] sm:$0xff]
        %v2382 = vld [vmem:[%s2341 + $0x140] sm:$0xff]
        %v2383 = vld [vmem:[%s2341 + $0x148] sm:$0xff]
        %v2384 = vld [vmem:[%s2341 + $0x150] sm:$0xff]
        %v2385 = vld [vmem:[%s2341 + $0x158] sm:$0xff]
        %v2386 = vld [vmem:[%s2341 + $0x160] sm:$0xff]
        %v2387 = vld [vmem:[%s2341 + $0x168] sm:$0xff]
        %v2388 = vld [vmem:[%s2341 + $0x170] sm:$0xff]
        %v2389 = vld [vmem:[%s2341 + $0x178] sm:$0xff]
        %v2390 = vld [vmem:[%s2341 + $0x180] sm:$0xff]
        %v2391 = vld [vmem:[%s2341 + $0x188] sm:$0xff]
        %v2392 = vld [vmem:[%s2341 + $0x190] sm:$0xff]
        %v2393 = vld [vmem:[%s2341 + $0x198] sm:$0xff]
        %v2394 = vld [vmem:[%s2341 + $0x1a0] sm:$0xff]
        %v2395 = vld [vmem:[%s2341 + $0x1a8] sm:$0xff]
        %v2396 = vld [vmem:[%s2341 + $0x1b0] sm:$0xff]
        %v2397 = vld [vmem:[%s2341 + $0x1b8] sm:$0xff]
        %v2398 = vld [vmem:[%s2341 + $0x1c0] sm:$0xff]
        %v2399 = vld [vmem:[%s2341 + $0x1c8] sm:$0xff]
        %v2400 = vld [vmem:[%s2341 + $0x1d0] sm:$0xff]
        %v2401 = vld [vmem:[%s2341 + $0x1d8] sm:$0xff]
        %v2402 = vld [vmem:[%s2341 + $0x1e0] sm:$0xff]
        %v2403 = vld [vmem:[%s2341 + $0x1e8] sm:$0xff]
        %v2404 = vld [vmem:[%s2341 + $0x1f0] sm:$0xff]
        %v2405 = vld [vmem:[%s2341 + $0x1f8] sm:$0xff]
        %v2406 = vld [vmem:[%s2341 + $0x200] sm:$0xff]
        %v2407 = vld [vmem:[%s2341 + $0x208] sm:$0xff]
        %v2408 = vld [vmem:[%s2341 + $0x210] sm:$0xff]
        %v2409 = vld [vmem:[%s2341 + $0x218] sm:$0xff]
        %v2410 = vld [vmem:[%s2341 + $0x220] sm:$0xff]
        %v2411 = vld [vmem:[%s2341 + $0x228] sm:$0xff]
        %v2412 = vld [vmem:[%s2341 + $0x230] sm:$0xff]
        %v2413 = vld [vmem:[%s2341 + $0x238] sm:$0xff]
        %v2486 = vunpack.c.l.b16 %v2342
        %v2487 = vunpack.c.h.b16 %v2342
        %v2488 = vunpack.c.l.b16 %v2343
        %v2489 = vunpack.c.h.b16 %v2343
        %v2490 = vunpack.c.l.b16 %v2344
        %v2491 = vunpack.c.h.b16 %v2344
        %v2492 = vunpack.c.l.b16 %v2345
        %v2493 = vunpack.c.h.b16 %v2345
        %v2494 = vunpack.c.l.b16 %v2346
        %v2495 = vunpack.c.h.b16 %v2346
        %v2496 = vunpack.c.l.b16 %v2347
        %v2497 = vunpack.c.h.b16 %v2347
        %v2498 = vunpack.c.l.b16 %v2348
        %v2499 = vunpack.c.h.b16 %v2348
        %v2500 = vunpack.c.l.b16 %v2349
        %v2501 = vunpack.c.h.b16 %v2349
        %v2502 = vunpack.c.l.b16 %v2350
        %v2503 = vunpack.c.h.b16 %v2350
        %v2504 = vunpack.c.l.b16 %v2351
        %v2505 = vunpack.c.h.b16 %v2351
        %v2506 = vunpack.c.l.b16 %v2352
        %v2507 = vunpack.c.h.b16 %v2352
        %v2508 = vunpack.c.l.b16 %v2353
        %v2509 = vunpack.c.h.b16 %v2353
        %v2510 = vunpack.c.l.b16 %v2354
        %v2511 = vunpack.c.h.b16 %v2354
        %v2512 = vunpack.c.l.b16 %v2355
        %v2513 = vunpack.c.h.b16 %v2355
        %v2514 = vunpack.c.l.b16 %v2356
        %v2515 = vunpack.c.h.b16 %v2356
        %v2516 = vunpack.c.l.b16 %v2357
        %v2517 = vunpack.c.h.b16 %v2357
        %v2518 = vunpack.c.l.b16 %v2358
        %v2519 = vunpack.c.h.b16 %v2358
        %v2520 = vunpack.c.l.b16 %v2359
        %v2521 = vunpack.c.h.b16 %v2359
        %v2522 = vunpack.c.l.b16 %v2360
        %v2523 = vunpack.c.h.b16 %v2360
        %v2524 = vunpack.c.l.b16 %v2361
        %v2525 = vunpack.c.h.b16 %v2361
        %v2526 = vunpack.c.l.b16 %v2362
        %v2527 = vunpack.c.h.b16 %v2362
        %v2528 = vunpack.c.l.b16 %v2363
        %v2529 = vunpack.c.h.b16 %v2363
        %v2530 = vunpack.c.l.b16 %v2364
        %v2531 = vunpack.c.h.b16 %v2364
        %v2532 = vunpack.c.l.b16 %v2365
        %v2533 = vunpack.c.h.b16 %v2365
        %v2534 = vunpack.c.l.b16 %v2366
        %v2535 = vunpack.c.h.b16 %v2366
        %v2536 = vunpack.c.l.b16 %v2367
        %v2537 = vunpack.c.h.b16 %v2367
        %v2538 = vunpack.c.l.b16 %v2368
        %v2539 = vunpack.c.h.b16 %v2368
        %v2540 = vunpack.c.l.b16 %v2369
        %v2541 = vunpack.c.h.b16 %v2369
        %v2542 = vunpack.c.l.b16 %v2370
        %v2543 = vunpack.c.h.b16 %v2370
        %v2544 = vunpack.c.l.b16 %v2371
        %v2545 = vunpack.c.h.b16 %v2371
        %v2546 = vunpack.c.l.b16 %v2372
        %v2547 = vunpack.c.h.b16 %v2372
        %v2548 = vunpack.c.l.b16 %v2373
        %v2549 = vunpack.c.h.b16 %v2373
        %v2550 = vunpack.c.l.b16 %v2374
        %v2551 = vunpack.c.h.b16 %v2374
        %v2552 = vunpack.c.l.b16 %v2375
        %v2553 = vunpack.c.h.b16 %v2375
        %v2554 = vunpack.c.l.b16 %v2376
        %v2555 = vunpack.c.h.b16 %v2376
        %v2556 = vunpack.c.l.b16 %v2377
        %v2557 = vunpack.c.h.b16 %v2377
        %v2558 = vunpack.c.l.b16 %v2378
        %v2559 = vunpack.c.h.b16 %v2378
        %v2560 = vunpack.c.l.b16 %v2379
        %v2561 = vunpack.c.h.b16 %v2379
        %v2562 = vunpack.c.l.b16 %v2380
        %v2563 = vunpack.c.h.b16 %v2380
        %v2564 = vunpack.c.l.b16 %v2381
        %v2565 = vunpack.c.h.b16 %v2381
        %v2566 = vunpack.c.l.b16 %v2382
        %v2567 = vunpack.c.h.b16 %v2382
        %v2568 = vunpack.c.l.b16 %v2383
        %v2569 = vunpack.c.h.b16 %v2383
        %v2570 = vunpack.c.l.b16 %v2384
        %v2571 = vunpack.c.h.b16 %v2384
        %v2572 = vunpack.c.l.b16 %v2385
        %v2573 = vunpack.c.h.b16 %v2385
        %v2574 = vunpack.c.l.b16 %v2386
        %v2575 = vunpack.c.h.b16 %v2386
        %v2576 = vunpack.c.l.b16 %v2387
        %v2577 = vunpack.c.h.b16 %v2387
        %v2578 = vunpack.c.l.b16 %v2388
        %v2579 = vunpack.c.h.b16 %v2388
        %v2580 = vunpack.c.l.b16 %v2389
        %v2581 = vunpack.c.h.b16 %v2389
        %v2582 = vunpack.c.l.b16 %v2390
        %v2583 = vunpack.c.h.b16 %v2390
        %v2584 = vunpack.c.l.b16 %v2391
        %v2585 = vunpack.c.h.b16 %v2391
        %v2586 = vunpack.c.l.b16 %v2392
        %v2587 = vunpack.c.h.b16 %v2392
        %v2588 = vunpack.c.l.b16 %v2393
        %v2589 = vunpack.c.h.b16 %v2393
        %v2590 = vunpack.c.l.b16 %v2394
        %v2591 = vunpack.c.h.b16 %v2394
        %v2592 = vunpack.c.l.b16 %v2395
        %v2593 = vunpack.c.h.b16 %v2395
        %v2594 = vunpack.c.l.b16 %v2396
        %v2595 = vunpack.c.h.b16 %v2396
        %v2596 = vunpack.c.l.b16 %v2397
        %v2597 = vunpack.c.h.b16 %v2397
        %v2598 = vunpack.c.l.b16 %v2398
        %v2599 = vunpack.c.h.b16 %v2398
        %v2600 = vunpack.c.l.b16 %v2399
        %v2601 = vunpack.c.h.b16 %v2399
        %v2602 = vunpack.c.l.b16 %v2400
        %v2603 = vunpack.c.h.b16 %v2400
        %v2604 = vunpack.c.l.b16 %v2401
        %v2605 = vunpack.c.h.b16 %v2401
        %v2606 = vunpack.c.l.b16 %v2402
        %v2607 = vunpack.c.h.b16 %v2402
        %v2608 = vunpack.c.l.b16 %v2403
        %v2609 = vunpack.c.h.b16 %v2403
        %v2610 = vunpack.c.l.b16 %v2404
        %v2611 = vunpack.c.h.b16 %v2404
        %v2612 = vunpack.c.l.b16 %v2405
        %v2613 = vunpack.c.h.b16 %v2405
        %v2614 = vunpack.c.l.b16 %v2406
        %v2615 = vunpack.c.h.b16 %v2406
        %v2616 = vunpack.c.l.b16 %v2407
        %v2617 = vunpack.c.h.b16 %v2407
        %v2618 = vunpack.c.l.b16 %v2408
        %v2619 = vunpack.c.h.b16 %v2408
        %v2620 = vunpack.c.l.b16 %v2409
        %v2621 = vunpack.c.h.b16 %v2409
        %v2622 = vunpack.c.l.b16 %v2410
        %v2623 = vunpack.c.h.b16 %v2410
        %v2624 = vunpack.c.l.b16 %v2411
        %v2625 = vunpack.c.h.b16 %v2411
        %v2626 = vunpack.c.l.b16 %v2412
        %v2627 = vunpack.c.h.b16 %v2412
        %v2628 = vunpack.c.l.b16 %v2413
        %v2629 = vunpack.c.h.b16 %v2413
        %v2630 = vpack.c.b16 %v2502, %v2486
        %v2631 = vpack.c.b16 %v2503, %v2487
        %v2632 = vpack.c.b16 %v2504, %v2488
        %v2633 = vpack.c.b16 %v2505, %v2489
        %v2634 = vpack.c.b16 %v2506, %v2490
        %v2635 = vpack.c.b16 %v2507, %v2491
        %v2636 = vpack.c.b16 %v2508, %v2492
        %v2637 = vpack.c.b16 %v2509, %v2493
        %v2638 = vpack.c.b16 %v2510, %v2494
        %v2639 = vpack.c.b16 %v2511, %v2495
        %v2640 = vpack.c.b16 %v2512, %v2496
        %v2641 = vpack.c.b16 %v2513, %v2497
        %v2642 = vpack.c.b16 %v2514, %v2498
        %v2643 = vpack.c.b16 %v2515, %v2499
        %v2644 = vpack.c.b16 %v2516, %v2500
        %v2645 = vpack.c.b16 %v2517, %v2501
        %v2646 = vpack.c.b16 %v2534, %v2518
        %v2647 = vpack.c.b16 %v2535, %v2519
        %v2648 = vpack.c.b16 %v2536, %v2520
        %v2649 = vpack.c.b16 %v2537, %v2521
        %v2650 = vpack.c.b16 %v2538, %v2522
        %v2651 = vpack.c.b16 %v2539, %v2523
        %v2652 = vpack.c.b16 %v2540, %v2524
        %v2653 = vpack.c.b16 %v2541, %v2525
        %v2654 = vpack.c.b16 %v2542, %v2526
        %v2655 = vpack.c.b16 %v2543, %v2527
        %v2656 = vpack.c.b16 %v2544, %v2528
        %v2657 = vpack.c.b16 %v2545, %v2529
        %v2658 = vpack.c.b16 %v2546, %v2530
        %v2659 = vpack.c.b16 %v2547, %v2531
        %v2660 = vpack.c.b16 %v2548, %v2532
        %v2661 = vpack.c.b16 %v2549, %v2533
        %v2662 = vpack.c.b16 %v2566, %v2550
        %v2663 = vpack.c.b16 %v2567, %v2551
        %v2664 = vpack.c.b16 %v2568, %v2552
        %v2665 = vpack.c.b16 %v2569, %v2553
        %v2666 = vpack.c.b16 %v2570, %v2554
        %v2667 = vpack.c.b16 %v2571, %v2555
        %v2668 = vpack.c.b16 %v2572, %v2556
        %v2669 = vpack.c.b16 %v2573, %v2557
        %v2670 = vpack.c.b16 %v2574, %v2558
        %v2671 = vpack.c.b16 %v2575, %v2559
        %v2672 = vpack.c.b16 %v2576, %v2560
        %v2673 = vpack.c.b16 %v2577, %v2561
        %v2674 = vpack.c.b16 %v2578, %v2562
        %v2675 = vpack.c.b16 %v2579, %v2563
        %v2676 = vpack.c.b16 %v2580, %v2564
        %v2677 = vpack.c.b16 %v2581, %v2565
        %v2678 = vpack.c.b16 %v2598, %v2582
        %v2679 = vpack.c.b16 %v2599, %v2583
        %v2680 = vpack.c.b16 %v2600, %v2584
        %v2681 = vpack.c.b16 %v2601, %v2585
        %v2682 = vpack.c.b16 %v2602, %v2586
        %v2683 = vpack.c.b16 %v2603, %v2587
        %v2684 = vpack.c.b16 %v2604, %v2588
        %v2685 = vpack.c.b16 %v2605, %v2589
        %v2686 = vpack.c.b16 %v2606, %v2590
        %v2687 = vpack.c.b16 %v2607, %v2591
        %v2688 = vpack.c.b16 %v2608, %v2592
        %v2689 = vpack.c.b16 %v2609, %v2593
        %v2690 = vpack.c.b16 %v2610, %v2594
        %v2691 = vpack.c.b16 %v2611, %v2595
        %v2692 = vpack.c.b16 %v2612, %v2596
        %v2693 = vpack.c.b16 %v2613, %v2597
        %v2694 = vpack.c.b16 %v2614, %v2614
        %v2695 = vpack.c.b16 %v2615, %v2615
        %v2696 = vpack.c.b16 %v2616, %v2616
        %v2697 = vpack.c.b16 %v2617, %v2617
        %v2698 = vpack.c.b16 %v2618, %v2618
        %v2699 = vpack.c.b16 %v2619, %v2619
        %v2700 = vpack.c.b16 %v2620, %v2620
        %v2701 = vpack.c.b16 %v2621, %v2621
        %v2702 = vpack.c.b16 %v2622, %v2622
        %v2703 = vpack.c.b16 %v2623, %v2623
        %v2704 = vpack.c.b16 %v2624, %v2624
        %v2705 = vpack.c.b16 %v2625, %v2625
        %v2706 = vpack.c.b16 %v2626, %v2626
        %v2707 = vpack.c.b16 %v2627, %v2627
        %v2708 = vpack.c.b16 %v2628, %v2628
        %v2709 = vpack.c.b16 %v2629, %v2629
        %v2775 = vsel %vm951, %v2339, 0
        %v2778 = vsel %vm951, %v2340, 0
        %v2781 = vsel %vm958, %v2694, 0
        %v2784 = vsel %vm958, %v2695, 0
        %v2787 = vsel %vm958, %v2696, 0
        %v2790 = vsel %vm958, %v2697, 0
        %v2793 = vsel %vm958, %v2698, 0
        %v2796 = vsel %vm958, %v2699, 0
        %v2799 = vsel %vm958, %v2700, 0
        %v2802 = vsel %vm958, %v2701, 0
        %v2805 = vsel %vm958, %v2702, 0
        %v2808 = vsel %vm958, %v2703, 0
        %v2811 = vsel %vm958, %v2704, 0
        %v2814 = vsel %vm958, %v2705, 0
        %v2817 = vsel %vm958, %v2706, 0
        %v2820 = vsel %vm958, %v2707, 0
        %v2823 = vsel %vm958, %v2708, 0
        %v2826 = vsel %vm958, %v2709, 0
        %2828 = vmatprep.subr.bf16.mxu0 0
        %2829 = vmatpush1.bf16.msra.mxu0 0
        %2830 = vmatprep.subr.bf16.mxu0 0
        %2831 = vmatpush1.bf16.msra.mxu0 0
        %2832 = vmatprep.subr.bf16.mxu0 0
        %2833 = vmatpush1.bf16.msra.mxu0 0
        %2834 = vmatprep.subr.bf16.mxu0 %v2784
        %2835 = vmatpush1.bf16.msra.mxu0 %v2781
        %2836 = vmatprep.subr.bf16.mxu0 %v2679
        %2837 = vmatpush1.bf16.msra.mxu0 %v2678
        %2838 = vmatprep.subr.bf16.mxu0 %v2663
        %2839 = vmatpush1.bf16.msra.mxu0 %v2662
        %2840 = vmatprep.subr.bf16.mxu0 %v2647
        %2841 = vmatpush1.bf16.msra.mxu0 %v2646
        %2842 = vmatprep.subr.bf16.mxu0 %v2631
        %2843 = vmatpush1.bf16.msra.mxu0 %v2630
        %2844 = vmatprep.subr.bf16.mxu0 0
        %2845 = vmatpush2.bf16.msra.mxu0 0
        %2846 = vmatprep.subr.bf16.mxu0 0
        %2847 = vmatpush2.bf16.msra.mxu0 0
        %2848 = vmatprep.subr.bf16.mxu0 0
        %2849 = vmatpush2.bf16.msra.mxu0 0
        %2850 = vmatprep.subr.bf16.mxu0 0
        %2851 = vmatpush2.bf16.msra.mxu0 0
        %2852 = vmatprep.subr.bf16.mxu0 0
        %2853 = vmatpush2.bf16.msra.mxu0 0
        %2854 = vmatprep.subr.bf16.mxu0 0
        %2855 = vmatpush2.bf16.msra.mxu0 0
        %2856 = vmatprep.subr.bf16.mxu0 0
        %2857 = vmatpush2.bf16.msra.mxu0 0
        %2858 = vmatprep.subr.bf16.mxu0 0
        %2859 = vmatpush2.bf16.msra.mxu0 0
        %2860 = vmatprep.mubr.bf16.mxu0 0
        %2861 = vmatmul.mubr.bf16.gmra.mxu0 %v2775
        %v2862 = vpop.f32.mrf.mxu0
        %v2863 = vadd.f32 0.0, %v2862
        %v2864 = vpop.f32.mrf.mxu0
        %v2865 = vadd.f32 0.0, %v2864
        %v2866 = vpop.f32.mrf.mxu0
        %v2867 = vadd.f32 0.0, %v2866
        %v2868 = vpop.f32.mrf.mxu0
        %v2869 = vadd.f32 0.0, %v2868
        %2870 = vmatprep.mubr.bf16.mxu0 0
        %2871 = vmatmul.mubr.bf16.gmra.mxu0 %v2778
        %v2872 = vpop.f32.mrf.mxu0
        %v2873 = vadd.f32 0.0, %v2872
        %v2874 = vpop.f32.mrf.mxu0
        %v2875 = vadd.f32 0.0, %v2874
        %v2876 = vpop.f32.mrf.mxu0
        %v2877 = vadd.f32 0.0, %v2876
        %v2878 = vpop.f32.mrf.mxu0
        %v2879 = vadd.f32 0.0, %v2878
        %2880 = vdwg.mxu0
        %2881 = vmatprep.subr.bf16.mxu0 0
        %2882 = vmatpush1.bf16.msra.mxu0 0
        %2883 = vmatprep.subr.bf16.mxu0 0
        %2884 = vmatpush1.bf16.msra.mxu0 0
        %2885 = vmatprep.subr.bf16.mxu0 0
        %2886 = vmatpush1.bf16.msra.mxu0 0
        %2887 = vmatprep.subr.bf16.mxu0 %v2790
        %2888 = vmatpush1.bf16.msra.mxu0 %v2787
        %2889 = vmatprep.subr.bf16.mxu0 %v2681
        %2890 = vmatpush1.bf16.msra.mxu0 %v2680
        %2891 = vmatprep.subr.bf16.mxu0 %v2665
        %2892 = vmatpush1.bf16.msra.mxu0 %v2664
        %2893 = vmatprep.subr.bf16.mxu0 %v2649
        %2894 = vmatpush1.bf16.msra.mxu0 %v2648
        %2895 = vmatprep.subr.bf16.mxu0 %v2633
        %2896 = vmatpush1.bf16.msra.mxu0 %v2632
        %2897 = vmatprep.subr.bf16.mxu0 0
        %2898 = vmatpush2.bf16.msra.mxu0 0
        %2899 = vmatprep.subr.bf16.mxu0 0
        %2900 = vmatpush2.bf16.msra.mxu0 0
        %2901 = vmatprep.subr.bf16.mxu0 0
        %2902 = vmatpush2.bf16.msra.mxu0 0
        %2903 = vmatprep.subr.bf16.mxu0 0
        %2904 = vmatpush2.bf16.msra.mxu0 0
        %2905 = vmatprep.subr.bf16.mxu0 0
        %2906 = vmatpush2.bf16.msra.mxu0 0
        %2907 = vmatprep.subr.bf16.mxu0 0
        %2908 = vmatpush2.bf16.msra.mxu0 0
        %2909 = vmatprep.subr.bf16.mxu0 0
        %2910 = vmatpush2.bf16.msra.mxu0 0
        %2911 = vmatprep.subr.bf16.mxu0 0
        %2912 = vmatpush2.bf16.msra.mxu0 0
        %2913 = vmatprep.mubr.bf16.mxu0 0
        %2914 = vmatmul.mubr.bf16.gmra.mxu0 %v2775
        %v2915 = vpop.f32.mrf.mxu0
        %v2916 = vadd.f32 0.0, %v2915
        %v2917 = vpop.f32.mrf.mxu0
        %v2918 = vadd.f32 0.0, %v2917
        %v2919 = vpop.f32.mrf.mxu0
        %v2920 = vadd.f32 0.0, %v2919
        %v2921 = vpop.f32.mrf.mxu0
        %v2922 = vadd.f32 0.0, %v2921
        %2923 = vmatprep.mubr.bf16.mxu0 0
        %2924 = vmatmul.mubr.bf16.gmra.mxu0 %v2778
        %v2925 = vpop.f32.mrf.mxu0
        %v2926 = vadd.f32 0.0, %v2925
        %v2927 = vpop.f32.mrf.mxu0
        %v2928 = vadd.f32 0.0, %v2927
        %v2929 = vpop.f32.mrf.mxu0
        %v2930 = vadd.f32 0.0, %v2929
        %v2931 = vpop.f32.mrf.mxu0
        %v2932 = vadd.f32 0.0, %v2931
        %2933 = vdwg.mxu0
        %2934 = vmatprep.subr.bf16.mxu0 0
        %2935 = vmatpush1.bf16.msra.mxu0 0
        %2936 = vmatprep.subr.bf16.mxu0 0
        %2937 = vmatpush1.bf16.msra.mxu0 0
        %2938 = vmatprep.subr.bf16.mxu0 0
        %2939 = vmatpush1.bf16.msra.mxu0 0
        %2940 = vmatprep.subr.bf16.mxu0 %v2796
        %2941 = vmatpush1.bf16.msra.mxu0 %v2793
        %2942 = vmatprep.subr.bf16.mxu0 %v2683
        %2943 = vmatpush1.bf16.msra.mxu0 %v2682
        %2944 = vmatprep.subr.bf16.mxu0 %v2667
        %2945 = vmatpush1.bf16.msra.mxu0 %v2666
        %2946 = vmatprep.subr.bf16.mxu0 %v2651
        %2947 = vmatpush1.bf16.msra.mxu0 %v2650
        %2948 = vmatprep.subr.bf16.mxu0 %v2635
        %2949 = vmatpush1.bf16.msra.mxu0 %v2634
        %2950 = vmatprep.subr.bf16.mxu0 0
        %2951 = vmatpush2.bf16.msra.mxu0 0
        %2952 = vmatprep.subr.bf16.mxu0 0
        %2953 = vmatpush2.bf16.msra.mxu0 0
        %2954 = vmatprep.subr.bf16.mxu0 0
        %2955 = vmatpush2.bf16.msra.mxu0 0
        %2956 = vmatprep.subr.bf16.mxu0 0
        %2957 = vmatpush2.bf16.msra.mxu0 0
        %2958 = vmatprep.subr.bf16.mxu0 0
        %2959 = vmatpush2.bf16.msra.mxu0 0
        %2960 = vmatprep.subr.bf16.mxu0 0
        %2961 = vmatpush2.bf16.msra.mxu0 0
        %2962 = vmatprep.subr.bf16.mxu0 0
        %2963 = vmatpush2.bf16.msra.mxu0 0
        %2964 = vmatprep.subr.bf16.mxu0 0
        %2965 = vmatpush2.bf16.msra.mxu0 0
        %2966 = vmatprep.mubr.bf16.mxu0 0
        %2967 = vmatmul.mubr.bf16.gmra.mxu0 %v2775
        %v2968 = vpop.f32.mrf.mxu0
        %v2969 = vadd.f32 0.0, %v2968
        %v2970 = vpop.f32.mrf.mxu0
        %v2971 = vadd.f32 0.0, %v2970
        %v2972 = vpop.f32.mrf.mxu0
        %v2973 = vadd.f32 0.0, %v2972
        %v2974 = vpop.f32.mrf.mxu0
        %v2975 = vadd.f32 0.0, %v2974
        %2976 = vmatprep.mubr.bf16.mxu0 0
        %2977 = vmatmul.mubr.bf16.gmra.mxu0 %v2778
        %v2978 = vpop.f32.mrf.mxu0
        %v2979 = vadd.f32 0.0, %v2978
        %v2980 = vpop.f32.mrf.mxu0
        %v2981 = vadd.f32 0.0, %v2980
        %v2982 = vpop.f32.mrf.mxu0
        %v2983 = vadd.f32 0.0, %v2982
        %v2984 = vpop.f32.mrf.mxu0
        %v2985 = vadd.f32 0.0, %v2984
        %2986 = vdwg.mxu0
        %2987 = vmatprep.subr.bf16.mxu0 0
        %2988 = vmatpush1.bf16.msra.mxu0 0
        %2989 = vmatprep.subr.bf16.mxu0 0
        %2990 = vmatpush1.bf16.msra.mxu0 0
        %2991 = vmatprep.subr.bf16.mxu0 0
        %2992 = vmatpush1.bf16.msra.mxu0 0
        %2993 = vmatprep.subr.bf16.mxu0 %v2802
        %2994 = vmatpush1.bf16.msra.mxu0 %v2799
        %2995 = vmatprep.subr.bf16.mxu0 %v2685
        %2996 = vmatpush1.bf16.msra.mxu0 %v2684
        %2997 = vmatprep.subr.bf16.mxu0 %v2669
        %2998 = vmatpush1.bf16.msra.mxu0 %v2668
        %2999 = vmatprep.subr.bf16.mxu0 %v2653
        %3000 = vmatpush1.bf16.msra.mxu0 %v2652
        %3001 = vmatprep.subr.bf16.mxu0 %v2637
        %3002 = vmatpush1.bf16.msra.mxu0 %v2636
        %3003 = vmatprep.subr.bf16.mxu0 0
        %3004 = vmatpush2.bf16.msra.mxu0 0
        %3005 = vmatprep.subr.bf16.mxu0 0
        %3006 = vmatpush2.bf16.msra.mxu0 0
        %3007 = vmatprep.subr.bf16.mxu0 0
        %3008 = vmatpush2.bf16.msra.mxu0 0
        %3009 = vmatprep.subr.bf16.mxu0 0
        %3010 = vmatpush2.bf16.msra.mxu0 0
        %3011 = vmatprep.subr.bf16.mxu0 0
        %3012 = vmatpush2.bf16.msra.mxu0 0
        %3013 = vmatprep.subr.bf16.mxu0 0
        %3014 = vmatpush2.bf16.msra.mxu0 0
        %3015 = vmatprep.subr.bf16.mxu0 0
        %3016 = vmatpush2.bf16.msra.mxu0 0
        %3017 = vmatprep.subr.bf16.mxu0 0
        %3018 = vmatpush2.bf16.msra.mxu0 0
        %3019 = vmatprep.mubr.bf16.mxu0 0
        %3020 = vmatmul.mubr.bf16.gmra.mxu0 %v2775
        %v3021 = vpop.f32.mrf.mxu0
        %v3022 = vadd.f32 0.0, %v3021
        %v3023 = vpop.f32.mrf.mxu0
        %v3024 = vadd.f32 0.0, %v3023
        %v3025 = vpop.f32.mrf.mxu0
        %v3026 = vadd.f32 0.0, %v3025
        %v3027 = vpop.f32.mrf.mxu0
        %v3028 = vadd.f32 0.0, %v3027
        %3029 = vmatprep.mubr.bf16.mxu0 0
        %3030 = vmatmul.mubr.bf16.gmra.mxu0 %v2778
        %v3031 = vpop.f32.mrf.mxu0
        %v3032 = vadd.f32 0.0, %v3031
        %v3033 = vpop.f32.mrf.mxu0
        %v3034 = vadd.f32 0.0, %v3033
        %v3035 = vpop.f32.mrf.mxu0
        %v3036 = vadd.f32 0.0, %v3035
        %v3037 = vpop.f32.mrf.mxu0
        %v3038 = vadd.f32 0.0, %v3037
        %3039 = vdwg.mxu0
        %3040 = vmatprep.subr.bf16.mxu0 0
        %3041 = vmatpush1.bf16.msra.mxu0 0
        %3042 = vmatprep.subr.bf16.mxu0 0
        %3043 = vmatpush1.bf16.msra.mxu0 0
        %3044 = vmatprep.subr.bf16.mxu0 0
        %3045 = vmatpush1.bf16.msra.mxu0 0
        %3046 = vmatprep.subr.bf16.mxu0 %v2808
        %3047 = vmatpush1.bf16.msra.mxu0 %v2805
        %3048 = vmatprep.subr.bf16.mxu0 %v2687
        %3049 = vmatpush1.bf16.msra.mxu0 %v2686
        %3050 = vmatprep.subr.bf16.mxu0 %v2671
        %3051 = vmatpush1.bf16.msra.mxu0 %v2670
        %3052 = vmatprep.subr.bf16.mxu0 %v2655
        %3053 = vmatpush1.bf16.msra.mxu0 %v2654
        %3054 = vmatprep.subr.bf16.mxu0 %v2639
        %3055 = vmatpush1.bf16.msra.mxu0 %v2638
        %3056 = vmatprep.subr.bf16.mxu0 0
        %3057 = vmatpush2.bf16.msra.mxu0 0
        %3058 = vmatprep.subr.bf16.mxu0 0
        %3059 = vmatpush2.bf16.msra.mxu0 0
        %3060 = vmatprep.subr.bf16.mxu0 0
        %3061 = vmatpush2.bf16.msra.mxu0 0
        %3062 = vmatprep.subr.bf16.mxu0 0
        %3063 = vmatpush2.bf16.msra.mxu0 0
        %3064 = vmatprep.subr.bf16.mxu0 0
        %3065 = vmatpush2.bf16.msra.mxu0 0
        %3066 = vmatprep.subr.bf16.mxu0 0
        %3067 = vmatpush2.bf16.msra.mxu0 0
        %3068 = vmatprep.subr.bf16.mxu0 0
        %3069 = vmatpush2.bf16.msra.mxu0 0
        %3070 = vmatprep.subr.bf16.mxu0 0
        %3071 = vmatpush2.bf16.msra.mxu0 0
        %3072 = vmatprep.mubr.bf16.mxu0 0
        %3073 = vmatmul.mubr.bf16.gmra.mxu0 %v2775
        %v3074 = vpop.f32.mrf.mxu0
        %v3075 = vadd.f32 0.0, %v3074
        %v3076 = vpop.f32.mrf.mxu0
        %v3077 = vadd.f32 0.0, %v3076
        %v3078 = vpop.f32.mrf.mxu0
        %v3079 = vadd.f32 0.0, %v3078
        %v3080 = vpop.f32.mrf.mxu0
        %v3081 = vadd.f32 0.0, %v3080
        %3082 = vmatprep.mubr.bf16.mxu0 0
        %3083 = vmatmul.mubr.bf16.gmra.mxu0 %v2778
        %v3084 = vpop.f32.mrf.mxu0
        %v3085 = vadd.f32 0.0, %v3084
        %v3086 = vpop.f32.mrf.mxu0
        %v3087 = vadd.f32 0.0, %v3086
        %v3088 = vpop.f32.mrf.mxu0
        %v3089 = vadd.f32 0.0, %v3088
        %v3090 = vpop.f32.mrf.mxu0
        %v3091 = vadd.f32 0.0, %v3090
        %3092 = vdwg.mxu0
        %3093 = vmatprep.subr.bf16.mxu0 0
        %3094 = vmatpush1.bf16.msra.mxu0 0
        %3095 = vmatprep.subr.bf16.mxu0 0
        %3096 = vmatpush1.bf16.msra.mxu0 0
        %3097 = vmatprep.subr.bf16.mxu0 0
        %3098 = vmatpush1.bf16.msra.mxu0 0
        %3099 = vmatprep.subr.bf16.mxu0 %v2814
        %3100 = vmatpush1.bf16.msra.mxu0 %v2811
        %3101 = vmatprep.subr.bf16.mxu0 %v2689
        %3102 = vmatpush1.bf16.msra.mxu0 %v2688
        %3103 = vmatprep.subr.bf16.mxu0 %v2673
        %3104 = vmatpush1.bf16.msra.mxu0 %v2672
        %3105 = vmatprep.subr.bf16.mxu0 %v2657
        %3106 = vmatpush1.bf16.msra.mxu0 %v2656
        %3107 = vmatprep.subr.bf16.mxu0 %v2641
        %3108 = vmatpush1.bf16.msra.mxu0 %v2640
        %3109 = vmatprep.subr.bf16.mxu0 0
        %3110 = vmatpush2.bf16.msra.mxu0 0
        %3111 = vmatprep.subr.bf16.mxu0 0
        %3112 = vmatpush2.bf16.msra.mxu0 0
        %3113 = vmatprep.subr.bf16.mxu0 0
        %3114 = vmatpush2.bf16.msra.mxu0 0
        %3115 = vmatprep.subr.bf16.mxu0 0
        %3116 = vmatpush2.bf16.msra.mxu0 0
        %3117 = vmatprep.subr.bf16.mxu0 0
        %3118 = vmatpush2.bf16.msra.mxu0 0
        %3119 = vmatprep.subr.bf16.mxu0 0
        %3120 = vmatpush2.bf16.msra.mxu0 0
        %3121 = vmatprep.subr.bf16.mxu0 0
        %3122 = vmatpush2.bf16.msra.mxu0 0
        %3123 = vmatprep.subr.bf16.mxu0 0
        %3124 = vmatpush2.bf16.msra.mxu0 0
        %3125 = vmatprep.mubr.bf16.mxu0 0
        %3126 = vmatmul.mubr.bf16.gmra.mxu0 %v2775
        %v3127 = vpop.f32.mrf.mxu0
        %v3128 = vadd.f32 0.0, %v3127
        %v3129 = vpop.f32.mrf.mxu0
        %v3130 = vadd.f32 0.0, %v3129
        %v3131 = vpop.f32.mrf.mxu0
        %v3132 = vadd.f32 0.0, %v3131
        %v3133 = vpop.f32.mrf.mxu0
        %v3134 = vadd.f32 0.0, %v3133
        %3135 = vmatprep.mubr.bf16.mxu0 0
        %3136 = vmatmul.mubr.bf16.gmra.mxu0 %v2778
        %v3137 = vpop.f32.mrf.mxu0
        %v3138 = vadd.f32 0.0, %v3137
        %v3139 = vpop.f32.mrf.mxu0
        %v3140 = vadd.f32 0.0, %v3139
        %v3141 = vpop.f32.mrf.mxu0
        %v3142 = vadd.f32 0.0, %v3141
        %v3143 = vpop.f32.mrf.mxu0
        %v3144 = vadd.f32 0.0, %v3143
        %3145 = vdwg.mxu0
        %3146 = vmatprep.subr.bf16.mxu0 0
        %3147 = vmatpush1.bf16.msra.mxu0 0
        %3148 = vmatprep.subr.bf16.mxu0 0
        %3149 = vmatpush1.bf16.msra.mxu0 0
        %3150 = vmatprep.subr.bf16.mxu0 0
        %3151 = vmatpush1.bf16.msra.mxu0 0
        %3152 = vmatprep.subr.bf16.mxu0 %v2820
        %3153 = vmatpush1.bf16.msra.mxu0 %v2817
        %3154 = vmatprep.subr.bf16.mxu0 %v2691
        %3155 = vmatpush1.bf16.msra.mxu0 %v2690
        %3156 = vmatprep.subr.bf16.mxu0 %v2675
        %3157 = vmatpush1.bf16.msra.mxu0 %v2674
        %3158 = vmatprep.subr.bf16.mxu0 %v2659
        %3159 = vmatpush1.bf16.msra.mxu0 %v2658
        %3160 = vmatprep.subr.bf16.mxu0 %v2643
        %3161 = vmatpush1.bf16.msra.mxu0 %v2642
        %3162 = vmatprep.subr.bf16.mxu0 0
        %3163 = vmatpush2.bf16.msra.mxu0 0
        %3164 = vmatprep.subr.bf16.mxu0 0
        %3165 = vmatpush2.bf16.msra.mxu0 0
        %3166 = vmatprep.subr.bf16.mxu0 0
        %3167 = vmatpush2.bf16.msra.mxu0 0
        %3168 = vmatprep.subr.bf16.mxu0 0
        %3169 = vmatpush2.bf16.msra.mxu0 0
        %3170 = vmatprep.subr.bf16.mxu0 0
        %3171 = vmatpush2.bf16.msra.mxu0 0
        %3172 = vmatprep.subr.bf16.mxu0 0
        %3173 = vmatpush2.bf16.msra.mxu0 0
        %3174 = vmatprep.subr.bf16.mxu0 0
        %3175 = vmatpush2.bf16.msra.mxu0 0
        %3176 = vmatprep.subr.bf16.mxu0 0
        %3177 = vmatpush2.bf16.msra.mxu0 0
        %3178 = vmatprep.mubr.bf16.mxu0 0
        %3179 = vmatmul.mubr.bf16.gmra.mxu0 %v2775
        %v3180 = vpop.f32.mrf.mxu0
        %v3181 = vadd.f32 0.0, %v3180
        %v3182 = vpop.f32.mrf.mxu0
        %v3183 = vadd.f32 0.0, %v3182
        %v3184 = vpop.f32.mrf.mxu0
        %v3185 = vadd.f32 0.0, %v3184
        %v3186 = vpop.f32.mrf.mxu0
        %v3187 = vadd.f32 0.0, %v3186
        %3188 = vmatprep.mubr.bf16.mxu0 0
        %3189 = vmatmul.mubr.bf16.gmra.mxu0 %v2778
        %v3190 = vpop.f32.mrf.mxu0
        %v3191 = vadd.f32 0.0, %v3190
        %v3192 = vpop.f32.mrf.mxu0
        %v3193 = vadd.f32 0.0, %v3192
        %v3194 = vpop.f32.mrf.mxu0
        %v3195 = vadd.f32 0.0, %v3194
        %v3196 = vpop.f32.mrf.mxu0
        %v3197 = vadd.f32 0.0, %v3196
        %3198 = vdwg.mxu0
        %3199 = vmatprep.subr.bf16.mxu0 0
        %3200 = vmatpush1.bf16.msra.mxu0 0
        %3201 = vmatprep.subr.bf16.mxu0 0
        %3202 = vmatpush1.bf16.msra.mxu0 0
        %3203 = vmatprep.subr.bf16.mxu0 0
        %3204 = vmatpush1.bf16.msra.mxu0 0
        %3205 = vmatprep.subr.bf16.mxu0 %v2826
        %3206 = vmatpush1.bf16.msra.mxu0 %v2823
        %3207 = vmatprep.subr.bf16.mxu0 %v2693
        %3208 = vmatpush1.bf16.msra.mxu0 %v2692
        %3209 = vmatprep.subr.bf16.mxu0 %v2677
        %3210 = vmatpush1.bf16.msra.mxu0 %v2676
        %3211 = vmatprep.subr.bf16.mxu0 %v2661
        %3212 = vmatpush1.bf16.msra.mxu0 %v2660
        %3213 = vmatprep.subr.bf16.mxu0 %v2645
        %3214 = vmatpush1.bf16.msra.mxu0 %v2644
        %3215 = vmatprep.subr.bf16.mxu0 0
        %3216 = vmatpush2.bf16.msra.mxu0 0
        %3217 = vmatprep.subr.bf16.mxu0 0
        %3218 = vmatpush2.bf16.msra.mxu0 0
        %3219 = vmatprep.subr.bf16.mxu0 0
        %3220 = vmatpush2.bf16.msra.mxu0 0
        %3221 = vmatprep.subr.bf16.mxu0 0
        %3222 = vmatpush2.bf16.msra.mxu0 0
        %3223 = vmatprep.subr.bf16.mxu0 0
        %3224 = vmatpush2.bf16.msra.mxu0 0
        %3225 = vmatprep.subr.bf16.mxu0 0
        %3226 = vmatpush2.bf16.msra.mxu0 0
        %3227 = vmatprep.subr.bf16.mxu0 0
        %3228 = vmatpush2.bf16.msra.mxu0 0
        %3229 = vmatprep.subr.bf16.mxu0 0
        %3230 = vmatpush2.bf16.msra.mxu0 0
        %3231 = vmatprep.mubr.bf16.mxu0 0
        %3232 = vmatmul.mubr.bf16.gmra.mxu0 %v2775
        %v3233 = vpop.f32.mrf.mxu0
        %v3234 = vadd.f32 0.0, %v3233
        %v3235 = vpop.f32.mrf.mxu0
        %v3236 = vadd.f32 0.0, %v3235
        %v3237 = vpop.f32.mrf.mxu0
        %v3238 = vadd.f32 0.0, %v3237
        %v3239 = vpop.f32.mrf.mxu0
        %v3240 = vadd.f32 0.0, %v3239
        %3241 = vmatprep.mubr.bf16.mxu0 0
        %3242 = vmatmul.mubr.bf16.gmra.mxu0 %v2778
        %v3243 = vpop.f32.mrf.mxu0
        %v3244 = vadd.f32 0.0, %v3243
        %v3245 = vpop.f32.mrf.mxu0
        %v3246 = vadd.f32 0.0, %v3245
        %v3247 = vpop.f32.mrf.mxu0
        %v3248 = vadd.f32 0.0, %v3247
        %v3249 = vpop.f32.mrf.mxu0
        %v3250 = vadd.f32 0.0, %v3249
        %3251 = vdwg.mxu0
        %v3252 = vadd.f32 %v1880, %v2863
        %v3253 = vadd.f32 %v1882, %v2865
        %v3254 = vadd.f32 %v1933, %v2916
        %v3255 = vadd.f32 %v1935, %v2918
        %v3256 = vadd.f32 %v1986, %v2969
        %v3257 = vadd.f32 %v1988, %v2971
        %v3258 = vadd.f32 %v2039, %v3022
        %v3259 = vadd.f32 %v2041, %v3024
        %v3260 = vadd.f32 %v2092, %v3075
        %v3261 = vadd.f32 %v2094, %v3077
        %v3262 = vadd.f32 %v2145, %v3128
        %v3263 = vadd.f32 %v2147, %v3130
        %v3264 = vadd.f32 %v2198, %v3181
        %v3265 = vadd.f32 %v2200, %v3183
        %v3266 = vadd.f32 %v2251, %v3234
        %v3267 = vadd.f32 %v2253, %v3236
        %v3268 = vadd.f32 %v1884, %v2867
        %v3269 = vadd.f32 %v1886, %v2869
        %v3270 = vadd.f32 %v1937, %v2920
        %v3271 = vadd.f32 %v1939, %v2922
        %v3272 = vadd.f32 %v1990, %v2973
        %v3273 = vadd.f32 %v1992, %v2975
        %v3274 = vadd.f32 %v2043, %v3026
        %v3275 = vadd.f32 %v2045, %v3028
        %v3276 = vadd.f32 %v2096, %v3079
        %v3277 = vadd.f32 %v2098, %v3081
        %v3278 = vadd.f32 %v2149, %v3132
        %v3279 = vadd.f32 %v2151, %v3134
        %v3280 = vadd.f32 %v2202, %v3185
        %v3281 = vadd.f32 %v2204, %v3187
        %v3282 = vadd.f32 %v2255, %v3238
        %v3283 = vadd.f32 %v2257, %v3240
        %v3284 = vadd.f32 %v1890, %v2873
        %v3285 = vadd.f32 %v1892, %v2875
        %v3286 = vadd.f32 %v1943, %v2926
        %v3287 = vadd.f32 %v1945, %v2928
        %v3288 = vadd.f32 %v1996, %v2979
        %v3289 = vadd.f32 %v1998, %v2981
        %v3290 = vadd.f32 %v2049, %v3032
        %v3291 = vadd.f32 %v2051, %v3034
        %v3292 = vadd.f32 %v2102, %v3085
        %v3293 = vadd.f32 %v2104, %v3087
        %v3294 = vadd.f32 %v2155, %v3138
        %v3295 = vadd.f32 %v2157, %v3140
        %v3296 = vadd.f32 %v2208, %v3191
        %v3297 = vadd.f32 %v2210, %v3193
        %v3298 = vadd.f32 %v2261, %v3244
        %v3299 = vadd.f32 %v2263, %v3246
        %v3300 = vadd.f32 %v1894, %v2877
        %v3301 = vadd.f32 %v1896, %v2879
        %v3302 = vadd.f32 %v1947, %v2930
        %v3303 = vadd.f32 %v1949, %v2932
        %v3304 = vadd.f32 %v2000, %v2983
        %v3305 = vadd.f32 %v2002, %v2985
        %v3306 = vadd.f32 %v2053, %v3036
        %v3307 = vadd.f32 %v2055, %v3038
        %v3308 = vadd.f32 %v2106, %v3089
        %v3309 = vadd.f32 %v2108, %v3091
        %v3310 = vadd.f32 %v2159, %v3142
        %v3311 = vadd.f32 %v2161, %v3144
        %v3312 = vadd.f32 %v2212, %v3195
        %v3313 = vadd.f32 %v2214, %v3197
        %v3314 = vadd.f32 %v2265, %v3248
        %v3315 = vadd.f32 %v2267, %v3250
        %v3316 = vld [vmem:[%s3] sm:$0xff]
        %v3317 = vld [vmem:[%s3 + $0x8] sm:$0xff]
        %v3320 = vlaneseq
        %v3321 = vshrl.u32 %v3320, 7
        %v3322 = vsub.s32 0, %v3321
        %v3323 = vrot.slane %v3316, %v3322
        %v3324 = vlaneseq
        %v3325 = vshrl.u32 %v3324, 7
        %v3326 = vsub.s32 1, %v3325
        %v3327 = vrot.slane %v3316, %v3326
        %v3328 = vlaneseq
        %v3329 = vshrl.u32 %v3328, 7
        %v3330 = vsub.s32 2, %v3329
        %v3331 = vrot.slane %v3316, %v3330
        %v3332 = vlaneseq
        %v3333 = vshrl.u32 %v3332, 7
        %v3334 = vsub.s32 3, %v3333
        %v3335 = vrot.slane %v3316, %v3334
        %v3336 = vlaneseq
        %v3337 = vshrl.u32 %v3336, 7
        %v3338 = vsub.s32 4, %v3337
        %v3339 = vrot.slane %v3316, %v3338
        %v3340 = vlaneseq
        %v3341 = vshrl.u32 %v3340, 7
        %v3342 = vsub.s32 5, %v3341
        %v3343 = vrot.slane %v3316, %v3342
        %v3344 = vlaneseq
        %v3345 = vshrl.u32 %v3344, 7
        %v3346 = vsub.s32 6, %v3345
        %v3347 = vrot.slane %v3316, %v3346
        %v3348 = vlaneseq
        %v3349 = vshrl.u32 %v3348, 7
        %v3350 = vsub.s32 7, %v3349
        %v3351 = vrot.slane %v3316, %v3350
        %v3352 = vlaneseq
        %v3353 = vshrl.u32 %v3352, 7
        %v3354 = vsub.s32 0, %v3353
        %v3355 = vrot.slane %v3317, %v3354
        %v3356 = vlaneseq
        %v3357 = vshrl.u32 %v3356, 7
        %v3358 = vsub.s32 1, %v3357
        %v3359 = vrot.slane %v3317, %v3358
        %v3360 = vlaneseq
        %v3361 = vshrl.u32 %v3360, 7
        %v3362 = vsub.s32 2, %v3361
        %v3363 = vrot.slane %v3317, %v3362
        %v3364 = vlaneseq
        %v3365 = vshrl.u32 %v3364, 7
        %v3366 = vsub.s32 3, %v3365
        %v3367 = vrot.slane %v3317, %v3366
        %v3368 = vlaneseq
        %v3369 = vshrl.u32 %v3368, 7
        %v3370 = vsub.s32 4, %v3369
        %v3371 = vrot.slane %v3317, %v3370
        %v3372 = vlaneseq
        %v3373 = vshrl.u32 %v3372, 7
        %v3374 = vsub.s32 5, %v3373
        %v3375 = vrot.slane %v3317, %v3374
        %v3376 = vlaneseq
        %v3377 = vshrl.u32 %v3376, 7
        %v3378 = vsub.s32 6, %v3377
        %v3379 = vrot.slane %v3317, %v3378
        %v3380 = vlaneseq
        %v3381 = vshrl.u32 %v3380, 7
        %v3382 = vsub.s32 7, %v3381
        %v3383 = vrot.slane %v3317, %v3382
        %v3400 = vadd.f32 %v3252, %v3323
        %v3401 = vadd.f32 %v3253, %v3327
        %v3402 = vadd.f32 %v3254, %v3331
        %v3403 = vadd.f32 %v3255, %v3335
        %v3404 = vadd.f32 %v3256, %v3339
        %v3405 = vadd.f32 %v3257, %v3343
        %v3406 = vadd.f32 %v3258, %v3347
        %v3407 = vadd.f32 %v3259, %v3351
        %v3408 = vadd.f32 %v3260, %v3355
        %v3409 = vadd.f32 %v3261, %v3359
        %v3410 = vadd.f32 %v3262, %v3363
        %v3411 = vadd.f32 %v3263, %v3367
        %v3412 = vadd.f32 %v3264, %v3371
        %v3413 = vadd.f32 %v3265, %v3375
        %v3414 = vadd.f32 %v3266, %v3379
        %v3415 = vadd.f32 %v3267, %v3383
        %v3416 = vadd.f32 %v3268, %v3323
        %v3417 = vadd.f32 %v3269, %v3327
        %v3418 = vadd.f32 %v3270, %v3331
        %v3419 = vadd.f32 %v3271, %v3335
        %v3420 = vadd.f32 %v3272, %v3339
        %v3421 = vadd.f32 %v3273, %v3343
        %v3422 = vadd.f32 %v3274, %v3347
        %v3423 = vadd.f32 %v3275, %v3351
        %v3424 = vadd.f32 %v3276, %v3355
        %v3425 = vadd.f32 %v3277, %v3359
        %v3426 = vadd.f32 %v3278, %v3363
        %v3427 = vadd.f32 %v3279, %v3367
        %v3428 = vadd.f32 %v3280, %v3371
        %v3429 = vadd.f32 %v3281, %v3375
        %v3430 = vadd.f32 %v3282, %v3379
        %v3431 = vadd.f32 %v3283, %v3383
        %v3432 = vadd.f32 %v3284, %v3323
        %v3433 = vadd.f32 %v3285, %v3327
        %v3434 = vadd.f32 %v3286, %v3331
        %v3435 = vadd.f32 %v3287, %v3335
        %v3436 = vadd.f32 %v3288, %v3339
        %v3437 = vadd.f32 %v3289, %v3343
        %v3438 = vadd.f32 %v3290, %v3347
        %v3439 = vadd.f32 %v3291, %v3351
        %v3440 = vadd.f32 %v3292, %v3355
        %v3441 = vadd.f32 %v3293, %v3359
        %v3442 = vadd.f32 %v3294, %v3363
        %v3443 = vadd.f32 %v3295, %v3367
        %v3444 = vadd.f32 %v3296, %v3371
        %v3445 = vadd.f32 %v3297, %v3375
        %v3446 = vadd.f32 %v3298, %v3379
        %v3447 = vadd.f32 %v3299, %v3383
        %v3448 = vadd.f32 %v3300, %v3323
        %v3449 = vadd.f32 %v3301, %v3327
        %v3450 = vadd.f32 %v3302, %v3331
        %v3451 = vadd.f32 %v3303, %v3335
        %v3452 = vadd.f32 %v3304, %v3339
        %v3453 = vadd.f32 %v3305, %v3343
        %v3454 = vadd.f32 %v3306, %v3347
        %v3455 = vadd.f32 %v3307, %v3351
        %v3456 = vadd.f32 %v3308, %v3355
        %v3457 = vadd.f32 %v3309, %v3359
        %v3458 = vadd.f32 %v3310, %v3363
        %v3459 = vadd.f32 %v3311, %v3367
        %v3460 = vadd.f32 %v3312, %v3371
        %v3461 = vadd.f32 %v3313, %v3375
        %v3462 = vadd.f32 %v3314, %v3379
        %v3463 = vadd.f32 %v3315, %v3383
        %v3464 = vmax.f32 %v3400, 0.0
        %v3465 = vmax.f32 %v3401, 0.0
        %v3466 = vmax.f32 %v3402, 0.0
        %v3467 = vmax.f32 %v3403, 0.0
        %v3468 = vmax.f32 %v3404, 0.0
        %v3469 = vmax.f32 %v3405, 0.0
        %v3470 = vmax.f32 %v3406, 0.0
        %v3471 = vmax.f32 %v3407, 0.0
        %v3472 = vmax.f32 %v3408, 0.0
        %v3473 = vmax.f32 %v3409, 0.0
        %v3474 = vmax.f32 %v3410, 0.0
        %v3475 = vmax.f32 %v3411, 0.0
        %v3476 = vmax.f32 %v3412, 0.0
        %v3477 = vmax.f32 %v3413, 0.0
        %v3478 = vmax.f32 %v3414, 0.0
        %v3479 = vmax.f32 %v3415, 0.0
        %v3480 = vmax.f32 %v3416, 0.0
        %v3481 = vmax.f32 %v3417, 0.0
        %v3482 = vmax.f32 %v3418, 0.0
        %v3483 = vmax.f32 %v3419, 0.0
        %v3484 = vmax.f32 %v3420, 0.0
        %v3485 = vmax.f32 %v3421, 0.0
        %v3486 = vmax.f32 %v3422, 0.0
        %v3487 = vmax.f32 %v3423, 0.0
        %v3488 = vmax.f32 %v3424, 0.0
        %v3489 = vmax.f32 %v3425, 0.0
        %v3490 = vmax.f32 %v3426, 0.0
        %v3491 = vmax.f32 %v3427, 0.0
        %v3492 = vmax.f32 %v3428, 0.0
        %v3493 = vmax.f32 %v3429, 0.0
        %v3494 = vmax.f32 %v3430, 0.0
        %v3495 = vmax.f32 %v3431, 0.0
        %v3496 = vmax.f32 %v3432, 0.0
        %v3497 = vmax.f32 %v3433, 0.0
        %v3498 = vmax.f32 %v3434, 0.0
        %v3499 = vmax.f32 %v3435, 0.0
        %v3500 = vmax.f32 %v3436, 0.0
        %v3501 = vmax.f32 %v3437, 0.0
        %v3502 = vmax.f32 %v3438, 0.0
        %v3503 = vmax.f32 %v3439, 0.0
        %v3504 = vmax.f32 %v3440, 0.0
        %v3505 = vmax.f32 %v3441, 0.0
        %v3506 = vmax.f32 %v3442, 0.0
        %v3507 = vmax.f32 %v3443, 0.0
        %v3508 = vmax.f32 %v3444, 0.0
        %v3509 = vmax.f32 %v3445, 0.0
        %v3510 = vmax.f32 %v3446, 0.0
        %v3511 = vmax.f32 %v3447, 0.0
        %v3512 = vmax.f32 %v3448, 0.0
        %v3513 = vmax.f32 %v3449, 0.0
        %v3514 = vmax.f32 %v3450, 0.0
        %v3515 = vmax.f32 %v3451, 0.0
        %v3516 = vmax.f32 %v3452, 0.0
        %v3517 = vmax.f32 %v3453, 0.0
        %v3518 = vmax.f32 %v3454, 0.0
        %v3519 = vmax.f32 %v3455, 0.0
        %v3520 = vmax.f32 %v3456, 0.0
        %v3521 = vmax.f32 %v3457, 0.0
        %v3522 = vmax.f32 %v3458, 0.0
        %v3523 = vmax.f32 %v3459, 0.0
        %v3524 = vmax.f32 %v3460, 0.0
        %v3525 = vmax.f32 %v3461, 0.0
        %v3526 = vmax.f32 %v3462, 0.0
        %v3527 = vmax.f32 %v3463, 0.0
        %v3528 = vld [vmem:[%s4] sm:$0x3]
        %vm3529 = vcmask 261120
        %v3531 = vsel %vm3529, %v3528, 0
        %3533 = vmatprep.subr.mxu0 0.0
        %3534 = vmatpush1.msra.mxu0 0.0
        %3535 = vmatprep.subr.mxu0 0.0
        %3536 = vmatpush1.msra.mxu0 0.0
        %3537 = vmatprep.subr.mxu0 0.0
        %3538 = vmatpush1.msra.mxu0 0.0
        %3539 = vmatprep.subr.mxu0 0.0
        %3540 = vmatpush1.msra.mxu0 0.0
        %3541 = vmatprep.subr.mxu0 0.0
        %3542 = vmatpush1.msra.mxu0 0.0
        %3543 = vmatprep.subr.mxu0 0.0
        %3544 = vmatpush1.msra.mxu0 0.0
        %3545 = vmatprep.subr.mxu0 0.0
        %3546 = vmatpush1.msra.mxu0 0.0
        %3547 = vmatprep.subr.mxu0 0.0
        %3548 = vmatpush1.msra.mxu0 0.0
        %3549 = vmatprep.subr.mxu0 0.0
        %3550 = vmatpush1.msra.mxu0 0.0
        %3551 = vmatprep.subr.mxu0 0.0
        %3552 = vmatpush1.msra.mxu0 0.0
        %3553 = vmatprep.subr.mxu0 0.0
        %3554 = vmatpush1.msra.mxu0 0.0
        %3555 = vmatprep.subr.mxu0 0.0
        %3556 = vmatpush1.msra.mxu0 0.0
        %3557 = vmatprep.subr.mxu0 %v3513
        %3558 = vmatpush1.msra.mxu0 %v3512
        %3559 = vmatprep.subr.mxu0 %v3497
        %3560 = vmatpush1.msra.mxu0 %v3496
        %3561 = vmatprep.subr.mxu0 %v3481
        %3562 = vmatpush1.msra.mxu0 %v3480
        %3563 = vmatprep.subr.mxu0 %v3465
        %3564 = vmatpush1.msra.mxu0 %v3464
        %3565 = vmatprep.subr.mxu0 0.0
        %3566 = vmatpush2.msra.mxu0 0.0
        %3567 = vmatprep.subr.mxu0 0.0
        %3568 = vmatpush2.msra.mxu0 0.0
        %3569 = vmatprep.subr.mxu0 0.0
        %3570 = vmatpush2.msra.mxu0 0.0
        %3571 = vmatprep.subr.mxu0 0.0
        %3572 = vmatpush2.msra.mxu0 0.0
        %3573 = vmatprep.subr.mxu0 0.0
        %3574 = vmatpush2.msra.mxu0 0.0
        %3575 = vmatprep.subr.mxu0 0.0
        %3576 = vmatpush2.msra.mxu0 0.0
        %3577 = vmatprep.subr.mxu0 0.0
        %3578 = vmatpush2.msra.mxu0 0.0
        %3579 = vmatprep.subr.mxu0 0.0
        %3580 = vmatpush2.msra.mxu0 0.0
        %3581 = vmatprep.subr.mxu0 0.0
        %3582 = vmatpush2.msra.mxu0 0.0
        %3583 = vmatprep.subr.mxu0 0.0
        %3584 = vmatpush2.msra.mxu0 0.0
        %3585 = vmatprep.subr.mxu0 0.0
        %3586 = vmatpush2.msra.mxu0 0.0
        %3587 = vmatprep.subr.mxu0 0.0
        %3588 = vmatpush2.msra.mxu0 0.0
        %3589 = vmatprep.subr.mxu0 0.0
        %3590 = vmatpush2.msra.mxu0 0.0
        %3591 = vmatprep.subr.mxu0 0.0
        %3592 = vmatpush2.msra.mxu0 0.0
        %3593 = vmatprep.subr.mxu0 0.0
        %3594 = vmatpush2.msra.mxu0 0.0
        %3595 = vmatprep.subr.mxu0 0.0
        %3596 = vmatpush2.msra.mxu0 0.0
        %3597 = vmatprep.mubr.f32.mxu0 0.0
        %3598 = vmatmul.mubr.f32.gmra.mxu0 %v3531
        %v3599 = vpop.f32.mrf.mxu0
        %v3600 = vadd.f32 0.0, %v3599
        %v3601 = vpop.f32.mrf.mxu0
        %v3602 = vadd.f32 0.0, %v3601
        %3603 = vdwg.mxu0
        %3604 = vmatprep.subr.mxu0 0.0
        %3605 = vmatpush1.msra.mxu0 0.0
        %3606 = vmatprep.subr.mxu0 0.0
        %3607 = vmatpush1.msra.mxu0 0.0
        %3608 = vmatprep.subr.mxu0 0.0
        %3609 = vmatpush1.msra.mxu0 0.0
        %3610 = vmatprep.subr.mxu0 0.0
        %3611 = vmatpush1.msra.mxu0 0.0
        %3612 = vmatprep.subr.mxu0 0.0
        %3613 = vmatpush1.msra.mxu0 0.0
        %3614 = vmatprep.subr.mxu0 0.0
        %3615 = vmatpush1.msra.mxu0 0.0
        %3616 = vmatprep.subr.mxu0 0.0
        %3617 = vmatpush1.msra.mxu0 0.0
        %3618 = vmatprep.subr.mxu0 0.0
        %3619 = vmatpush1.msra.mxu0 0.0
        %3620 = vmatprep.subr.mxu0 0.0
        %3621 = vmatpush1.msra.mxu0 0.0
        %3622 = vmatprep.subr.mxu0 0.0
        %3623 = vmatpush1.msra.mxu0 0.0
        %3624 = vmatprep.subr.mxu0 0.0
        %3625 = vmatpush1.msra.mxu0 0.0
        %3626 = vmatprep.subr.mxu0 0.0
        %3627 = vmatpush1.msra.mxu0 0.0
        %3628 = vmatprep.subr.mxu0 %v3515
        %3629 = vmatpush1.msra.mxu0 %v3514
        %3630 = vmatprep.subr.mxu0 %v3499
        %3631 = vmatpush1.msra.mxu0 %v3498
        %3632 = vmatprep.subr.mxu0 %v3483
        %3633 = vmatpush1.msra.mxu0 %v3482
        %3634 = vmatprep.subr.mxu0 %v3467
        %3635 = vmatpush1.msra.mxu0 %v3466
        %3636 = vmatprep.subr.mxu0 0.0
        %3637 = vmatpush2.msra.mxu0 0.0
        %3638 = vmatprep.subr.mxu0 0.0
        %3639 = vmatpush2.msra.mxu0 0.0
        %3640 = vmatprep.subr.mxu0 0.0
        %3641 = vmatpush2.msra.mxu0 0.0
        %3642 = vmatprep.subr.mxu0 0.0
        %3643 = vmatpush2.msra.mxu0 0.0
        %3644 = vmatprep.subr.mxu0 0.0
        %3645 = vmatpush2.msra.mxu0 0.0
        %3646 = vmatprep.subr.mxu0 0.0
        %3647 = vmatpush2.msra.mxu0 0.0
        %3648 = vmatprep.subr.mxu0 0.0
        %3649 = vmatpush2.msra.mxu0 0.0
        %3650 = vmatprep.subr.mxu0 0.0
        %3651 = vmatpush2.msra.mxu0 0.0
        %3652 = vmatprep.subr.mxu0 0.0
        %3653 = vmatpush2.msra.mxu0 0.0
        %3654 = vmatprep.subr.mxu0 0.0
        %3655 = vmatpush2.msra.mxu0 0.0
        %3656 = vmatprep.subr.mxu0 0.0
        %3657 = vmatpush2.msra.mxu0 0.0
        %3658 = vmatprep.subr.mxu0 0.0
        %3659 = vmatpush2.msra.mxu0 0.0
        %3660 = vmatprep.subr.mxu0 0.0
        %3661 = vmatpush2.msra.mxu0 0.0
        %3662 = vmatprep.subr.mxu0 0.0
        %3663 = vmatpush2.msra.mxu0 0.0
        %3664 = vmatprep.subr.mxu0 0.0
        %3665 = vmatpush2.msra.mxu0 0.0
        %3666 = vmatprep.subr.mxu0 0.0
        %3667 = vmatpush2.msra.mxu0 0.0
        %3668 = vmatprep.mubr.f32.mxu0 0.0
        %3669 = vmatmul.mubr.f32.gmra.mxu0 %v3531
        %v3670 = vpop.f32.mrf.mxu0
        %v3671 = vadd.f32 0.0, %v3670
        %v3672 = vpop.f32.mrf.mxu0
        %v3673 = vadd.f32 0.0, %v3672
        %3674 = vdwg.mxu0
        %3675 = vmatprep.subr.mxu0 0.0
        %3676 = vmatpush1.msra.mxu0 0.0
        %3677 = vmatprep.subr.mxu0 0.0
        %3678 = vmatpush1.msra.mxu0 0.0
        %3679 = vmatprep.subr.mxu0 0.0
        %3680 = vmatpush1.msra.mxu0 0.0
        %3681 = vmatprep.subr.mxu0 0.0
        %3682 = vmatpush1.msra.mxu0 0.0
        %3683 = vmatprep.subr.mxu0 0.0
        %3684 = vmatpush1.msra.mxu0 0.0
        %3685 = vmatprep.subr.mxu0 0.0
        %3686 = vmatpush1.msra.mxu0 0.0
        %3687 = vmatprep.subr.mxu0 0.0
        %3688 = vmatpush1.msra.mxu0 0.0
        %3689 = vmatprep.subr.mxu0 0.0
        %3690 = vmatpush1.msra.mxu0 0.0
        %3691 = vmatprep.subr.mxu0 0.0
        %3692 = vmatpush1.msra.mxu0 0.0
        %3693 = vmatprep.subr.mxu0 0.0
        %3694 = vmatpush1.msra.mxu0 0.0
        %3695 = vmatprep.subr.mxu0 0.0
        %3696 = vmatpush1.msra.mxu0 0.0
        %3697 = vmatprep.subr.mxu0 0.0
        %3698 = vmatpush1.msra.mxu0 0.0
        %3699 = vmatprep.subr.mxu0 %v3517
        %3700 = vmatpush1.msra.mxu0 %v3516
        %3701 = vmatprep.subr.mxu0 %v3501
        %3702 = vmatpush1.msra.mxu0 %v3500
        %3703 = vmatprep.subr.mxu0 %v3485
        %3704 = vmatpush1.msra.mxu0 %v3484
        %3705 = vmatprep.subr.mxu0 %v3469
        %3706 = vmatpush1.msra.mxu0 %v3468
        %3707 = vmatprep.subr.mxu0 0.0
        %3708 = vmatpush2.msra.mxu0 0.0
        %3709 = vmatprep.subr.mxu0 0.0
        %3710 = vmatpush2.msra.mxu0 0.0
        %3711 = vmatprep.subr.mxu0 0.0
        %3712 = vmatpush2.msra.mxu0 0.0
        %3713 = vmatprep.subr.mxu0 0.0
        %3714 = vmatpush2.msra.mxu0 0.0
        %3715 = vmatprep.subr.mxu0 0.0
        %3716 = vmatpush2.msra.mxu0 0.0
        %3717 = vmatprep.subr.mxu0 0.0
        %3718 = vmatpush2.msra.mxu0 0.0
        %3719 = vmatprep.subr.mxu0 0.0
        %3720 = vmatpush2.msra.mxu0 0.0
        %3721 = vmatprep.subr.mxu0 0.0
        %3722 = vmatpush2.msra.mxu0 0.0
        %3723 = vmatprep.subr.mxu0 0.0
        %3724 = vmatpush2.msra.mxu0 0.0
        %3725 = vmatprep.subr.mxu0 0.0
        %3726 = vmatpush2.msra.mxu0 0.0
        %3727 = vmatprep.subr.mxu0 0.0
        %3728 = vmatpush2.msra.mxu0 0.0
        %3729 = vmatprep.subr.mxu0 0.0
        %3730 = vmatpush2.msra.mxu0 0.0
        %3731 = vmatprep.subr.mxu0 0.0
        %3732 = vmatpush2.msra.mxu0 0.0
        %3733 = vmatprep.subr.mxu0 0.0
        %3734 = vmatpush2.msra.mxu0 0.0
        %3735 = vmatprep.subr.mxu0 0.0
        %3736 = vmatpush2.msra.mxu0 0.0
        %3737 = vmatprep.subr.mxu0 0.0
        %3738 = vmatpush2.msra.mxu0 0.0
        %3739 = vmatprep.mubr.f32.mxu0 0.0
        %3740 = vmatmul.mubr.f32.gmra.mxu0 %v3531
        %v3741 = vpop.f32.mrf.mxu0
        %v3742 = vadd.f32 0.0, %v3741
        %v3743 = vpop.f32.mrf.mxu0
        %v3744 = vadd.f32 0.0, %v3743
        %3745 = vdwg.mxu0
        %3746 = vmatprep.subr.mxu0 0.0
        %3747 = vmatpush1.msra.mxu0 0.0
        %3748 = vmatprep.subr.mxu0 0.0
        %3749 = vmatpush1.msra.mxu0 0.0
        %3750 = vmatprep.subr.mxu0 0.0
        %3751 = vmatpush1.msra.mxu0 0.0
        %3752 = vmatprep.subr.mxu0 0.0
        %3753 = vmatpush1.msra.mxu0 0.0
        %3754 = vmatprep.subr.mxu0 0.0
        %3755 = vmatpush1.msra.mxu0 0.0
        %3756 = vmatprep.subr.mxu0 0.0
        %3757 = vmatpush1.msra.mxu0 0.0
        %3758 = vmatprep.subr.mxu0 0.0
        %3759 = vmatpush1.msra.mxu0 0.0
        %3760 = vmatprep.subr.mxu0 0.0
        %3761 = vmatpush1.msra.mxu0 0.0
        %3762 = vmatprep.subr.mxu0 0.0
        %3763 = vmatpush1.msra.mxu0 0.0
        %3764 = vmatprep.subr.mxu0 0.0
        %3765 = vmatpush1.msra.mxu0 0.0
        %3766 = vmatprep.subr.mxu0 0.0
        %3767 = vmatpush1.msra.mxu0 0.0
        %3768 = vmatprep.subr.mxu0 0.0
        %3769 = vmatpush1.msra.mxu0 0.0
        %3770 = vmatprep.subr.mxu0 %v3519
        %3771 = vmatpush1.msra.mxu0 %v3518
        %3772 = vmatprep.subr.mxu0 %v3503
        %3773 = vmatpush1.msra.mxu0 %v3502
        %3774 = vmatprep.subr.mxu0 %v3487
        %3775 = vmatpush1.msra.mxu0 %v3486
        %3776 = vmatprep.subr.mxu0 %v3471
        %3777 = vmatpush1.msra.mxu0 %v3470
        %3778 = vmatprep.subr.mxu0 0.0
        %3779 = vmatpush2.msra.mxu0 0.0
        %3780 = vmatprep.subr.mxu0 0.0
        %3781 = vmatpush2.msra.mxu0 0.0
        %3782 = vmatprep.subr.mxu0 0.0
        %3783 = vmatpush2.msra.mxu0 0.0
        %3784 = vmatprep.subr.mxu0 0.0
        %3785 = vmatpush2.msra.mxu0 0.0
        %3786 = vmatprep.subr.mxu0 0.0
        %3787 = vmatpush2.msra.mxu0 0.0
        %3788 = vmatprep.subr.mxu0 0.0
        %3789 = vmatpush2.msra.mxu0 0.0
        %3790 = vmatprep.subr.mxu0 0.0
        %3791 = vmatpush2.msra.mxu0 0.0
        %3792 = vmatprep.subr.mxu0 0.0
        %3793 = vmatpush2.msra.mxu0 0.0
        %3794 = vmatprep.subr.mxu0 0.0
        %3795 = vmatpush2.msra.mxu0 0.0
        %3796 = vmatprep.subr.mxu0 0.0
        %3797 = vmatpush2.msra.mxu0 0.0
        %3798 = vmatprep.subr.mxu0 0.0
        %3799 = vmatpush2.msra.mxu0 0.0
        %3800 = vmatprep.subr.mxu0 0.0
        %3801 = vmatpush2.msra.mxu0 0.0
        %3802 = vmatprep.subr.mxu0 0.0
        %3803 = vmatpush2.msra.mxu0 0.0
        %3804 = vmatprep.subr.mxu0 0.0
        %3805 = vmatpush2.msra.mxu0 0.0
        %3806 = vmatprep.subr.mxu0 0.0
        %3807 = vmatpush2.msra.mxu0 0.0
        %3808 = vmatprep.subr.mxu0 0.0
        %3809 = vmatpush2.msra.mxu0 0.0
        %3810 = vmatprep.mubr.f32.mxu0 0.0
        %3811 = vmatmul.mubr.f32.gmra.mxu0 %v3531
        %v3812 = vpop.f32.mrf.mxu0
        %v3813 = vadd.f32 0.0, %v3812
        %v3814 = vpop.f32.mrf.mxu0
        %v3815 = vadd.f32 0.0, %v3814
        %3816 = vdwg.mxu0
        %3817 = vmatprep.subr.mxu0 0.0
        %3818 = vmatpush1.msra.mxu0 0.0
        %3819 = vmatprep.subr.mxu0 0.0
        %3820 = vmatpush1.msra.mxu0 0.0
        %3821 = vmatprep.subr.mxu0 0.0
        %3822 = vmatpush1.msra.mxu0 0.0
        %3823 = vmatprep.subr.mxu0 0.0
        %3824 = vmatpush1.msra.mxu0 0.0
        %3825 = vmatprep.subr.mxu0 0.0
        %3826 = vmatpush1.msra.mxu0 0.0
        %3827 = vmatprep.subr.mxu0 0.0
        %3828 = vmatpush1.msra.mxu0 0.0
        %3829 = vmatprep.subr.mxu0 0.0
        %3830 = vmatpush1.msra.mxu0 0.0
        %3831 = vmatprep.subr.mxu0 0.0
        %3832 = vmatpush1.msra.mxu0 0.0
        %3833 = vmatprep.subr.mxu0 0.0
        %3834 = vmatpush1.msra.mxu0 0.0
        %3835 = vmatprep.subr.mxu0 0.0
        %3836 = vmatpush1.msra.mxu0 0.0
        %3837 = vmatprep.subr.mxu0 0.0
        %3838 = vmatpush1.msra.mxu0 0.0
        %3839 = vmatprep.subr.mxu0 0.0
        %3840 = vmatpush1.msra.mxu0 0.0
        %3841 = vmatprep.subr.mxu0 %v3521
        %3842 = vmatpush1.msra.mxu0 %v3520
        %3843 = vmatprep.subr.mxu0 %v3505
        %3844 = vmatpush1.msra.mxu0 %v3504
        %3845 = vmatprep.subr.mxu0 %v3489
        %3846 = vmatpush1.msra.mxu0 %v3488
        %3847 = vmatprep.subr.mxu0 %v3473
        %3848 = vmatpush1.msra.mxu0 %v3472
        %3849 = vmatprep.subr.mxu0 0.0
        %3850 = vmatpush2.msra.mxu0 0.0
        %3851 = vmatprep.subr.mxu0 0.0
        %3852 = vmatpush2.msra.mxu0 0.0
        %3853 = vmatprep.subr.mxu0 0.0
        %3854 = vmatpush2.msra.mxu0 0.0
        %3855 = vmatprep.subr.mxu0 0.0
        %3856 = vmatpush2.msra.mxu0 0.0
        %3857 = vmatprep.subr.mxu0 0.0
        %3858 = vmatpush2.msra.mxu0 0.0
        %3859 = vmatprep.subr.mxu0 0.0
        %3860 = vmatpush2.msra.mxu0 0.0
        %3861 = vmatprep.subr.mxu0 0.0
        %3862 = vmatpush2.msra.mxu0 0.0
        %3863 = vmatprep.subr.mxu0 0.0
        %3864 = vmatpush2.msra.mxu0 0.0
        %3865 = vmatprep.subr.mxu0 0.0
        %3866 = vmatpush2.msra.mxu0 0.0
        %3867 = vmatprep.subr.mxu0 0.0
        %3868 = vmatpush2.msra.mxu0 0.0
        %3869 = vmatprep.subr.mxu0 0.0
        %3870 = vmatpush2.msra.mxu0 0.0
        %3871 = vmatprep.subr.mxu0 0.0
        %3872 = vmatpush2.msra.mxu0 0.0
        %3873 = vmatprep.subr.mxu0 0.0
        %3874 = vmatpush2.msra.mxu0 0.0
        %3875 = vmatprep.subr.mxu0 0.0
        %3876 = vmatpush2.msra.mxu0 0.0
        %3877 = vmatprep.subr.mxu0 0.0
        %3878 = vmatpush2.msra.mxu0 0.0
        %3879 = vmatprep.subr.mxu0 0.0
        %3880 = vmatpush2.msra.mxu0 0.0
        %3881 = vmatprep.mubr.f32.mxu0 0.0
        %3882 = vmatmul.mubr.f32.gmra.mxu0 %v3531
        %v3883 = vpop.f32.mrf.mxu0
        %v3884 = vadd.f32 0.0, %v3883
        %v3885 = vpop.f32.mrf.mxu0
        %v3886 = vadd.f32 0.0, %v3885
        %3887 = vdwg.mxu0
        %3888 = vmatprep.subr.mxu0 0.0
        %3889 = vmatpush1.msra.mxu0 0.0
        %3890 = vmatprep.subr.mxu0 0.0
        %3891 = vmatpush1.msra.mxu0 0.0
        %3892 = vmatprep.subr.mxu0 0.0
        %3893 = vmatpush1.msra.mxu0 0.0
        %3894 = vmatprep.subr.mxu0 0.0
        %3895 = vmatpush1.msra.mxu0 0.0
        %3896 = vmatprep.subr.mxu0 0.0
        %3897 = vmatpush1.msra.mxu0 0.0
        %3898 = vmatprep.subr.mxu0 0.0
        %3899 = vmatpush1.msra.mxu0 0.0
        %3900 = vmatprep.subr.mxu0 0.0
        %3901 = vmatpush1.msra.mxu0 0.0
        %3902 = vmatprep.subr.mxu0 0.0
        %3903 = vmatpush1.msra.mxu0 0.0
        %3904 = vmatprep.subr.mxu0 0.0
        %3905 = vmatpush1.msra.mxu0 0.0
        %3906 = vmatprep.subr.mxu0 0.0
        %3907 = vmatpush1.msra.mxu0 0.0
        %3908 = vmatprep.subr.mxu0 0.0
        %3909 = vmatpush1.msra.mxu0 0.0
        %3910 = vmatprep.subr.mxu0 0.0
        %3911 = vmatpush1.msra.mxu0 0.0
        %3912 = vmatprep.subr.mxu0 %v3523
        %3913 = vmatpush1.msra.mxu0 %v3522
        %3914 = vmatprep.subr.mxu0 %v3507
        %3915 = vmatpush1.msra.mxu0 %v3506
        %3916 = vmatprep.subr.mxu0 %v3491
        %3917 = vmatpush1.msra.mxu0 %v3490
        %3918 = vmatprep.subr.mxu0 %v3475
        %3919 = vmatpush1.msra.mxu0 %v3474
        %3920 = vmatprep.subr.mxu0 0.0
        %3921 = vmatpush2.msra.mxu0 0.0
        %3922 = vmatprep.subr.mxu0 0.0
        %3923 = vmatpush2.msra.mxu0 0.0
        %3924 = vmatprep.subr.mxu0 0.0
        %3925 = vmatpush2.msra.mxu0 0.0
        %3926 = vmatprep.subr.mxu0 0.0
        %3927 = vmatpush2.msra.mxu0 0.0
        %3928 = vmatprep.subr.mxu0 0.0
        %3929 = vmatpush2.msra.mxu0 0.0
        %3930 = vmatprep.subr.mxu0 0.0
        %3931 = vmatpush2.msra.mxu0 0.0
        %3932 = vmatprep.subr.mxu0 0.0
        %3933 = vmatpush2.msra.mxu0 0.0
        %3934 = vmatprep.subr.mxu0 0.0
        %3935 = vmatpush2.msra.mxu0 0.0
        %3936 = vmatprep.subr.mxu0 0.0
        %3937 = vmatpush2.msra.mxu0 0.0
        %3938 = vmatprep.subr.mxu0 0.0
        %3939 = vmatpush2.msra.mxu0 0.0
        %3940 = vmatprep.subr.mxu0 0.0
        %3941 = vmatpush2.msra.mxu0 0.0
        %3942 = vmatprep.subr.mxu0 0.0
        %3943 = vmatpush2.msra.mxu0 0.0
        %3944 = vmatprep.subr.mxu0 0.0
        %3945 = vmatpush2.msra.mxu0 0.0
        %3946 = vmatprep.subr.mxu0 0.0
        %3947 = vmatpush2.msra.mxu0 0.0
        %3948 = vmatprep.subr.mxu0 0.0
        %3949 = vmatpush2.msra.mxu0 0.0
        %3950 = vmatprep.subr.mxu0 0.0
        %3951 = vmatpush2.msra.mxu0 0.0
        %3952 = vmatprep.mubr.f32.mxu0 0.0
        %3953 = vmatmul.mubr.f32.gmra.mxu0 %v3531
        %v3954 = vpop.f32.mrf.mxu0
        %v3955 = vadd.f32 0.0, %v3954
        %v3956 = vpop.f32.mrf.mxu0
        %v3957 = vadd.f32 0.0, %v3956
        %3958 = vdwg.mxu0
        %3959 = vmatprep.subr.mxu0 0.0
        %3960 = vmatpush1.msra.mxu0 0.0
        %3961 = vmatprep.subr.mxu0 0.0
        %3962 = vmatpush1.msra.mxu0 0.0
        %3963 = vmatprep.subr.mxu0 0.0
        %3964 = vmatpush1.msra.mxu0 0.0
        %3965 = vmatprep.subr.mxu0 0.0
        %3966 = vmatpush1.msra.mxu0 0.0
        %3967 = vmatprep.subr.mxu0 0.0
        %3968 = vmatpush1.msra.mxu0 0.0
        %3969 = vmatprep.subr.mxu0 0.0
        %3970 = vmatpush1.msra.mxu0 0.0
        %3971 = vmatprep.subr.mxu0 0.0
        %3972 = vmatpush1.msra.mxu0 0.0
        %3973 = vmatprep.subr.mxu0 0.0
        %3974 = vmatpush1.msra.mxu0 0.0
        %3975 = vmatprep.subr.mxu0 0.0
        %3976 = vmatpush1.msra.mxu0 0.0
        %3977 = vmatprep.subr.mxu0 0.0
        %3978 = vmatpush1.msra.mxu0 0.0
        %3979 = vmatprep.subr.mxu0 0.0
        %3980 = vmatpush1.msra.mxu0 0.0
        %3981 = vmatprep.subr.mxu0 0.0
        %3982 = vmatpush1.msra.mxu0 0.0
        %3983 = vmatprep.subr.mxu0 %v3525
        %3984 = vmatpush1.msra.mxu0 %v3524
        %3985 = vmatprep.subr.mxu0 %v3509
        %3986 = vmatpush1.msra.mxu0 %v3508
        %3987 = vmatprep.subr.mxu0 %v3493
        %3988 = vmatpush1.msra.mxu0 %v3492
        %3989 = vmatprep.subr.mxu0 %v3477
        %3990 = vmatpush1.msra.mxu0 %v3476
        %3991 = vmatprep.subr.mxu0 0.0
        %3992 = vmatpush2.msra.mxu0 0.0
        %3993 = vmatprep.subr.mxu0 0.0
        %3994 = vmatpush2.msra.mxu0 0.0
        %3995 = vmatprep.subr.mxu0 0.0
        %3996 = vmatpush2.msra.mxu0 0.0
        %3997 = vmatprep.subr.mxu0 0.0
        %3998 = vmatpush2.msra.mxu0 0.0
        %3999 = vmatprep.subr.mxu0 0.0
        %4000 = vmatpush2.msra.mxu0 0.0
        %4001 = vmatprep.subr.mxu0 0.0
        %4002 = vmatpush2.msra.mxu0 0.0
        %4003 = vmatprep.subr.mxu0 0.0
        %4004 = vmatpush2.msra.mxu0 0.0
        %4005 = vmatprep.subr.mxu0 0.0
        %4006 = vmatpush2.msra.mxu0 0.0
        %4007 = vmatprep.subr.mxu0 0.0
        %4008 = vmatpush2.msra.mxu0 0.0
        %4009 = vmatprep.subr.mxu0 0.0
        %4010 = vmatpush2.msra.mxu0 0.0
        %4011 = vmatprep.subr.mxu0 0.0
        %4012 = vmatpush2.msra.mxu0 0.0
        %4013 = vmatprep.subr.mxu0 0.0
        %4014 = vmatpush2.msra.mxu0 0.0
        %4015 = vmatprep.subr.mxu0 0.0
        %4016 = vmatpush2.msra.mxu0 0.0
        %4017 = vmatprep.subr.mxu0 0.0
        %4018 = vmatpush2.msra.mxu0 0.0
        %4019 = vmatprep.subr.mxu0 0.0
        %4020 = vmatpush2.msra.mxu0 0.0
        %4021 = vmatprep.subr.mxu0 0.0
        %4022 = vmatpush2.msra.mxu0 0.0
        %4023 = vmatprep.mubr.f32.mxu0 0.0
        %4024 = vmatmul.mubr.f32.gmra.mxu0 %v3531
        %v4025 = vpop.f32.mrf.mxu0
        %v4026 = vadd.f32 0.0, %v4025
        %v4027 = vpop.f32.mrf.mxu0
        %v4028 = vadd.f32 0.0, %v4027
        %4029 = vdwg.mxu0
        %4030 = vmatprep.subr.mxu0 0.0
        %4031 = vmatpush1.msra.mxu0 0.0
        %4032 = vmatprep.subr.mxu0 0.0
        %4033 = vmatpush1.msra.mxu0 0.0
        %4034 = vmatprep.subr.mxu0 0.0
        %4035 = vmatpush1.msra.mxu0 0.0
        %4036 = vmatprep.subr.mxu0 0.0
        %4037 = vmatpush1.msra.mxu0 0.0
        %4038 = vmatprep.subr.mxu0 0.0
        %4039 = vmatpush1.msra.mxu0 0.0
        %4040 = vmatprep.subr.mxu0 0.0
        %4041 = vmatpush1.msra.mxu0 0.0
        %4042 = vmatprep.subr.mxu0 0.0
        %4043 = vmatpush1.msra.mxu0 0.0
        %4044 = vmatprep.subr.mxu0 0.0
        %4045 = vmatpush1.msra.mxu0 0.0
        %4046 = vmatprep.subr.mxu0 0.0
        %4047 = vmatpush1.msra.mxu0 0.0
        %4048 = vmatprep.subr.mxu0 0.0
        %4049 = vmatpush1.msra.mxu0 0.0
        %4050 = vmatprep.subr.mxu0 0.0
        %4051 = vmatpush1.msra.mxu0 0.0
        %4052 = vmatprep.subr.mxu0 0.0
        %4053 = vmatpush1.msra.mxu0 0.0
        %4054 = vmatprep.subr.mxu0 %v3527
        %4055 = vmatpush1.msra.mxu0 %v3526
        %4056 = vmatprep.subr.mxu0 %v3511
        %4057 = vmatpush1.msra.mxu0 %v3510
        %4058 = vmatprep.subr.mxu0 %v3495
        %4059 = vmatpush1.msra.mxu0 %v3494
        %4060 = vmatprep.subr.mxu0 %v3479
        %4061 = vmatpush1.msra.mxu0 %v3478
        %4062 = vmatprep.subr.mxu0 0.0
        %4063 = vmatpush2.msra.mxu0 0.0
        %4064 = vmatprep.subr.mxu0 0.0
        %4065 = vmatpush2.msra.mxu0 0.0
        %4066 = vmatprep.subr.mxu0 0.0
        %4067 = vmatpush2.msra.mxu0 0.0
        %4068 = vmatprep.subr.mxu0 0.0
        %4069 = vmatpush2.msra.mxu0 0.0
        %4070 = vmatprep.subr.mxu0 0.0
        %4071 = vmatpush2.msra.mxu0 0.0
        %4072 = vmatprep.subr.mxu0 0.0
        %4073 = vmatpush2.msra.mxu0 0.0
        %4074 = vmatprep.subr.mxu0 0.0
        %4075 = vmatpush2.msra.mxu0 0.0
        %4076 = vmatprep.subr.mxu0 0.0
        %4077 = vmatpush2.msra.mxu0 0.0
        %4078 = vmatprep.subr.mxu0 0.0
        %4079 = vmatpush2.msra.mxu0 0.0
        %4080 = vmatprep.subr.mxu0 0.0
        %4081 = vmatpush2.msra.mxu0 0.0
        %4082 = vmatprep.subr.mxu0 0.0
        %4083 = vmatpush2.msra.mxu0 0.0
        %4084 = vmatprep.subr.mxu0 0.0
        %4085 = vmatpush2.msra.mxu0 0.0
        %4086 = vmatprep.subr.mxu0 0.0
        %4087 = vmatpush2.msra.mxu0 0.0
        %4088 = vmatprep.subr.mxu0 0.0
        %4089 = vmatpush2.msra.mxu0 0.0
        %4090 = vmatprep.subr.mxu0 0.0
        %4091 = vmatpush2.msra.mxu0 0.0
        %4092 = vmatprep.subr.mxu0 0.0
        %4093 = vmatpush2.msra.mxu0 0.0
        %4094 = vmatprep.mubr.f32.mxu0 0.0
        %4095 = vmatmul.mubr.f32.gmra.mxu0 %v3531
        %v4096 = vpop.f32.mrf.mxu0
        %v4097 = vadd.f32 0.0, %v4096
        %v4098 = vpop.f32.mrf.mxu0
        %v4099 = vadd.f32 0.0, %v4098
        %4100 = vdwg.mxu0
        %v4101 = vld [vmem:[%s5] sm:$0xff]
        %v4102 = vld [vmem:[%s5 + $0x8] sm:$0xff]
        %v4103 = vld [vmem:[%s5 + $0x10] sm:$0xff]
        %v4104 = vld [vmem:[%s5 + $0x18] sm:$0xff]
        %v4105 = vld [vmem:[%s5 + $0x20] sm:$0xff]
        %v4106 = vld [vmem:[%s5 + $0x28] sm:$0xff]
        %v4107 = vld [vmem:[%s5 + $0x30] sm:$0xff]
        %v4108 = vld [vmem:[%s5 + $0x38] sm:$0xff]
        %v4109 = vld [vmem:[%s5 + $0x40] sm:$0xff]
        %v4110 = vld [vmem:[%s5 + $0x48] sm:$0xff]
        %v4111 = vld [vmem:[%s5 + $0x50] sm:$0xff]
        %v4112 = vld [vmem:[%s5 + $0x58] sm:$0xff]
        %v4113 = vld [vmem:[%s5 + $0x60] sm:$0xff]
        %v4114 = vld [vmem:[%s5 + $0x68] sm:$0xff]
        %v4115 = vld [vmem:[%s5 + $0x70] sm:$0xff]
        %v4116 = vld [vmem:[%s5 + $0x78] sm:$0xff]
        %v4117 = vld [vmem:[%s5 + $0x80] sm:$0xff]
        %v4118 = vld [vmem:[%s5 + $0x88] sm:$0xff]
        %v4119 = vld [vmem:[%s5 + $0x90] sm:$0xff]
        %v4120 = vld [vmem:[%s5 + $0x98] sm:$0xff]
        %v4121 = vld [vmem:[%s5 + $0xa0] sm:$0xff]
        %v4122 = vld [vmem:[%s5 + $0xa8] sm:$0xff]
        %v4123 = vld [vmem:[%s5 + $0xb0] sm:$0xff]
        %v4124 = vld [vmem:[%s5 + $0xb8] sm:$0xff]
        %v4125 = vld [vmem:[%s5 + $0xc0] sm:$0xff]
        %v4126 = vld [vmem:[%s5 + $0xc8] sm:$0xff]
        %v4127 = vld [vmem:[%s5 + $0xd0] sm:$0xff]
        %v4128 = vld [vmem:[%s5 + $0xd8] sm:$0xff]
        %v4129 = vld [vmem:[%s5 + $0xe0] sm:$0xff]
        %v4130 = vld [vmem:[%s5 + $0xe8] sm:$0xff]
        %v4131 = vld [vmem:[%s5 + $0xf0] sm:$0xff]
        %v4132 = vld [vmem:[%s5 + $0xf8] sm:$0xff]
        %v4133 = vld [vmem:[%s5 + $0x100] sm:$0xff]
        %v4134 = vld [vmem:[%s5 + $0x108] sm:$0xff]
        %v4135 = vld [vmem:[%s5 + $0x110] sm:$0xff]
        %v4136 = vld [vmem:[%s5 + $0x118] sm:$0xff]
        %v4137 = vld [vmem:[%s5 + $0x120] sm:$0xff]
        %v4138 = vld [vmem:[%s5 + $0x128] sm:$0xff]
        %v4139 = vld [vmem:[%s5 + $0x130] sm:$0xff]
        %v4140 = vld [vmem:[%s5 + $0x138] sm:$0xff]
        %v4141 = vld [vmem:[%s5 + $0x140] sm:$0xff]
        %v4142 = vld [vmem:[%s5 + $0x148] sm:$0xff]
        %v4143 = vld [vmem:[%s5 + $0x150] sm:$0xff]
        %v4144 = vld [vmem:[%s5 + $0x158] sm:$0xff]
        %v4145 = vld [vmem:[%s5 + $0x160] sm:$0xff]
        %v4146 = vld [vmem:[%s5 + $0x168] sm:$0xff]
        %v4147 = vld [vmem:[%s5 + $0x170] sm:$0xff]
        %v4148 = vld [vmem:[%s5 + $0x178] sm:$0xff]
        %v4149 = vld [vmem:[%s5 + $0x180] sm:$0xff]
        %v4150 = vld [vmem:[%s5 + $0x188] sm:$0xff]
        %v4151 = vld [vmem:[%s5 + $0x190] sm:$0xff]
        %v4152 = vld [vmem:[%s5 + $0x198] sm:$0xff]
        %v4153 = vld [vmem:[%s5 + $0x1a0] sm:$0xff]
        %v4154 = vld [vmem:[%s5 + $0x1a8] sm:$0xff]
        %v4155 = vld [vmem:[%s5 + $0x1b0] sm:$0xff]
        %v4156 = vld [vmem:[%s5 + $0x1b8] sm:$0xff]
        %v4157 = vld [vmem:[%s5 + $0x1c0] sm:$0xff]
        %v4158 = vld [vmem:[%s5 + $0x1c8] sm:$0xff]
        %v4159 = vld [vmem:[%s5 + $0x1d0] sm:$0xff]
        %v4160 = vld [vmem:[%s5 + $0x1d8] sm:$0xff]
        %v4161 = vld [vmem:[%s5 + $0x1e0] sm:$0xff]
        %v4162 = vld [vmem:[%s5 + $0x1e8] sm:$0xff]
        %v4163 = vld [vmem:[%s5 + $0x1f0] sm:$0xff]
        %v4164 = vld [vmem:[%s5 + $0x1f8] sm:$0xff]
        %v4165 = vld [vmem:[%s5 + $0x200] sm:$0xff]
        %v4166 = vld [vmem:[%s5 + $0x208] sm:$0xff]
        %v4167 = vld [vmem:[%s5 + $0x210] sm:$0xff]
        %v4168 = vld [vmem:[%s5 + $0x218] sm:$0xff]
        %v4169 = vld [vmem:[%s5 + $0x220] sm:$0xff]
        %v4170 = vld [vmem:[%s5 + $0x228] sm:$0xff]
        %v4171 = vld [vmem:[%s5 + $0x230] sm:$0xff]
        %v4172 = vld [vmem:[%s5 + $0x238] sm:$0xff]
        %v4173 = vld [vmem:[%s5 + $0x240] sm:$0xff]
        %v4174 = vld [vmem:[%s5 + $0x248] sm:$0xff]
        %v4175 = vld [vmem:[%s5 + $0x250] sm:$0xff]
        %v4176 = vld [vmem:[%s5 + $0x258] sm:$0xff]
        %v4177 = vld [vmem:[%s5 + $0x260] sm:$0xff]
        %v4178 = vld [vmem:[%s5 + $0x268] sm:$0xff]
        %v4179 = vld [vmem:[%s5 + $0x270] sm:$0xff]
        %v4180 = vld [vmem:[%s5 + $0x278] sm:$0xff]
        %v4181 = vld [vmem:[%s5 + $0x280] sm:$0xff]
        %v4182 = vld [vmem:[%s5 + $0x288] sm:$0xff]
        %v4183 = vld [vmem:[%s5 + $0x290] sm:$0xff]
        %v4184 = vld [vmem:[%s5 + $0x298] sm:$0xff]
        %v4185 = vld [vmem:[%s5 + $0x2a0] sm:$0xff]
        %v4186 = vld [vmem:[%s5 + $0x2a8] sm:$0xff]
        %v4187 = vld [vmem:[%s5 + $0x2b0] sm:$0xff]
        %v4188 = vld [vmem:[%s5 + $0x2b8] sm:$0xff]
        %v4189 = vld [vmem:[%s5 + $0x2c0] sm:$0xff]
        %v4190 = vld [vmem:[%s5 + $0x2c8] sm:$0xff]
        %v4191 = vld [vmem:[%s5 + $0x2d0] sm:$0xff]
        %v4192 = vld [vmem:[%s5 + $0x2d8] sm:$0xff]
        %v4193 = vld [vmem:[%s5 + $0x2e0] sm:$0xff]
        %v4194 = vld [vmem:[%s5 + $0x2e8] sm:$0xff]
        %v4195 = vld [vmem:[%s5 + $0x2f0] sm:$0xff]
        %v4196 = vld [vmem:[%s5 + $0x2f8] sm:$0xff]
        %v4197 = vld [vmem:[%s5 + $0x300] sm:$0xff]
        %v4198 = vld [vmem:[%s5 + $0x308] sm:$0xff]
        %v4199 = vld [vmem:[%s5 + $0x310] sm:$0xff]
        %v4200 = vld [vmem:[%s5 + $0x318] sm:$0xff]
        %v4201 = vld [vmem:[%s5 + $0x320] sm:$0xff]
        %v4202 = vld [vmem:[%s5 + $0x328] sm:$0xff]
        %v4203 = vld [vmem:[%s5 + $0x330] sm:$0xff]
        %v4204 = vld [vmem:[%s5 + $0x338] sm:$0xff]
        %v4205 = vld [vmem:[%s5 + $0x340] sm:$0xff]
        %v4206 = vld [vmem:[%s5 + $0x348] sm:$0xff]
        %v4207 = vld [vmem:[%s5 + $0x350] sm:$0xff]
        %v4208 = vld [vmem:[%s5 + $0x358] sm:$0xff]
        %v4209 = vld [vmem:[%s5 + $0x360] sm:$0xff]
        %v4210 = vld [vmem:[%s5 + $0x368] sm:$0xff]
        %v4211 = vld [vmem:[%s5 + $0x370] sm:$0xff]
        %v4212 = vld [vmem:[%s5 + $0x378] sm:$0xff]
        %v4213 = vld [vmem:[%s5 + $0x380] sm:$0xff]
        %v4214 = vld [vmem:[%s5 + $0x388] sm:$0xff]
        %v4215 = vld [vmem:[%s5 + $0x390] sm:$0xff]
        %v4216 = vld [vmem:[%s5 + $0x398] sm:$0xff]
        %v4217 = vld [vmem:[%s5 + $0x3a0] sm:$0xff]
        %v4218 = vld [vmem:[%s5 + $0x3a8] sm:$0xff]
        %v4219 = vld [vmem:[%s5 + $0x3b0] sm:$0xff]
        %v4220 = vld [vmem:[%s5 + $0x3b8] sm:$0xff]
        %v4221 = vld [vmem:[%s5 + $0x3c0] sm:$0xff]
        %v4222 = vld [vmem:[%s5 + $0x3c8] sm:$0xff]
        %v4223 = vld [vmem:[%s5 + $0x3d0] sm:$0xff]
        %v4224 = vld [vmem:[%s5 + $0x3d8] sm:$0xff]
        %v4225 = vld [vmem:[%s5 + $0x3e0] sm:$0xff]
        %v4226 = vld [vmem:[%s5 + $0x3e8] sm:$0xff]
        %v4227 = vld [vmem:[%s5 + $0x3f0] sm:$0xff]
        %v4228 = vld [vmem:[%s5 + $0x3f8] sm:$0xff]
        %v4229 = vld [vmem:[%s5 + $0x400] sm:$0xff]
        %v4230 = vld [vmem:[%s5 + $0x408] sm:$0xff]
        %v4231 = vld [vmem:[%s5 + $0x410] sm:$0xff]
        %v4232 = vld [vmem:[%s5 + $0x418] sm:$0xff]
        %v4233 = vld [vmem:[%s5 + $0x420] sm:$0xff]
        %v4234 = vld [vmem:[%s5 + $0x428] sm:$0xff]
        %v4235 = vld [vmem:[%s5 + $0x430] sm:$0xff]
        %v4236 = vld [vmem:[%s5 + $0x438] sm:$0xff]
        %v4237 = vld [vmem:[%s5 + $0x440] sm:$0xff]
        %v4238 = vld [vmem:[%s5 + $0x448] sm:$0xff]
        %v4239 = vld [vmem:[%s5 + $0x450] sm:$0xff]
        %v4240 = vld [vmem:[%s5 + $0x458] sm:$0xff]
        %v4241 = vld [vmem:[%s5 + $0x460] sm:$0xff]
        %v4242 = vld [vmem:[%s5 + $0x468] sm:$0xff]
        %v4243 = vld [vmem:[%s5 + $0x470] sm:$0xff]
        %v4244 = vld [vmem:[%s5 + $0x478] sm:$0xff]
        %v4245 = vld [vmem:[%s5 + $0x480] sm:$0xff]
        %v4246 = vld [vmem:[%s5 + $0x488] sm:$0xff]
        %v4247 = vld [vmem:[%s5 + $0x490] sm:$0xff]
        %v4248 = vld [vmem:[%s5 + $0x498] sm:$0xff]
        %v4249 = vld [vmem:[%s5 + $0x4a0] sm:$0xff]
        %v4250 = vld [vmem:[%s5 + $0x4a8] sm:$0xff]
        %v4251 = vld [vmem:[%s5 + $0x4b0] sm:$0xff]
        %v4252 = vld [vmem:[%s5 + $0x4b8] sm:$0xff]
        %v4253 = vld [vmem:[%s5 + $0x4c0] sm:$0xff]
        %v4254 = vld [vmem:[%s5 + $0x4c8] sm:$0xff]
        %v4255 = vld [vmem:[%s5 + $0x4d0] sm:$0xff]
        %v4256 = vld [vmem:[%s5 + $0x4d8] sm:$0xff]
        %v4257 = vld [vmem:[%s5 + $0x4e0] sm:$0xff]
        %v4258 = vld [vmem:[%s5 + $0x4e8] sm:$0xff]
        %v4259 = vld [vmem:[%s5 + $0x4f0] sm:$0xff]
        %v4260 = vld [vmem:[%s5 + $0x4f8] sm:$0xff]
        %v4261 = vld [vmem:[%s5 + $0x500] sm:$0xff]
        %v4262 = vld [vmem:[%s5 + $0x508] sm:$0xff]
        %v4263 = vld [vmem:[%s5 + $0x510] sm:$0xff]
        %v4264 = vld [vmem:[%s5 + $0x518] sm:$0xff]
        %v4265 = vld [vmem:[%s5 + $0x520] sm:$0xff]
        %v4266 = vld [vmem:[%s5 + $0x528] sm:$0xff]
        %v4267 = vld [vmem:[%s5 + $0x530] sm:$0xff]
        %v4268 = vld [vmem:[%s5 + $0x538] sm:$0xff]
        %v4269 = vld [vmem:[%s5 + $0x540] sm:$0xff]
        %v4270 = vld [vmem:[%s5 + $0x548] sm:$0xff]
        %v4271 = vld [vmem:[%s5 + $0x550] sm:$0xff]
        %v4272 = vld [vmem:[%s5 + $0x558] sm:$0xff]
        %v4273 = vld [vmem:[%s5 + $0x560] sm:$0xff]
        %v4274 = vld [vmem:[%s5 + $0x568] sm:$0xff]
        %v4275 = vld [vmem:[%s5 + $0x570] sm:$0xff]
        %v4276 = vld [vmem:[%s5 + $0x578] sm:$0xff]
        %v4277 = vld [vmem:[%s5 + $0x580] sm:$0xff]
        %v4278 = vld [vmem:[%s5 + $0x588] sm:$0xff]
        %v4279 = vld [vmem:[%s5 + $0x590] sm:$0xff]
        %v4280 = vld [vmem:[%s5 + $0x598] sm:$0xff]
        %v4281 = vld [vmem:[%s5 + $0x5a0] sm:$0xff]
        %v4282 = vld [vmem:[%s5 + $0x5a8] sm:$0xff]
        %v4283 = vld [vmem:[%s5 + $0x5b0] sm:$0xff]
        %v4284 = vld [vmem:[%s5 + $0x5b8] sm:$0xff]
        %v4285 = vld [vmem:[%s5 + $0x5c0] sm:$0xff]
        %v4286 = vld [vmem:[%s5 + $0x5c8] sm:$0xff]
        %v4287 = vld [vmem:[%s5 + $0x5d0] sm:$0xff]
        %v4288 = vld [vmem:[%s5 + $0x5d8] sm:$0xff]
        %v4289 = vld [vmem:[%s5 + $0x5e0] sm:$0xff]
        %v4290 = vld [vmem:[%s5 + $0x5e8] sm:$0xff]
        %v4291 = vld [vmem:[%s5 + $0x5f0] sm:$0xff]
        %v4292 = vld [vmem:[%s5 + $0x5f8] sm:$0xff]
        %v4293 = vld [vmem:[%s5 + $0x600] sm:$0xff]
        %v4294 = vld [vmem:[%s5 + $0x608] sm:$0xff]
        %v4295 = vld [vmem:[%s5 + $0x610] sm:$0xff]
        %v4296 = vld [vmem:[%s5 + $0x618] sm:$0xff]
        %v4297 = vld [vmem:[%s5 + $0x620] sm:$0xff]
        %v4298 = vld [vmem:[%s5 + $0x628] sm:$0xff]
        %v4299 = vld [vmem:[%s5 + $0x630] sm:$0xff]
        %v4300 = vld [vmem:[%s5 + $0x638] sm:$0xff]
        %v4301 = vld [vmem:[%s5 + $0x640] sm:$0xff]
        %v4302 = vld [vmem:[%s5 + $0x648] sm:$0xff]
        %v4303 = vld [vmem:[%s5 + $0x650] sm:$0xff]
        %v4304 = vld [vmem:[%s5 + $0x658] sm:$0xff]
        %v4305 = vld [vmem:[%s5 + $0x660] sm:$0xff]
        %v4306 = vld [vmem:[%s5 + $0x668] sm:$0xff]
        %v4307 = vld [vmem:[%s5 + $0x670] sm:$0xff]
        %v4308 = vld [vmem:[%s5 + $0x678] sm:$0xff]
        %v4309 = vld [vmem:[%s5 + $0x680] sm:$0xff]
        %v4310 = vld [vmem:[%s5 + $0x688] sm:$0xff]
        %v4311 = vld [vmem:[%s5 + $0x690] sm:$0xff]
        %v4312 = vld [vmem:[%s5 + $0x698] sm:$0xff]
        %v4313 = vld [vmem:[%s5 + $0x6a0] sm:$0xff]
        %v4314 = vld [vmem:[%s5 + $0x6a8] sm:$0xff]
        %v4315 = vld [vmem:[%s5 + $0x6b0] sm:$0xff]
        %v4316 = vld [vmem:[%s5 + $0x6b8] sm:$0xff]
        %v4317 = vld [vmem:[%s5 + $0x6c0] sm:$0xff]
        %v4318 = vld [vmem:[%s5 + $0x6c8] sm:$0xff]
        %v4319 = vld [vmem:[%s5 + $0x6d0] sm:$0xff]
        %v4320 = vld [vmem:[%s5 + $0x6d8] sm:$0xff]
        %v4321 = vld [vmem:[%s5 + $0x6e0] sm:$0xff]
        %v4322 = vld [vmem:[%s5 + $0x6e8] sm:$0xff]
        %v4323 = vld [vmem:[%s5 + $0x6f0] sm:$0xff]
        %v4324 = vld [vmem:[%s5 + $0x6f8] sm:$0xff]
        %v4325 = vld [vmem:[%s5 + $0x700] sm:$0xff]
        %v4326 = vld [vmem:[%s5 + $0x708] sm:$0xff]
        %v4327 = vld [vmem:[%s5 + $0x710] sm:$0xff]
        %v4328 = vld [vmem:[%s5 + $0x718] sm:$0xff]
        %v4329 = vld [vmem:[%s5 + $0x720] sm:$0xff]
        %v4330 = vld [vmem:[%s5 + $0x728] sm:$0xff]
        %v4331 = vld [vmem:[%s5 + $0x730] sm:$0xff]
        %v4332 = vld [vmem:[%s5 + $0x738] sm:$0xff]
        %v4333 = vld [vmem:[%s5 + $0x740] sm:$0xff]
        %v4334 = vld [vmem:[%s5 + $0x748] sm:$0xff]
        %v4335 = vld [vmem:[%s5 + $0x750] sm:$0xff]
        %v4336 = vld [vmem:[%s5 + $0x758] sm:$0xff]
        %v4337 = vld [vmem:[%s5 + $0x760] sm:$0xff]
        %v4338 = vld [vmem:[%s5 + $0x768] sm:$0xff]
        %v4339 = vld [vmem:[%s5 + $0x770] sm:$0xff]
        %v4340 = vld [vmem:[%s5 + $0x778] sm:$0xff]
        %v4341 = vld [vmem:[%s5 + $0x780] sm:$0xff]
        %v4342 = vld [vmem:[%s5 + $0x788] sm:$0xff]
        %v4343 = vld [vmem:[%s5 + $0x790] sm:$0xff]
        %v4344 = vld [vmem:[%s5 + $0x798] sm:$0xff]
        %v4345 = vld [vmem:[%s5 + $0x7a0] sm:$0xff]
        %v4346 = vld [vmem:[%s5 + $0x7a8] sm:$0xff]
        %v4347 = vld [vmem:[%s5 + $0x7b0] sm:$0xff]
        %v4348 = vld [vmem:[%s5 + $0x7b8] sm:$0xff]
        %v4349 = vld [vmem:[%s5 + $0x7c0] sm:$0xff]
        %v4350 = vld [vmem:[%s5 + $0x7c8] sm:$0xff]
        %v4351 = vld [vmem:[%s5 + $0x7d0] sm:$0xff]
        %v4352 = vld [vmem:[%s5 + $0x7d8] sm:$0xff]
        %v4353 = vld [vmem:[%s5 + $0x7e0] sm:$0xff]
        %v4354 = vld [vmem:[%s5 + $0x7e8] sm:$0xff]
        %v4355 = vld [vmem:[%s5 + $0x7f0] sm:$0xff]
        %v4356 = vld [vmem:[%s5 + $0x7f8] sm:$0xff]
        %v4357 = vld [vmem:[%s6] sm:$0x1]
        %v4359 = vlaneseq
        %v4360 = vshrl.u32 %v4359, 7
        %v4361 = vsub.s32 0, %v4360
        %v4362 = vrot.slane %v4357, %v4361
        %4364 = vmatprep.subr.mxu0 0.0
        %4365 = vmatpush1.msra.mxu0 %v4116
        %4366 = vmatprep.subr.mxu0 0.0
        %4367 = vmatpush1.msra.mxu0 %v4115
        %4368 = vmatprep.subr.mxu0 0.0
        %4369 = vmatpush1.msra.mxu0 %v4114
        %4370 = vmatprep.subr.mxu0 0.0
        %4371 = vmatpush1.msra.mxu0 %v4113
        %4372 = vmatprep.subr.mxu0 0.0
        %4373 = vmatpush1.msra.mxu0 %v4112
        %4374 = vmatprep.subr.mxu0 0.0
        %4375 = vmatpush1.msra.mxu0 %v4111
        %4376 = vmatprep.subr.mxu0 0.0
        %4377 = vmatpush1.msra.mxu0 %v4110
        %4378 = vmatprep.subr.mxu0 0.0
        %4379 = vmatpush1.msra.mxu0 %v4109
        %4380 = vmatprep.subr.mxu0 0.0
        %4381 = vmatpush1.msra.mxu0 %v4108
        %4382 = vmatprep.subr.mxu0 0.0
        %4383 = vmatpush1.msra.mxu0 %v4107
        %4384 = vmatprep.subr.mxu0 0.0
        %4385 = vmatpush1.msra.mxu0 %v4106
        %4386 = vmatprep.subr.mxu0 0.0
        %4387 = vmatpush1.msra.mxu0 %v4105
        %4388 = vmatprep.subr.mxu0 0.0
        %4389 = vmatpush1.msra.mxu0 %v4104
        %4390 = vmatprep.subr.mxu0 0.0
        %4391 = vmatpush1.msra.mxu0 %v4103
        %4392 = vmatprep.subr.mxu0 0.0
        %4393 = vmatpush1.msra.mxu0 %v4102
        %4394 = vmatprep.subr.mxu0 0.0
        %4395 = vmatpush1.msra.mxu0 %v4101
        %4396 = vmatprep.subr.mxu0 0.0
        %4397 = vmatpush2.msra.mxu0 %v4132
        %4398 = vmatprep.subr.mxu0 0.0
        %4399 = vmatpush2.msra.mxu0 %v4131
        %4400 = vmatprep.subr.mxu0 0.0
        %4401 = vmatpush2.msra.mxu0 %v4130
        %4402 = vmatprep.subr.mxu0 0.0
        %4403 = vmatpush2.msra.mxu0 %v4129
        %4404 = vmatprep.subr.mxu0 0.0
        %4405 = vmatpush2.msra.mxu0 %v4128
        %4406 = vmatprep.subr.mxu0 0.0
        %4407 = vmatpush2.msra.mxu0 %v4127
        %4408 = vmatprep.subr.mxu0 0.0
        %4409 = vmatpush2.msra.mxu0 %v4126
        %4410 = vmatprep.subr.mxu0 0.0
        %4411 = vmatpush2.msra.mxu0 %v4125
        %4412 = vmatprep.subr.mxu0 0.0
        %4413 = vmatpush2.msra.mxu0 %v4124
        %4414 = vmatprep.subr.mxu0 0.0
        %4415 = vmatpush2.msra.mxu0 %v4123
        %4416 = vmatprep.subr.mxu0 0.0
        %4417 = vmatpush2.msra.mxu0 %v4122
        %4418 = vmatprep.subr.mxu0 0.0
        %4419 = vmatpush2.msra.mxu0 %v4121
        %4420 = vmatprep.subr.mxu0 0.0
        %4421 = vmatpush2.msra.mxu0 %v4120
        %4422 = vmatprep.subr.mxu0 0.0
        %4423 = vmatpush2.msra.mxu0 %v4119
        %4424 = vmatprep.subr.mxu0 0.0
        %4425 = vmatpush2.msra.mxu0 %v4118
        %4426 = vmatprep.subr.mxu0 0.0
        %4427 = vmatpush2.msra.mxu0 %v4117
        %4428 = vmatprep.mubr.f32.mxu0 %v3602
        %4429 = vmatmul.mubr.f32.gmra.mxu0 %v3600
        %v4430 = vpop.f32.mrf.mxu0
        %v4431 = vadd.f32 %v4362, %v4430
        %v4432 = vpop.f32.mrf.mxu0
        %4433 = vdwg.mxu0
        %4434 = vmatprep.subr.mxu0 0.0
        %4435 = vmatpush1.msra.mxu0 %v4148
        %4436 = vmatprep.subr.mxu0 0.0
        %4437 = vmatpush1.msra.mxu0 %v4147
        %4438 = vmatprep.subr.mxu0 0.0
        %4439 = vmatpush1.msra.mxu0 %v4146
        %4440 = vmatprep.subr.mxu0 0.0
        %4441 = vmatpush1.msra.mxu0 %v4145
        %4442 = vmatprep.subr.mxu0 0.0
        %4443 = vmatpush1.msra.mxu0 %v4144
        %4444 = vmatprep.subr.mxu0 0.0
        %4445 = vmatpush1.msra.mxu0 %v4143
        %4446 = vmatprep.subr.mxu0 0.0
        %4447 = vmatpush1.msra.mxu0 %v4142
        %4448 = vmatprep.subr.mxu0 0.0
        %4449 = vmatpush1.msra.mxu0 %v4141
        %4450 = vmatprep.subr.mxu0 0.0
        %4451 = vmatpush1.msra.mxu0 %v4140
        %4452 = vmatprep.subr.mxu0 0.0
        %4453 = vmatpush1.msra.mxu0 %v4139
        %4454 = vmatprep.subr.mxu0 0.0
        %4455 = vmatpush1.msra.mxu0 %v4138
        %4456 = vmatprep.subr.mxu0 0.0
        %4457 = vmatpush1.msra.mxu0 %v4137
        %4458 = vmatprep.subr.mxu0 0.0
        %4459 = vmatpush1.msra.mxu0 %v4136
        %4460 = vmatprep.subr.mxu0 0.0
        %4461 = vmatpush1.msra.mxu0 %v4135
        %4462 = vmatprep.subr.mxu0 0.0
        %4463 = vmatpush1.msra.mxu0 %v4134
        %4464 = vmatprep.subr.mxu0 0.0
        %4465 = vmatpush1.msra.mxu0 %v4133
        %4466 = vmatprep.subr.mxu0 0.0
        %4467 = vmatpush2.msra.mxu0 %v4164
        %4468 = vmatprep.subr.mxu0 0.0
        %4469 = vmatpush2.msra.mxu0 %v4163
        %4470 = vmatprep.subr.mxu0 0.0
        %4471 = vmatpush2.msra.mxu0 %v4162
        %4472 = vmatprep.subr.mxu0 0.0
        %4473 = vmatpush2.msra.mxu0 %v4161
        %4474 = vmatprep.subr.mxu0 0.0
        %4475 = vmatpush2.msra.mxu0 %v4160
        %4476 = vmatprep.subr.mxu0 0.0
        %4477 = vmatpush2.msra.mxu0 %v4159
        %4478 = vmatprep.subr.mxu0 0.0
        %4479 = vmatpush2.msra.mxu0 %v4158
        %4480 = vmatprep.subr.mxu0 0.0
        %4481 = vmatpush2.msra.mxu0 %v4157
        %4482 = vmatprep.subr.mxu0 0.0
        %4483 = vmatpush2.msra.mxu0 %v4156
        %4484 = vmatprep.subr.mxu0 0.0
        %4485 = vmatpush2.msra.mxu0 %v4155
        %4486 = vmatprep.subr.mxu0 0.0
        %4487 = vmatpush2.msra.mxu0 %v4154
        %4488 = vmatprep.subr.mxu0 0.0
        %4489 = vmatpush2.msra.mxu0 %v4153
        %4490 = vmatprep.subr.mxu0 0.0
        %4491 = vmatpush2.msra.mxu0 %v4152
        %4492 = vmatprep.subr.mxu0 0.0
        %4493 = vmatpush2.msra.mxu0 %v4151
        %4494 = vmatprep.subr.mxu0 0.0
        %4495 = vmatpush2.msra.mxu0 %v4150
        %4496 = vmatprep.subr.mxu0 0.0
        %4497 = vmatpush2.msra.mxu0 %v4149
        %4498 = vmatprep.mubr.f32.mxu0 %v3673
        %4499 = vmatmul.mubr.f32.gmra.mxu0 %v3671
        %v4500 = vpop.f32.mrf.mxu0
        %v4501 = vadd.f32 %v4431, %v4500
        %v4502 = vpop.f32.mrf.mxu0
        %4503 = vdwg.mxu0
        %4504 = vmatprep.subr.mxu0 0.0
        %4505 = vmatpush1.msra.mxu0 %v4180
        %4506 = vmatprep.subr.mxu0 0.0
        %4507 = vmatpush1.msra.mxu0 %v4179
        %4508 = vmatprep.subr.mxu0 0.0
        %4509 = vmatpush1.msra.mxu0 %v4178
        %4510 = vmatprep.subr.mxu0 0.0
        %4511 = vmatpush1.msra.mxu0 %v4177
        %4512 = vmatprep.subr.mxu0 0.0
        %4513 = vmatpush1.msra.mxu0 %v4176
        %4514 = vmatprep.subr.mxu0 0.0
        %4515 = vmatpush1.msra.mxu0 %v4175
        %4516 = vmatprep.subr.mxu0 0.0
        %4517 = vmatpush1.msra.mxu0 %v4174
        %4518 = vmatprep.subr.mxu0 0.0
        %4519 = vmatpush1.msra.mxu0 %v4173
        %4520 = vmatprep.subr.mxu0 0.0
        %4521 = vmatpush1.msra.mxu0 %v4172
        %4522 = vmatprep.subr.mxu0 0.0
        %4523 = vmatpush1.msra.mxu0 %v4171
        %4524 = vmatprep.subr.mxu0 0.0
        %4525 = vmatpush1.msra.mxu0 %v4170
        %4526 = vmatprep.subr.mxu0 0.0
        %4527 = vmatpush1.msra.mxu0 %v4169
        %4528 = vmatprep.subr.mxu0 0.0
        %4529 = vmatpush1.msra.mxu0 %v4168
        %4530 = vmatprep.subr.mxu0 0.0
        %4531 = vmatpush1.msra.mxu0 %v4167
        %4532 = vmatprep.subr.mxu0 0.0
        %4533 = vmatpush1.msra.mxu0 %v4166
        %4534 = vmatprep.subr.mxu0 0.0
        %4535 = vmatpush1.msra.mxu0 %v4165
        %4536 = vmatprep.subr.mxu0 0.0
        %4537 = vmatpush2.msra.mxu0 %v4196
        %4538 = vmatprep.subr.mxu0 0.0
        %4539 = vmatpush2.msra.mxu0 %v4195
        %4540 = vmatprep.subr.mxu0 0.0
        %4541 = vmatpush2.msra.mxu0 %v4194
        %4542 = vmatprep.subr.mxu0 0.0
        %4543 = vmatpush2.msra.mxu0 %v4193
        %4544 = vmatprep.subr.mxu0 0.0
        %4545 = vmatpush2.msra.mxu0 %v4192
        %4546 = vmatprep.subr.mxu0 0.0
        %4547 = vmatpush2.msra.mxu0 %v4191
        %4548 = vmatprep.subr.mxu0 0.0
        %4549 = vmatpush2.msra.mxu0 %v4190
        %4550 = vmatprep.subr.mxu0 0.0
        %4551 = vmatpush2.msra.mxu0 %v4189
        %4552 = vmatprep.subr.mxu0 0.0
        %4553 = vmatpush2.msra.mxu0 %v4188
        %4554 = vmatprep.subr.mxu0 0.0
        %4555 = vmatpush2.msra.mxu0 %v4187
        %4556 = vmatprep.subr.mxu0 0.0
        %4557 = vmatpush2.msra.mxu0 %v4186
        %4558 = vmatprep.subr.mxu0 0.0
        %4559 = vmatpush2.msra.mxu0 %v4185
        %4560 = vmatprep.subr.mxu0 0.0
        %4561 = vmatpush2.msra.mxu0 %v4184
        %4562 = vmatprep.subr.mxu0 0.0
        %4563 = vmatpush2.msra.mxu0 %v4183
        %4564 = vmatprep.subr.mxu0 0.0
        %4565 = vmatpush2.msra.mxu0 %v4182
        %4566 = vmatprep.subr.mxu0 0.0
        %4567 = vmatpush2.msra.mxu0 %v4181
        %4568 = vmatprep.mubr.f32.mxu0 %v3744
        %4569 = vmatmul.mubr.f32.gmra.mxu0 %v3742
        %v4570 = vpop.f32.mrf.mxu0
        %v4571 = vadd.f32 %v4501, %v4570
        %v4572 = vpop.f32.mrf.mxu0
        %4573 = vdwg.mxu0
        %4574 = vmatprep.subr.mxu0 0.0
        %4575 = vmatpush1.msra.mxu0 %v4212
        %4576 = vmatprep.subr.mxu0 0.0
        %4577 = vmatpush1.msra.mxu0 %v4211
        %4578 = vmatprep.subr.mxu0 0.0
        %4579 = vmatpush1.msra.mxu0 %v4210
        %4580 = vmatprep.subr.mxu0 0.0
        %4581 = vmatpush1.msra.mxu0 %v4209
        %4582 = vmatprep.subr.mxu0 0.0
        %4583 = vmatpush1.msra.mxu0 %v4208
        %4584 = vmatprep.subr.mxu0 0.0
        %4585 = vmatpush1.msra.mxu0 %v4207
        %4586 = vmatprep.subr.mxu0 0.0
        %4587 = vmatpush1.msra.mxu0 %v4206
        %4588 = vmatprep.subr.mxu0 0.0
        %4589 = vmatpush1.msra.mxu0 %v4205
        %4590 = vmatprep.subr.mxu0 0.0
        %4591 = vmatpush1.msra.mxu0 %v4204
        %4592 = vmatprep.subr.mxu0 0.0
        %4593 = vmatpush1.msra.mxu0 %v4203
        %4594 = vmatprep.subr.mxu0 0.0
        %4595 = vmatpush1.msra.mxu0 %v4202
        %4596 = vmatprep.subr.mxu0 0.0
        %4597 = vmatpush1.msra.mxu0 %v4201
        %4598 = vmatprep.subr.mxu0 0.0
        %4599 = vmatpush1.msra.mxu0 %v4200
        %4600 = vmatprep.subr.mxu0 0.0
        %4601 = vmatpush1.msra.mxu0 %v4199
        %4602 = vmatprep.subr.mxu0 0.0
        %4603 = vmatpush1.msra.mxu0 %v4198
        %4604 = vmatprep.subr.mxu0 0.0
        %4605 = vmatpush1.msra.mxu0 %v4197
        %4606 = vmatprep.subr.mxu0 0.0
        %4607 = vmatpush2.msra.mxu0 %v4228
        %4608 = vmatprep.subr.mxu0 0.0
        %4609 = vmatpush2.msra.mxu0 %v4227
        %4610 = vmatprep.subr.mxu0 0.0
        %4611 = vmatpush2.msra.mxu0 %v4226
        %4612 = vmatprep.subr.mxu0 0.0
        %4613 = vmatpush2.msra.mxu0 %v4225
        %4614 = vmatprep.subr.mxu0 0.0
        %4615 = vmatpush2.msra.mxu0 %v4224
        %4616 = vmatprep.subr.mxu0 0.0
        %4617 = vmatpush2.msra.mxu0 %v4223
        %4618 = vmatprep.subr.mxu0 0.0
        %4619 = vmatpush2.msra.mxu0 %v4222
        %4620 = vmatprep.subr.mxu0 0.0
        %4621 = vmatpush2.msra.mxu0 %v4221
        %4622 = vmatprep.subr.mxu0 0.0
        %4623 = vmatpush2.msra.mxu0 %v4220
        %4624 = vmatprep.subr.mxu0 0.0
        %4625 = vmatpush2.msra.mxu0 %v4219
        %4626 = vmatprep.subr.mxu0 0.0
        %4627 = vmatpush2.msra.mxu0 %v4218
        %4628 = vmatprep.subr.mxu0 0.0
        %4629 = vmatpush2.msra.mxu0 %v4217
        %4630 = vmatprep.subr.mxu0 0.0
        %4631 = vmatpush2.msra.mxu0 %v4216
        %4632 = vmatprep.subr.mxu0 0.0
        %4633 = vmatpush2.msra.mxu0 %v4215
        %4634 = vmatprep.subr.mxu0 0.0
        %4635 = vmatpush2.msra.mxu0 %v4214
        %4636 = vmatprep.subr.mxu0 0.0
        %4637 = vmatpush2.msra.mxu0 %v4213
        %4638 = vmatprep.mubr.f32.mxu0 %v3815
        %4639 = vmatmul.mubr.f32.gmra.mxu0 %v3813
        %v4640 = vpop.f32.mrf.mxu0
        %v4641 = vadd.f32 %v4571, %v4640
        %v4642 = vpop.f32.mrf.mxu0
        %4643 = vdwg.mxu0
        %4644 = vmatprep.subr.mxu0 0.0
        %4645 = vmatpush1.msra.mxu0 %v4244
        %4646 = vmatprep.subr.mxu0 0.0
        %4647 = vmatpush1.msra.mxu0 %v4243
        %4648 = vmatprep.subr.mxu0 0.0
        %4649 = vmatpush1.msra.mxu0 %v4242
        %4650 = vmatprep.subr.mxu0 0.0
        %4651 = vmatpush1.msra.mxu0 %v4241
        %4652 = vmatprep.subr.mxu0 0.0
        %4653 = vmatpush1.msra.mxu0 %v4240
        %4654 = vmatprep.subr.mxu0 0.0
        %4655 = vmatpush1.msra.mxu0 %v4239
        %4656 = vmatprep.subr.mxu0 0.0
        %4657 = vmatpush1.msra.mxu0 %v4238
        %4658 = vmatprep.subr.mxu0 0.0
        %4659 = vmatpush1.msra.mxu0 %v4237
        %4660 = vmatprep.subr.mxu0 0.0
        %4661 = vmatpush1.msra.mxu0 %v4236
        %4662 = vmatprep.subr.mxu0 0.0
        %4663 = vmatpush1.msra.mxu0 %v4235
        %4664 = vmatprep.subr.mxu0 0.0
        %4665 = vmatpush1.msra.mxu0 %v4234
        %4666 = vmatprep.subr.mxu0 0.0
        %4667 = vmatpush1.msra.mxu0 %v4233
        %4668 = vmatprep.subr.mxu0 0.0
        %4669 = vmatpush1.msra.mxu0 %v4232
        %4670 = vmatprep.subr.mxu0 0.0
        %4671 = vmatpush1.msra.mxu0 %v4231
        %4672 = vmatprep.subr.mxu0 0.0
        %4673 = vmatpush1.msra.mxu0 %v4230
        %4674 = vmatprep.subr.mxu0 0.0
        %4675 = vmatpush1.msra.mxu0 %v4229
        %4676 = vmatprep.subr.mxu0 0.0
        %4677 = vmatpush2.msra.mxu0 %v4260
        %4678 = vmatprep.subr.mxu0 0.0
        %4679 = vmatpush2.msra.mxu0 %v4259
        %4680 = vmatprep.subr.mxu0 0.0
        %4681 = vmatpush2.msra.mxu0 %v4258
        %4682 = vmatprep.subr.mxu0 0.0
        %4683 = vmatpush2.msra.mxu0 %v4257
        %4684 = vmatprep.subr.mxu0 0.0
        %4685 = vmatpush2.msra.mxu0 %v4256
        %4686 = vmatprep.subr.mxu0 0.0
        %4687 = vmatpush2.msra.mxu0 %v4255
        %4688 = vmatprep.subr.mxu0 0.0
        %4689 = vmatpush2.msra.mxu0 %v4254
        %4690 = vmatprep.subr.mxu0 0.0
        %4691 = vmatpush2.msra.mxu0 %v4253
        %4692 = vmatprep.subr.mxu0 0.0
        %4693 = vmatpush2.msra.mxu0 %v4252
        %4694 = vmatprep.subr.mxu0 0.0
        %4695 = vmatpush2.msra.mxu0 %v4251
        %4696 = vmatprep.subr.mxu0 0.0
        %4697 = vmatpush2.msra.mxu0 %v4250
        %4698 = vmatprep.subr.mxu0 0.0
        %4699 = vmatpush2.msra.mxu0 %v4249
        %4700 = vmatprep.subr.mxu0 0.0
        %4701 = vmatpush2.msra.mxu0 %v4248
        %4702 = vmatprep.subr.mxu0 0.0
        %4703 = vmatpush2.msra.mxu0 %v4247
        %4704 = vmatprep.subr.mxu0 0.0
        %4705 = vmatpush2.msra.mxu0 %v4246
        %4706 = vmatprep.subr.mxu0 0.0
        %4707 = vmatpush2.msra.mxu0 %v4245
        %4708 = vmatprep.mubr.f32.mxu0 %v3886
        %4709 = vmatmul.mubr.f32.gmra.mxu0 %v3884
        %v4710 = vpop.f32.mrf.mxu0
        %v4711 = vadd.f32 %v4641, %v4710
        %v4712 = vpop.f32.mrf.mxu0
        %4713 = vdwg.mxu0
        %4714 = vmatprep.subr.mxu0 0.0
        %4715 = vmatpush1.msra.mxu0 %v4276
        %4716 = vmatprep.subr.mxu0 0.0
        %4717 = vmatpush1.msra.mxu0 %v4275
        %4718 = vmatprep.subr.mxu0 0.0
        %4719 = vmatpush1.msra.mxu0 %v4274
        %4720 = vmatprep.subr.mxu0 0.0
        %4721 = vmatpush1.msra.mxu0 %v4273
        %4722 = vmatprep.subr.mxu0 0.0
        %4723 = vmatpush1.msra.mxu0 %v4272
        %4724 = vmatprep.subr.mxu0 0.0
        %4725 = vmatpush1.msra.mxu0 %v4271
        %4726 = vmatprep.subr.mxu0 0.0
        %4727 = vmatpush1.msra.mxu0 %v4270
        %4728 = vmatprep.subr.mxu0 0.0
        %4729 = vmatpush1.msra.mxu0 %v4269
        %4730 = vmatprep.subr.mxu0 0.0
        %4731 = vmatpush1.msra.mxu0 %v4268
        %4732 = vmatprep.subr.mxu0 0.0
        %4733 = vmatpush1.msra.mxu0 %v4267
        %4734 = vmatprep.subr.mxu0 0.0
        %4735 = vmatpush1.msra.mxu0 %v4266
        %4736 = vmatprep.subr.mxu0 0.0
        %4737 = vmatpush1.msra.mxu0 %v4265
        %4738 = vmatprep.subr.mxu0 0.0
        %4739 = vmatpush1.msra.mxu0 %v4264
        %4740 = vmatprep.subr.mxu0 0.0
        %4741 = vmatpush1.msra.mxu0 %v4263
        %4742 = vmatprep.subr.mxu0 0.0
        %4743 = vmatpush1.msra.mxu0 %v4262
        %4744 = vmatprep.subr.mxu0 0.0
        %4745 = vmatpush1.msra.mxu0 %v4261
        %4746 = vmatprep.subr.mxu0 0.0
        %4747 = vmatpush2.msra.mxu0 %v4292
        %4748 = vmatprep.subr.mxu0 0.0
        %4749 = vmatpush2.msra.mxu0 %v4291
        %4750 = vmatprep.subr.mxu0 0.0
        %4751 = vmatpush2.msra.mxu0 %v4290
        %4752 = vmatprep.subr.mxu0 0.0
        %4753 = vmatpush2.msra.mxu0 %v4289
        %4754 = vmatprep.subr.mxu0 0.0
        %4755 = vmatpush2.msra.mxu0 %v4288
        %4756 = vmatprep.subr.mxu0 0.0
        %4757 = vmatpush2.msra.mxu0 %v4287
        %4758 = vmatprep.subr.mxu0 0.0
        %4759 = vmatpush2.msra.mxu0 %v4286
        %4760 = vmatprep.subr.mxu0 0.0
        %4761 = vmatpush2.msra.mxu0 %v4285
        %4762 = vmatprep.subr.mxu0 0.0
        %4763 = vmatpush2.msra.mxu0 %v4284
        %4764 = vmatprep.subr.mxu0 0.0
        %4765 = vmatpush2.msra.mxu0 %v4283
        %4766 = vmatprep.subr.mxu0 0.0
        %4767 = vmatpush2.msra.mxu0 %v4282
        %4768 = vmatprep.subr.mxu0 0.0
        %4769 = vmatpush2.msra.mxu0 %v4281
        %4770 = vmatprep.subr.mxu0 0.0
        %4771 = vmatpush2.msra.mxu0 %v4280
        %4772 = vmatprep.subr.mxu0 0.0
        %4773 = vmatpush2.msra.mxu0 %v4279
        %4774 = vmatprep.subr.mxu0 0.0
        %4775 = vmatpush2.msra.mxu0 %v4278
        %4776 = vmatprep.subr.mxu0 0.0
        %4777 = vmatpush2.msra.mxu0 %v4277
        %4778 = vmatprep.mubr.f32.mxu0 %v3957
        %4779 = vmatmul.mubr.f32.gmra.mxu0 %v3955
        %v4780 = vpop.f32.mrf.mxu0
        %v4781 = vadd.f32 %v4711, %v4780
        %v4782 = vpop.f32.mrf.mxu0
        %4783 = vdwg.mxu0
        %4784 = vmatprep.subr.mxu0 0.0
        %4785 = vmatpush1.msra.mxu0 %v4308
        %4786 = vmatprep.subr.mxu0 0.0
        %4787 = vmatpush1.msra.mxu0 %v4307
        %4788 = vmatprep.subr.mxu0 0.0
        %4789 = vmatpush1.msra.mxu0 %v4306
        %4790 = vmatprep.subr.mxu0 0.0
        %4791 = vmatpush1.msra.mxu0 %v4305
        %4792 = vmatprep.subr.mxu0 0.0
        %4793 = vmatpush1.msra.mxu0 %v4304
        %4794 = vmatprep.subr.mxu0 0.0
        %4795 = vmatpush1.msra.mxu0 %v4303
        %4796 = vmatprep.subr.mxu0 0.0
        %4797 = vmatpush1.msra.mxu0 %v4302
        %4798 = vmatprep.subr.mxu0 0.0
        %4799 = vmatpush1.msra.mxu0 %v4301
        %4800 = vmatprep.subr.mxu0 0.0
        %4801 = vmatpush1.msra.mxu0 %v4300
        %4802 = vmatprep.subr.mxu0 0.0
        %4803 = vmatpush1.msra.mxu0 %v4299
        %4804 = vmatprep.subr.mxu0 0.0
        %4805 = vmatpush1.msra.mxu0 %v4298
        %4806 = vmatprep.subr.mxu0 0.0
        %4807 = vmatpush1.msra.mxu0 %v4297
        %4808 = vmatprep.subr.mxu0 0.0
        %4809 = vmatpush1.msra.mxu0 %v4296
        %4810 = vmatprep.subr.mxu0 0.0
        %4811 = vmatpush1.msra.mxu0 %v4295
        %4812 = vmatprep.subr.mxu0 0.0
        %4813 = vmatpush1.msra.mxu0 %v4294
        %4814 = vmatprep.subr.mxu0 0.0
        %4815 = vmatpush1.msra.mxu0 %v4293
        %4816 = vmatprep.subr.mxu0 0.0
        %4817 = vmatpush2.msra.mxu0 %v4324
        %4818 = vmatprep.subr.mxu0 0.0
        %4819 = vmatpush2.msra.mxu0 %v4323
        %4820 = vmatprep.subr.mxu0 0.0
        %4821 = vmatpush2.msra.mxu0 %v4322
        %4822 = vmatprep.subr.mxu0 0.0
        %4823 = vmatpush2.msra.mxu0 %v4321
        %4824 = vmatprep.subr.mxu0 0.0
        %4825 = vmatpush2.msra.mxu0 %v4320
        %4826 = vmatprep.subr.mxu0 0.0
        %4827 = vmatpush2.msra.mxu0 %v4319
        %4828 = vmatprep.subr.mxu0 0.0
        %4829 = vmatpush2.msra.mxu0 %v4318
        %4830 = vmatprep.subr.mxu0 0.0
        %4831 = vmatpush2.msra.mxu0 %v4317
        %4832 = vmatprep.subr.mxu0 0.0
        %4833 = vmatpush2.msra.mxu0 %v4316
        %4834 = vmatprep.subr.mxu0 0.0
        %4835 = vmatpush2.msra.mxu0 %v4315
        %4836 = vmatprep.subr.mxu0 0.0
        %4837 = vmatpush2.msra.mxu0 %v4314
        %4838 = vmatprep.subr.mxu0 0.0
        %4839 = vmatpush2.msra.mxu0 %v4313
        %4840 = vmatprep.subr.mxu0 0.0
        %4841 = vmatpush2.msra.mxu0 %v4312
        %4842 = vmatprep.subr.mxu0 0.0
        %4843 = vmatpush2.msra.mxu0 %v4311
        %4844 = vmatprep.subr.mxu0 0.0
        %4845 = vmatpush2.msra.mxu0 %v4310
        %4846 = vmatprep.subr.mxu0 0.0
        %4847 = vmatpush2.msra.mxu0 %v4309
        %4848 = vmatprep.mubr.f32.mxu0 %v4028
        %4849 = vmatmul.mubr.f32.gmra.mxu0 %v4026
        %v4850 = vpop.f32.mrf.mxu0
        %v4851 = vadd.f32 %v4781, %v4850
        %v4852 = vpop.f32.mrf.mxu0
        %4853 = vdwg.mxu0
        %4854 = vmatprep.subr.mxu0 0.0
        %4855 = vmatpush1.msra.mxu0 %v4340
        %4856 = vmatprep.subr.mxu0 0.0
        %4857 = vmatpush1.msra.mxu0 %v4339
        %4858 = vmatprep.subr.mxu0 0.0
        %4859 = vmatpush1.msra.mxu0 %v4338
        %4860 = vmatprep.subr.mxu0 0.0
        %4861 = vmatpush1.msra.mxu0 %v4337
        %4862 = vmatprep.subr.mxu0 0.0
        %4863 = vmatpush1.msra.mxu0 %v4336
        %4864 = vmatprep.subr.mxu0 0.0
        %4865 = vmatpush1.msra.mxu0 %v4335
        %4866 = vmatprep.subr.mxu0 0.0
        %4867 = vmatpush1.msra.mxu0 %v4334
        %4868 = vmatprep.subr.mxu0 0.0
        %4869 = vmatpush1.msra.mxu0 %v4333
        %4870 = vmatprep.subr.mxu0 0.0
        %4871 = vmatpush1.msra.mxu0 %v4332
        %4872 = vmatprep.subr.mxu0 0.0
        %4873 = vmatpush1.msra.mxu0 %v4331
        %4874 = vmatprep.subr.mxu0 0.0
        %4875 = vmatpush1.msra.mxu0 %v4330
        %4876 = vmatprep.subr.mxu0 0.0
        %4877 = vmatpush1.msra.mxu0 %v4329
        %4878 = vmatprep.subr.mxu0 0.0
        %4879 = vmatpush1.msra.mxu0 %v4328
        %4880 = vmatprep.subr.mxu0 0.0
        %4881 = vmatpush1.msra.mxu0 %v4327
        %4882 = vmatprep.subr.mxu0 0.0
        %4883 = vmatpush1.msra.mxu0 %v4326
        %4884 = vmatprep.subr.mxu0 0.0
        %4885 = vmatpush1.msra.mxu0 %v4325
        %4886 = vmatprep.subr.mxu0 0.0
        %4887 = vmatpush2.msra.mxu0 %v4356
        %4888 = vmatprep.subr.mxu0 0.0
        %4889 = vmatpush2.msra.mxu0 %v4355
        %4890 = vmatprep.subr.mxu0 0.0
        %4891 = vmatpush2.msra.mxu0 %v4354
        %4892 = vmatprep.subr.mxu0 0.0
        %4893 = vmatpush2.msra.mxu0 %v4353
        %4894 = vmatprep.subr.mxu0 0.0
        %4895 = vmatpush2.msra.mxu0 %v4352
        %4896 = vmatprep.subr.mxu0 0.0
        %4897 = vmatpush2.msra.mxu0 %v4351
        %4898 = vmatprep.subr.mxu0 0.0
        %4899 = vmatpush2.msra.mxu0 %v4350
        %4900 = vmatprep.subr.mxu0 0.0
        %4901 = vmatpush2.msra.mxu0 %v4349
        %4902 = vmatprep.subr.mxu0 0.0
        %4903 = vmatpush2.msra.mxu0 %v4348
        %4904 = vmatprep.subr.mxu0 0.0
        %4905 = vmatpush2.msra.mxu0 %v4347
        %4906 = vmatprep.subr.mxu0 0.0
        %4907 = vmatpush2.msra.mxu0 %v4346
        %4908 = vmatprep.subr.mxu0 0.0
        %4909 = vmatpush2.msra.mxu0 %v4345
        %4910 = vmatprep.subr.mxu0 0.0
        %4911 = vmatpush2.msra.mxu0 %v4344
        %4912 = vmatprep.subr.mxu0 0.0
        %4913 = vmatpush2.msra.mxu0 %v4343
        %4914 = vmatprep.subr.mxu0 0.0
        %4915 = vmatpush2.msra.mxu0 %v4342
        %4916 = vmatprep.subr.mxu0 0.0
        %4917 = vmatpush2.msra.mxu0 %v4341
        %4918 = vmatprep.mubr.f32.mxu0 %v4099
        %4919 = vmatmul.mubr.f32.gmra.mxu0 %v4097
        %v4920 = vpop.f32.mrf.mxu0
        %v4921 = vadd.f32 %v4851, %v4920
        %v4922 = vpop.f32.mrf.mxu0
        %4923 = vdwg.mxu0
        %4924 = vst [vmem:[%s271] sm:$0x3] %v4921
        %s4925 = sand.u32 %s181, 1
        %s4926 = scalar_lea.sflag [#allocation3], %s4925
        %s4927 = sand.u32 %s181, 1
        %s4928 = smul.addr %s4927, 2
        %s4929 = scalar_lea.vmem [#allocation2], %s4928
        // Predicated region
        $region49: #{_fused_backbone_head.1} parent=47 // pred_check
          %p4930 = pneg %p191
        $region50: #{_fused_backbone_head.1} parent=47 // pred_check_branch
          %4932 = sbr.rel (%p4930) target = $region52
        $region51: #{_fused_backbone_head.1} parent=47 // pred_region
          %s4934 = ssub.s32 32, 32
          %4935 = vsyncadd %s4926, %s4934
          %s4936 = smul.addr %s21, 32
          %s4937 = scalar_lea.hbm %s7, %s4936
          %s4939 = sshll.u32 %s4929, 4
          %s4940 = int_to_ptr.vmem [resolvable:$true] %s4939
          %4942 = dma.vmem_to_hbm [thread:$0]  %s4940, 32, %s4937, %s4926
        $region52: #{_fused_backbone_head.1} parent=47 // pred_fallthru
          _
      $region48: #{_fused_backbone_head.1} parent=5 // pred_fallthru
        _
      %p4943 = scmp.le.s32.totalorder 2, %s16
      // Predicated region
      $region53: #{_fused_backbone_head.1} parent=5 // pred_check
        %p4944 = pneg %p4943
      $region54: #{_fused_backbone_head.1} parent=5 // pred_check_branch
        %4946 = sbr.rel (%p4944) target = $region56
      $region55: #{_fused_backbone_head.1} parent=5 // pred_region
        %s4947 = ssub.s32 %s16, 2
        // Predicated region
        $region57: #{_fused_backbone_head.1} parent=55 // pred_check
          %p4948 = pneg %p197
        $region58: #{_fused_backbone_head.1} parent=55 // pred_check_branch
          %4950 = sbr.rel (%p4948) target = $region60
        $region59: #{_fused_backbone_head.1} parent=55 // pred_region
          %s4951 = sand.u32 %s182, 1
          %s4952 = scalar_lea.sflag [#allocation3], %s4951
          %s4953 = sand.u32 %s182, 1
          %s4954 = smul.addr %s4953, 2
          %s4955 = scalar_lea.vmem [#allocation2], %s4954
          %4956 = dma.done %s4952, 32
        $region60: #{_fused_backbone_head.1} parent=55 // pred_fallthru
          _
      $region56: #{_fused_backbone_head.1} parent=5 // pred_fallthru
        _
    $region6: #{_fused_backbone_head.1} parent=1 // loop_footer
      %s20 = sadd.s32 1, %s16
    $region7: #{_fused_backbone_head.1} parent=1 // loop_footer_branch
      %15 = sbr.rel target = $region3
    $region8: #{_fused_backbone_head.1} parent=1 // loop_exit
      _
    %4957 = vsyncpa [#allocation3], 1
    %s4958 = scalar_lea.sflag [#allocation3], 1
    %4959 = vsyncpa %s4958, 1

</llo_original>
